<compile_context>
chip_gen: v6e
topology: v6e:2x2x1
jax: 0.10.0
libtpu: 0.0.40
codegen_flags: <defaults>
</compile_context>

<pallas_src>
import jax
import jax.numpy as jnp
import numpy as np
from jax.experimental import pallas as pl
from jax.experimental.pallas import tpu as pltpu

EPS = 1e-5
GRU_H = 64
CNN_C = 16      # out-channels of every conv layer
CNN_K = 3       # kernel size of every conv layer
NC_PAD = 64     # lane-padded width of the final Linear (numClasses <= 64)


# ============================== Pallas kernel ==============================

def _conv_block(x, w_i2c, scale, shift):
    """Conv1d(valid, K=3) + folded BN + ReLU + MaxPool1d(2) for one sample.

    x: (Lin, Cin) value; w_i2c: (K*Cin, Cout) im2col weight; scale/shift: (1, Cout).
    Returns (Lout // 2, Cout).
    """
    Lin, Cin = x.shape
    Cout = w_i2c.shape[1]
    Lout = Lin - CNN_K + 1
    # im2col: one MXU dot instead of K accumulated dots.
    patches = jnp.concatenate([x[k:k + Lout, :] for k in range(CNN_K)], axis=1)
    y = jnp.dot(patches, w_i2c, preferred_element_type=jnp.float32)
    y = jnp.maximum(y * scale + shift, 0.0)          # folded conv-bias + BN, ReLU
    Lp = Lout // 2
    y = y[:2 * Lp, :].reshape(Lp, 2, Cout)           # MaxPool1d(2)
    return jnp.max(y, axis=1)


def fused_forward_kernel(x_ref, cnn_ref, gru_ref, fc_ref, o_ref):
    B = x_ref.shape[0]
    Cin0 = x_ref.shape[2]
    H = GRU_H

    # ----- CNN parameter pack (16 lanes): 8-aligned windowed loads -----
    w1 = cnn_ref[pl.ds(0, CNN_K * Cin0), :]              # (6, 16)
    w2 = cnn_ref[pl.ds(8, CNN_K * CNN_C), :]             # (48, 16)
    w3 = cnn_ref[pl.ds(56, CNN_K * CNN_C), :]            # (48, 16)
    sb = cnn_ref[pl.ds(104, 6), :]                       # rows: s1,b1,s2,b2,s3,b3

    # ----- CNN branch (per sample, all ops stay 2D) -----
    ys = []
    for b in range(B):                                   # B=2, static
        y = x_ref[b].astype(jnp.float32)                 # (L0, Cin0)
        y = _conv_block(y, w1, sb[0:1], sb[1:2])
        y = _conv_block(y, w2, sb[2:3], sb[3:4])
        y = _conv_block(y, w3, sb[4:5], sb[5:6])
        ys.append(y)                                     # (T, 16)
    T = ys[0].shape[0]

    # (T*B, 16), time-major so each timestep's rows are a contiguous slice.
    y_seq = jnp.concatenate(
        [ys[b][t:t + 1, :] for t in range(T) for b in range(B)], axis=0)

    # ----- GRU parameter pack (64 lanes): per-gate segments, 8-aligned -----
    wi_r = gru_ref[pl.ds(0, 16), :]
    wi_z = gru_ref[pl.ds(16, 16), :]
    wi_n = gru_ref[pl.ds(32, 16), :]
    wh_r = gru_ref[pl.ds(48, H), :]
    wh_z = gru_ref[pl.ds(112, H), :]
    wh_n = gru_ref[pl.ds(176, H), :]
    wib_r = gru_ref[pl.ds(240, 16), :]
    wib_z = gru_ref[pl.ds(256, 16), :]
    wib_n = gru_ref[pl.ds(272, 16), :]
    gb = gru_ref[pl.ds(288, 12), :]   # rows: bif_rzn, bhf_rzn, bib_rzn, bhb_rzn

    # Input projection hoisted out of the recurrence (one dot per gate, all t).
    gi_r = jnp.dot(y_seq, wi_r, preferred_element_type=jnp.float32) + gb[0:1]
    gi_z = jnp.dot(y_seq, wi_z, preferred_element_type=jnp.float32) + gb[1:2]
    gi_n = jnp.dot(y_seq, wi_n, preferred_element_type=jnp.float32) + gb[2:3]

    # t = 0: h0 == 0, so the hidden projection reduces to the hidden biases.
    r = jax.nn.sigmoid(gi_r[0:B] + gb[3:4])
    z = jax.nn.sigmoid(gi_z[0:B] + gb[4:5])
    n = jnp.tanh(gi_n[0:B] + r * gb[5:6])
    h = (1.0 - z) * n
    for t in range(1, T):             # static unroll; only hidden dots stay serial
        gh_r = jnp.dot(h, wh_r, preferred_element_type=jnp.float32) + gb[3:4]
        gh_z = jnp.dot(h, wh_z, preferred_element_type=jnp.float32) + gb[4:5]
        gh_n = jnp.dot(h, wh_n, preferred_element_type=jnp.float32) + gb[5:6]
        r = jax.nn.sigmoid(gi_r[t * B:(t + 1) * B] + gh_r)
        z = jax.nn.sigmoid(gi_z[t * B:(t + 1) * B] + gh_z)
        n = jnp.tanh(gi_n[t * B:(t + 1) * B] + r * gh_n)
        h = (1.0 - z) * n + z * h
    h_f = h

    # Backward direction: single step on the last frame with h0 == 0
    # (so W_hh^reverse is never needed and is not shipped to the kernel).
    x_last = y_seq[(T - 1) * B:T * B, :]
    rb = jax.nn.sigmoid(jnp.dot(x_last, wib_r, preferred_element_type=jnp.float32)
                        + gb[6:7] + gb[9:10])
    zb = jax.nn.sigmoid(jnp.dot(x_last, wib_z, preferred_element_type=jnp.float32)
                        + gb[7:8] + gb[10:11])
    nb = jnp.tanh(jnp.dot(x_last, wib_n, preferred_element_type=jnp.float32)
                  + gb[8:9] + rb * gb[11:12])
    h_b = (1.0 - zb) * nb

    # ----- FC head pack (64 lanes): (Linear + BN + ReLU + Dropout[eval]) x2, Linear -----
    fw1 = fc_ref[pl.ds(0, 2 * H), :]                     # (128, 64)
    fw2 = fc_ref[pl.ds(128, 64), :]                      # (64, 64)
    fw3 = fc_ref[pl.ds(192, 64), :]                      # (64, 64)  (lane-padded)
    fmisc = fc_ref[pl.ds(256, 5), :]                     # rows: b3p, s1, b1, s2, b2

    feat = jnp.concatenate([h_f, h_b], axis=1)           # (B, 2H)
    h1 = jnp.maximum(jnp.dot(feat, fw1, preferred_element_type=jnp.float32)
                     * fmisc[1:2] + fmisc[2:3], 0.0)
    h2 = jnp.maximum(jnp.dot(h1, fw2, preferred_element_type=jnp.float32)
                     * fmisc[3:4] + fmisc[4:5], 0.0)
    out = jnp.dot(h2, fw3, preferred_element_type=jnp.float32) + fmisc[0:1]
    o_ref[...] = out.astype(o_ref.dtype)                 # lane-dense (B, 64) store


# ============================== pallas_call wrapper ==============================

def eh_task_eye_forward(x, P, cfg):
    B = x.shape[0]
    L0 = cfg["eyeFeatureSize"] // 2
    eye = x[:, :cfg["eyeFeatureSize"]].reshape(B, L0, 2)   # NWC view (pre-permute)
    args = [eye, P["cnn_pack"], P["gru_pack"], P["fc_pack"]]
    in_specs = [pl.BlockSpec(a.shape, lambda i, nd=a.ndim: (0,) * nd)
                for a in args]
    out_pad = pl.pallas_call(
        fused_forward_kernel,
        out_shape=jax.ShapeDtypeStruct((B, NC_PAD), jnp.float32),
        grid=(1,),
        in_specs=in_specs,
        out_specs=pl.BlockSpec((B, NC_PAD), lambda i: (0, 0)),
        compiler_params=pltpu.CompilerParams(
            dimension_semantics=("arbitrary",)),
    )(*args)
    return out_pad[:, :cfg["numClasses"]]


# ============================== parameter init & packing ==============================

def _fold_bn(bias, gamma, beta, mean, var):
    scale = gamma / jnp.sqrt(var + EPS)
    shift = (bias - mean) * scale + beta
    return scale.reshape(1, -1), shift.reshape(1, -1)


def _init_cnn(key, cin0):
    cins = [cin0, CNN_C, CNN_C]
    keys = jax.random.split(key, 6 * len(cins))
    p = {}
    ki = 0
    for li, cin in enumerate(cins, start=1):
        cout = CNN_C
        w = 0.2 * jax.random.normal(keys[ki], (cout, cin, CNN_K), jnp.float32); ki += 1
        b = 0.1 * jax.random.normal(keys[ki], (cout,), jnp.float32); ki += 1
        gamma = 1.0 + 0.1 * jax.random.normal(keys[ki], (cout,), jnp.float32); ki += 1
        beta = 0.1 * jax.random.normal(keys[ki], (cout,), jnp.float32); ki += 1
        mean = 0.1 * jax.random.normal(keys[ki], (cout,), jnp.float32); ki += 1
        var = 0.5 + jax.nn.sigmoid(
            jax.random.normal(keys[ki], (cout,), jnp.float32)); ki += 1
        s, sh = _fold_bn(b, gamma, beta, mean, var)
        p[f"w{li}"] = jnp.transpose(w, (2, 1, 0))     # (K, Cin, Cout)
        p[f"s{li}"] = s
        p[f"b{li}"] = sh
    return p


def _init_gru(key, insize, H):
    keys = jax.random.split(key, 8)
    mk = lambda k, shape: 0.2 * jax.random.normal(k, shape, jnp.float32)
    return {
        "wif": mk(keys[0], (3 * H, insize)).T,   # (insize, 3H), gate order [r,z,n]
        "whf": mk(keys[1], (3 * H, H)).T,
        "bif": mk(keys[2], (3 * H,)).reshape(1, -1),
        "bhf": mk(keys[3], (3 * H,)).reshape(1, -1),
        "wib": mk(keys[4], (3 * H, insize)).T,
        "whb": mk(keys[5], (3 * H, H)).T,
        "bib": mk(keys[6], (3 * H,)).reshape(1, -1),
        "bhb": mk(keys[7], (3 * H,)).reshape(1, -1),
    }


def _init_fc(key, insize, num_classes):
    keys = jax.random.split(key, 14)
    mk = lambda k, shape, s=0.1: s * jax.random.normal(k, shape, jnp.float32)
    p = {}
    w1 = mk(keys[0], (64, insize)); b1 = mk(keys[1], (64,))
    g1 = 1.0 + mk(keys[2], (64,)); be1 = mk(keys[3], (64,))
    m1 = mk(keys[4], (64,)); v1 = 0.5 + jax.nn.sigmoid(mk(keys[5], (64,), 1.0))
    p["w1"] = w1.T
    p["s1"], p["b1"] = _fold_bn(b1, g1, be1, m1, v1)
    w2 = mk(keys[6], (64, 64)); b2 = mk(keys[7], (64,))
    g2 = 1.0 + mk(keys[8], (64,)); be2 = mk(keys[9], (64,))
    m2 = mk(keys[10], (64,)); v2 = 0.5 + jax.nn.sigmoid(mk(keys[11], (64,), 1.0))
    p["w2"] = w2.T
    p["s2"], p["b2"] = _fold_bn(b2, g2, be2, m2, v2)
    w3 = mk(keys[12], (num_classes, 64)); b3 = mk(keys[13], (64,))[:num_classes] * 0 + \
         mk(keys[13], (num_classes,))
    p["w3"] = w3.T
    p["b3"] = b3.reshape(1, -1)
    return p


def init_unpacked(key, cfg):
    k1, k2, k3 = jax.random.split(key, 3)
    return {
        "cnn": _init_cnn(k1, 2),
        "gru": _init_gru(k2, CNN_C, GRU_H),
        "fc": _init_fc(k3, 2 * GRU_H, cfg["numClasses"]),
    }


def pack_params(Pu, num_classes):
    """Pack the reference layout into the three fused-kernel operands."""
    H = GRU_H
    assert num_classes <= NC_PAD

    # --- CNN pack (16 lanes), segments 8-aligned ---
    c = Pu["cnn"]
    w1 = c["w1"].reshape(-1, CNN_C)                              # (6, 16)
    w2 = c["w2"].reshape(CNN_K * CNN_C, CNN_C)                   # (48, 16)
    w3 = c["w3"].reshape(CNN_K * CNN_C, CNN_C)                   # (48, 16)
    pad1 = jnp.zeros((8 - w1.shape[0], CNN_C), jnp.float32)
    cnn_pack = jnp.concatenate(
        [w1, pad1, w2, w3, c["s1"], c["b1"], c["s2"], c["b2"], c["s3"], c["b3"]],
        axis=0)                                                  # (110, 16)

    # --- GRU pack (64 lanes): wi_f | wh_f | wi_b | biases (whb unused: h0==0) ---
    g = Pu["gru"]
    sp = lambda w: [w[..., 0:H], w[..., H:2 * H], w[..., 2 * H:3 * H]]
    gru_pack = jnp.concatenate(
        sp(g["wif"]) + sp(g["whf"]) + sp(g["wib"]) +
        sp(g["bif"]) + sp(g["bhf"]) + sp(g["bib"]) + sp(g["bhb"]),
        axis=0)                                                  # (300, 64)

    # --- FC pack (64 lanes): w1 | w2 | w3(pad) | [b3(pad), s1, b1, s2, b2] ---
    f = Pu["fc"]
    w3p = jnp.pad(f["w3"], ((0, 0), (0, NC_PAD - num_classes)))  # (64, 64)
    b3p = jnp.pad(f["b3"], ((0, 0), (0, NC_PAD - num_classes)))  # (1, 64)
    fc_pack = jnp.concatenate(
        [f["w1"], f["w2"], w3p, b3p, f["s1"], f["b1"], f["s2"], f["b2"]],
        axis=0)                                                  # (261, 64)

    return dict(cnn_pack=cnn_pack, gru_pack=gru_pack, fc_pack=fc_pack)


# ============================== pure-JAX reference ==============================

def _ref_conv_block(x, w, s, b):     # x (B, Lin, Cin), w (K, Cin, Cout)
    K = w.shape[0]
    Lout = x.shape[1] - K + 1
    acc = sum(jnp.einsum("blc,co->blo", x[:, k:k + Lout, :], w[k])
              for k in range(K))
    y = jnp.maximum(acc * s + b, 0.0)
    Lp = Lout // 2
    y = y[:, :2 * Lp, :].reshape(x.shape[0], Lp, 2, y.shape[-1])
    return jnp.max(y, axis=2)


def _ref_cnn(x, p):
    y = _ref_conv_block(x, p["w1"], p["s1"], p["b1"])
    y = _ref_conv_block(y, p["w2"], p["s2"], p["b2"])
    y = _ref_conv_block(y, p["w3"], p["s3"], p["b3"])
    return y


def _ref_gru(x, p, H=GRU_H):
    B, T, _ = x.shape

    def step(h, xt, wi, wh, bi, bh):
        gi = xt @ wi + bi
        gh = h @ wh + bh
        r = jax.nn.sigmoid(gi[:, :H] + gh[:, :H])
        z = jax.nn.sigmoid(gi[:, H:2 * H] + gh[:, H:2 * H])
        n = jnp.tanh(gi[:, 2 * H:] + r * gh[:, 2 * H:])
        return (1.0 - z) * n + z * h

    h_f = jnp.zeros((B, H), jnp.float32)
    for t in range(T):
        h_f = step(h_f, x[:, t, :], p["wif"], p["whf"], p["bif"], p["bhf"])
    h_b = step(jnp.zeros((B, H), jnp.float32), x[:, T - 1, :],
               p["wib"], p["whb"], p["bib"], p["bhb"])
    return jnp.concatenate([h_f, h_b], axis=1)


def reference_forward(x, Pu, cfg):
    B = x.shape[0]
    L0 = cfg["eyeFeatureSize"] // 2
    eye = x[:, :cfg["eyeFeatureSize"]].reshape(B, L0, 2)
    feat = _ref_gru(_ref_cnn(eye, Pu["cnn"]), Pu["gru"])        # (B, 128)
    p = Pu["fc"]
    h = jnp.maximum(feat @ p["w1"] * p["s1"] + p["b1"], 0.0)
    h = jnp.maximum(h @ p["w2"] * p["s2"] + p["b2"], 0.0)
    return h @ p["w3"] + p["b3"]


# ============================== main ==============================

if __name__ == "__main__":
    cfg = dict(eyeFeatureSize=80, headFeatureSize=120, gwFeatureSize=80,
               numClasses=4)
    B = 2
    total_features = (cfg["eyeFeatureSize"] + cfg["headFeatureSize"]
                      + cfg["gwFeatureSize"])

    key = jax.random.PRNGKey(0)
    k_x, k_p = jax.random.split(key)
    x = jax.random.normal(k_x, (B, total_features), jnp.float32)

    Pu = init_unpacked(k_p, cfg)              # reference ("PyTorch-like") layout
    Pk = pack_params(Pu, cfg["numClasses"])   # packed operands for the fused kernel

    out = jax.block_until_ready(eh_task_eye_forward(x, Pk, cfg))
    ref = jax.block_until_ready(reference_forward(x, Pu, cfg))

    assert out.shape == (B, cfg["numClasses"])
    np.testing.assert_allclose(np.asarray(out), np.asarray(ref),
                               rtol=5e-3, atol=5e-3)
    print("KERNEL_OK")
</pallas_src>

<mosaic_0001>
module attributes {stable_mosaic.version = 11 : i64} {
  func.func @fused_forward_kernel(%arg0: i32, %arg1: memref<2x40x2xf32, #tpu.memory_space<vmem>>, %arg2: memref<110x16xf32, #tpu.memory_space<vmem>>, %arg3: memref<300x64xf32, #tpu.memory_space<vmem>>, %arg4: memref<261x64xf32, #tpu.memory_space<vmem>>, %arg5: memref<2x64xf32, #tpu.memory_space<vmem>>) attributes {dimension_semantics = [#tpu.dimension_semantics<arbitrary>], iteration_bounds = array<i64: 1>, scalar_prefetch = 0 : i64, scratch_operands = 0 : i64, tpu.core_type = #tpu.core_type<tc>, window_params = [{pipeline_mode = #tpu.pipeline_mode<synchronous>, transform_indices = @transform_0, window_bounds = array<i64: 2, 40, 2>}, {pipeline_mode = #tpu.pipeline_mode<synchronous>, transform_indices = @transform_1, window_bounds = array<i64: 110, 16>}, {pipeline_mode = #tpu.pipeline_mode<synchronous>, transform_indices = @transform_2, window_bounds = array<i64: 300, 64>}, {pipeline_mode = #tpu.pipeline_mode<synchronous>, transform_indices = @transform_3, window_bounds = array<i64: 261, 64>}, {pipeline_mode = #tpu.pipeline_mode<synchronous>, transform_indices = @transform_4, window_bounds = array<i64: 2, 64>}]} {
    %c0 = arith.constant 0 : index
    %c0_0 = arith.constant 0 : index
    %0 = vector.load %arg2[%c0, %c0_0] : memref<110x16xf32, #tpu.memory_space<vmem>>, vector<6x16xf32>
    %c8 = arith.constant 8 : index
    %c0_1 = arith.constant 0 : index
    %1 = vector.load %arg2[%c8, %c0_1] : memref<110x16xf32, #tpu.memory_space<vmem>>, vector<48x16xf32>
    %c56 = arith.constant 56 : index
    %c0_2 = arith.constant 0 : index
    %2 = vector.load %arg2[%c56, %c0_2] : memref<110x16xf32, #tpu.memory_space<vmem>>, vector<48x16xf32>
    %c104 = arith.constant 104 : index
    %c0_3 = arith.constant 0 : index
    %3 = vector.load %arg2[%c104, %c0_3] : memref<110x16xf32, #tpu.memory_space<vmem>>, vector<6x16xf32>
    %c0_4 = arith.constant 0 : index
    %c0_5 = arith.constant 0 : index
    %c0_6 = arith.constant 0 : index
    %4 = vector.load %arg1[%c0_4, %c0_5, %c0_6] : memref<2x40x2xf32, #tpu.memory_space<vmem>>, vector<1x40x2xf32>
    %5 = vector.shape_cast %4 : vector<1x40x2xf32> to vector<40x2xf32>
    %6 = vector.extract_strided_slice %3 {offsets = [0, 0], sizes = [1, 16], strides = [1, 1]} : vector<6x16xf32> to vector<1x16xf32>
    %7 = vector.extract_strided_slice %3 {offsets = [1, 0], sizes = [1, 16], strides = [1, 1]} : vector<6x16xf32> to vector<1x16xf32>
    %8 = vector.extract_strided_slice %5 {offsets = [0, 0], sizes = [38, 2], strides = [1, 1]} : vector<40x2xf32> to vector<38x2xf32>
    %9 = vector.extract_strided_slice %5 {offsets = [1, 0], sizes = [38, 2], strides = [1, 1]} : vector<40x2xf32> to vector<38x2xf32>
    %10 = vector.extract_strided_slice %5 {offsets = [2, 0], sizes = [38, 2], strides = [1, 1]} : vector<40x2xf32> to vector<38x2xf32>
    %11 = tpu.concatenate %8, %9, %10 in 1 : vector<38x2xf32>, vector<38x2xf32>, vector<38x2xf32> -> vector<38x6xf32>
    %cst = arith.constant dense<0.000000e+00> : vector<38x16xf32>
    %12 = tpu.matmul %11, %0, %cst {dimension_numbers = #tpu.dot_dimension_numbers<[1], [0], [0], [1], [0, 0, 1, 1], [], []>} : vector<38x6xf32>, vector<6x16xf32>, vector<38x16xf32> -> vector<38x16xf32>
    %13 = vector.broadcast %6 : vector<1x16xf32> to vector<38x16xf32>
    %14 = arith.mulf %12, %13 : vector<38x16xf32>
    %15 = vector.broadcast %7 : vector<1x16xf32> to vector<38x16xf32>
    %16 = arith.addf %14, %15 : vector<38x16xf32>
    %cst_7 = arith.constant 0.000000e+00 : f32
    %17 = vector.broadcast %cst_7 : f32 to vector<38x16xf32>
    %18 = arith.maximumf %16, %17 : vector<38x16xf32>
    %19 = vector.shape_cast %18 : vector<38x16xf32> to vector<19x2x16xf32>
    %cst_8 = arith.constant dense<0xFF800000> : vector<19x16xf32>
    %20 = vector.multi_reduction <maximumf>, %19, %cst_8 [1] : vector<19x2x16xf32> to vector<19x16xf32>
    %21 = vector.extract_strided_slice %3 {offsets = [2, 0], sizes = [1, 16], strides = [1, 1]} : vector<6x16xf32> to vector<1x16xf32>
    %22 = vector.extract_strided_slice %3 {offsets = [3, 0], sizes = [1, 16], strides = [1, 1]} : vector<6x16xf32> to vector<1x16xf32>
    %23 = vector.extract_strided_slice %20 {offsets = [0, 0], sizes = [17, 16], strides = [1, 1]} : vector<19x16xf32> to vector<17x16xf32>
    %24 = vector.extract_strided_slice %20 {offsets = [1, 0], sizes = [17, 16], strides = [1, 1]} : vector<19x16xf32> to vector<17x16xf32>
    %25 = vector.extract_strided_slice %20 {offsets = [2, 0], sizes = [17, 16], strides = [1, 1]} : vector<19x16xf32> to vector<17x16xf32>
    %26 = tpu.concatenate %23, %24, %25 in 1 : vector<17x16xf32>, vector<17x16xf32>, vector<17x16xf32> -> vector<17x48xf32>
    %cst_9 = arith.constant dense<0.000000e+00> : vector<17x16xf32>
    %27 = tpu.matmul %26, %1, %cst_9 {dimension_numbers = #tpu.dot_dimension_numbers<[1], [0], [0], [1], [0, 0, 1, 1], [], []>} : vector<17x48xf32>, vector<48x16xf32>, vector<17x16xf32> -> vector<17x16xf32>
    %28 = vector.broadcast %21 : vector<1x16xf32> to vector<17x16xf32>
    %29 = arith.mulf %27, %28 : vector<17x16xf32>
    %30 = vector.broadcast %22 : vector<1x16xf32> to vector<17x16xf32>
    %31 = arith.addf %29, %30 : vector<17x16xf32>
    %cst_10 = arith.constant 0.000000e+00 : f32
    %32 = vector.broadcast %cst_10 : f32 to vector<17x16xf32>
    %33 = arith.maximumf %31, %32 : vector<17x16xf32>
    %34 = vector.extract_strided_slice %33 {offsets = [0, 0], sizes = [16, 16], strides = [1, 1]} : vector<17x16xf32> to vector<16x16xf32>
    %35 = vector.shape_cast %34 : vector<16x16xf32> to vector<8x2x16xf32>
    %cst_11 = arith.constant dense<0xFF800000> : vector<8x16xf32>
    %36 = vector.multi_reduction <maximumf>, %35, %cst_11 [1] : vector<8x2x16xf32> to vector<8x16xf32>
    %37 = vector.extract_strided_slice %3 {offsets = [4, 0], sizes = [1, 16], strides = [1, 1]} : vector<6x16xf32> to vector<1x16xf32>
    %38 = vector.extract_strided_slice %3 {offsets = [5, 0], sizes = [1, 16], strides = [1, 1]} : vector<6x16xf32> to vector<1x16xf32>
    %39 = vector.extract_strided_slice %36 {offsets = [0, 0], sizes = [6, 16], strides = [1, 1]} : vector<8x16xf32> to vector<6x16xf32>
    %40 = vector.extract_strided_slice %36 {offsets = [1, 0], sizes = [6, 16], strides = [1, 1]} : vector<8x16xf32> to vector<6x16xf32>
    %41 = vector.extract_strided_slice %36 {offsets = [2, 0], sizes = [6, 16], strides = [1, 1]} : vector<8x16xf32> to vector<6x16xf32>
    %42 = tpu.concatenate %39, %40, %41 in 1 : vector<6x16xf32>, vector<6x16xf32>, vector<6x16xf32> -> vector<6x48xf32>
    %cst_12 = arith.constant dense<0.000000e+00> : vector<6x16xf32>
    %43 = tpu.matmul %42, %2, %cst_12 {dimension_numbers = #tpu.dot_dimension_numbers<[1], [0], [0], [1], [0, 0, 1, 1], [], []>} : vector<6x48xf32>, vector<48x16xf32>, vector<6x16xf32> -> vector<6x16xf32>
    %44 = vector.broadcast %37 : vector<1x16xf32> to vector<6x16xf32>
    %45 = arith.mulf %43, %44 : vector<6x16xf32>
    %46 = vector.broadcast %38 : vector<1x16xf32> to vector<6x16xf32>
    %47 = arith.addf %45, %46 : vector<6x16xf32>
    %cst_13 = arith.constant 0.000000e+00 : f32
    %48 = vector.broadcast %cst_13 : f32 to vector<6x16xf32>
    %49 = arith.maximumf %47, %48 : vector<6x16xf32>
    %50 = vector.shape_cast %49 : vector<6x16xf32> to vector<3x2x16xf32>
    %cst_14 = arith.constant dense<0xFF800000> : vector<3x16xf32>
    %51 = vector.multi_reduction <maximumf>, %50, %cst_14 [1] : vector<3x2x16xf32> to vector<3x16xf32>
    %c1 = arith.constant 1 : index
    %c0_15 = arith.constant 0 : index
    %c0_16 = arith.constant 0 : index
    %52 = vector.load %arg1[%c1, %c0_15, %c0_16] : memref<2x40x2xf32, #tpu.memory_space<vmem>>, vector<1x40x2xf32>
    %53 = vector.shape_cast %52 : vector<1x40x2xf32> to vector<40x2xf32>
    %54 = vector.extract_strided_slice %3 {offsets = [0, 0], sizes = [1, 16], strides = [1, 1]} : vector<6x16xf32> to vector<1x16xf32>
    %55 = vector.extract_strided_slice %3 {offsets = [1, 0], sizes = [1, 16], strides = [1, 1]} : vector<6x16xf32> to vector<1x16xf32>
    %56 = vector.extract_strided_slice %53 {offsets = [0, 0], sizes = [38, 2], strides = [1, 1]} : vector<40x2xf32> to vector<38x2xf32>
    %57 = vector.extract_strided_slice %53 {offsets = [1, 0], sizes = [38, 2], strides = [1, 1]} : vector<40x2xf32> to vector<38x2xf32>
    %58 = vector.extract_strided_slice %53 {offsets = [2, 0], sizes = [38, 2], strides = [1, 1]} : vector<40x2xf32> to vector<38x2xf32>
    %59 = tpu.concatenate %56, %57, %58 in 1 : vector<38x2xf32>, vector<38x2xf32>, vector<38x2xf32> -> vector<38x6xf32>
    %cst_17 = arith.constant dense<0.000000e+00> : vector<38x16xf32>
    %60 = tpu.matmul %59, %0, %cst_17 {dimension_numbers = #tpu.dot_dimension_numbers<[1], [0], [0], [1], [0, 0, 1, 1], [], []>} : vector<38x6xf32>, vector<6x16xf32>, vector<38x16xf32> -> vector<38x16xf32>
    %61 = vector.broadcast %54 : vector<1x16xf32> to vector<38x16xf32>
    %62 = arith.mulf %60, %61 : vector<38x16xf32>
    %63 = vector.broadcast %55 : vector<1x16xf32> to vector<38x16xf32>
    %64 = arith.addf %62, %63 : vector<38x16xf32>
    %cst_18 = arith.constant 0.000000e+00 : f32
    %65 = vector.broadcast %cst_18 : f32 to vector<38x16xf32>
    %66 = arith.maximumf %64, %65 : vector<38x16xf32>
    %67 = vector.shape_cast %66 : vector<38x16xf32> to vector<19x2x16xf32>
    %cst_19 = arith.constant dense<0xFF800000> : vector<19x16xf32>
    %68 = vector.multi_reduction <maximumf>, %67, %cst_19 [1] : vector<19x2x16xf32> to vector<19x16xf32>
    %69 = vector.extract_strided_slice %3 {offsets = [2, 0], sizes = [1, 16], strides = [1, 1]} : vector<6x16xf32> to vector<1x16xf32>
    %70 = vector.extract_strided_slice %3 {offsets = [3, 0], sizes = [1, 16], strides = [1, 1]} : vector<6x16xf32> to vector<1x16xf32>
    %71 = vector.extract_strided_slice %68 {offsets = [0, 0], sizes = [17, 16], strides = [1, 1]} : vector<19x16xf32> to vector<17x16xf32>
    %72 = vector.extract_strided_slice %68 {offsets = [1, 0], sizes = [17, 16], strides = [1, 1]} : vector<19x16xf32> to vector<17x16xf32>
    %73 = vector.extract_strided_slice %68 {offsets = [2, 0], sizes = [17, 16], strides = [1, 1]} : vector<19x16xf32> to vector<17x16xf32>
    %74 = tpu.concatenate %71, %72, %73 in 1 : vector<17x16xf32>, vector<17x16xf32>, vector<17x16xf32> -> vector<17x48xf32>
    %cst_20 = arith.constant dense<0.000000e+00> : vector<17x16xf32>
    %75 = tpu.matmul %74, %1, %cst_20 {dimension_numbers = #tpu.dot_dimension_numbers<[1], [0], [0], [1], [0, 0, 1, 1], [], []>} : vector<17x48xf32>, vector<48x16xf32>, vector<17x16xf32> -> vector<17x16xf32>
    %76 = vector.broadcast %69 : vector<1x16xf32> to vector<17x16xf32>
    %77 = arith.mulf %75, %76 : vector<17x16xf32>
    %78 = vector.broadcast %70 : vector<1x16xf32> to vector<17x16xf32>
    %79 = arith.addf %77, %78 : vector<17x16xf32>
    %cst_21 = arith.constant 0.000000e+00 : f32
    %80 = vector.broadcast %cst_21 : f32 to vector<17x16xf32>
    %81 = arith.maximumf %79, %80 : vector<17x16xf32>
    %82 = vector.extract_strided_slice %81 {offsets = [0, 0], sizes = [16, 16], strides = [1, 1]} : vector<17x16xf32> to vector<16x16xf32>
    %83 = vector.shape_cast %82 : vector<16x16xf32> to vector<8x2x16xf32>
    %cst_22 = arith.constant dense<0xFF800000> : vector<8x16xf32>
    %84 = vector.multi_reduction <maximumf>, %83, %cst_22 [1] : vector<8x2x16xf32> to vector<8x16xf32>
    %85 = vector.extract_strided_slice %3 {offsets = [4, 0], sizes = [1, 16], strides = [1, 1]} : vector<6x16xf32> to vector<1x16xf32>
    %86 = vector.extract_strided_slice %3 {offsets = [5, 0], sizes = [1, 16], strides = [1, 1]} : vector<6x16xf32> to vector<1x16xf32>
    %87 = vector.extract_strided_slice %84 {offsets = [0, 0], sizes = [6, 16], strides = [1, 1]} : vector<8x16xf32> to vector<6x16xf32>
    %88 = vector.extract_strided_slice %84 {offsets = [1, 0], sizes = [6, 16], strides = [1, 1]} : vector<8x16xf32> to vector<6x16xf32>
    %89 = vector.extract_strided_slice %84 {offsets = [2, 0], sizes = [6, 16], strides = [1, 1]} : vector<8x16xf32> to vector<6x16xf32>
    %90 = tpu.concatenate %87, %88, %89 in 1 : vector<6x16xf32>, vector<6x16xf32>, vector<6x16xf32> -> vector<6x48xf32>
    %cst_23 = arith.constant dense<0.000000e+00> : vector<6x16xf32>
    %91 = tpu.matmul %90, %2, %cst_23 {dimension_numbers = #tpu.dot_dimension_numbers<[1], [0], [0], [1], [0, 0, 1, 1], [], []>} : vector<6x48xf32>, vector<48x16xf32>, vector<6x16xf32> -> vector<6x16xf32>
    %92 = vector.broadcast %85 : vector<1x16xf32> to vector<6x16xf32>
    %93 = arith.mulf %91, %92 : vector<6x16xf32>
    %94 = vector.broadcast %86 : vector<1x16xf32> to vector<6x16xf32>
    %95 = arith.addf %93, %94 : vector<6x16xf32>
    %cst_24 = arith.constant 0.000000e+00 : f32
    %96 = vector.broadcast %cst_24 : f32 to vector<6x16xf32>
    %97 = arith.maximumf %95, %96 : vector<6x16xf32>
    %98 = vector.shape_cast %97 : vector<6x16xf32> to vector<3x2x16xf32>
    %cst_25 = arith.constant dense<0xFF800000> : vector<3x16xf32>
    %99 = vector.multi_reduction <maximumf>, %98, %cst_25 [1] : vector<3x2x16xf32> to vector<3x16xf32>
    %100 = vector.extract_strided_slice %51 {offsets = [0, 0], sizes = [1, 16], strides = [1, 1]} : vector<3x16xf32> to vector<1x16xf32>
    %101 = vector.extract_strided_slice %99 {offsets = [0, 0], sizes = [1, 16], strides = [1, 1]} : vector<3x16xf32> to vector<1x16xf32>
    %102 = vector.extract_strided_slice %51 {offsets = [1, 0], sizes = [1, 16], strides = [1, 1]} : vector<3x16xf32> to vector<1x16xf32>
    %103 = vector.extract_strided_slice %99 {offsets = [1, 0], sizes = [1, 16], strides = [1, 1]} : vector<3x16xf32> to vector<1x16xf32>
    %104 = vector.extract_strided_slice %51 {offsets = [2, 0], sizes = [1, 16], strides = [1, 1]} : vector<3x16xf32> to vector<1x16xf32>
    %105 = vector.extract_strided_slice %99 {offsets = [2, 0], sizes = [1, 16], strides = [1, 1]} : vector<3x16xf32> to vector<1x16xf32>
    %106 = tpu.concatenate %100, %101, %102, %103, %104, %105 in 0 : vector<1x16xf32>, vector<1x16xf32>, vector<1x16xf32>, vector<1x16xf32>, vector<1x16xf32>, vector<1x16xf32> -> vector<6x16xf32>
    %c0_26 = arith.constant 0 : index
    %c0_27 = arith.constant 0 : index
    %107 = vector.load %arg3[%c0_26, %c0_27] : memref<300x64xf32, #tpu.memory_space<vmem>>, vector<16x64xf32>
    %c16 = arith.constant 16 : index
    %c0_28 = arith.constant 0 : index
    %108 = vector.load %arg3[%c16, %c0_28] : memref<300x64xf32, #tpu.memory_space<vmem>>, vector<16x64xf32>
    %c32 = arith.constant 32 : index
    %c0_29 = arith.constant 0 : index
    %109 = vector.load %arg3[%c32, %c0_29] : memref<300x64xf32, #tpu.memory_space<vmem>>, vector<16x64xf32>
    %c48 = arith.constant 48 : index
    %c0_30 = arith.constant 0 : index
    %110 = vector.load %arg3[%c48, %c0_30] : memref<300x64xf32, #tpu.memory_space<vmem>>, vector<64x64xf32>
    %c112 = arith.constant 112 : index
    %c0_31 = arith.constant 0 : index
    %111 = vector.load %arg3[%c112, %c0_31] : memref<300x64xf32, #tpu.memory_space<vmem>>, vector<64x64xf32>
    %c176 = arith.constant 176 : index
    %c0_32 = arith.constant 0 : index
    %112 = vector.load %arg3[%c176, %c0_32] : memref<300x64xf32, #tpu.memory_space<vmem>>, vector<64x64xf32>
    %c240 = arith.constant 240 : index
    %c0_33 = arith.constant 0 : index
    %113 = vector.load %arg3[%c240, %c0_33] : memref<300x64xf32, #tpu.memory_space<vmem>>, vector<16x64xf32>
    %c256 = arith.constant 256 : index
    %c0_34 = arith.constant 0 : index
    %114 = vector.load %arg3[%c256, %c0_34] : memref<300x64xf32, #tpu.memory_space<vmem>>, vector<16x64xf32>
    %c272 = arith.constant 272 : index
    %c0_35 = arith.constant 0 : index
    %115 = vector.load %arg3[%c272, %c0_35] : memref<300x64xf32, #tpu.memory_space<vmem>>, vector<16x64xf32>
    %c288 = arith.constant 288 : index
    %c0_36 = arith.constant 0 : index
    %116 = vector.load %arg3[%c288, %c0_36] : memref<300x64xf32, #tpu.memory_space<vmem>>, vector<12x64xf32>
    %cst_37 = arith.constant dense<0.000000e+00> : vector<6x64xf32>
    %117 = tpu.matmul %106, %107, %cst_37 {dimension_numbers = #tpu.dot_dimension_numbers<[1], [0], [0], [1], [0, 0, 1, 1], [], []>} : vector<6x16xf32>, vector<16x64xf32>, vector<6x64xf32> -> vector<6x64xf32>
    %118 = vector.extract_strided_slice %116 {offsets = [0, 0], sizes = [1, 64], strides = [1, 1]} : vector<12x64xf32> to vector<1x64xf32>
    %119 = vector.broadcast %118 : vector<1x64xf32> to vector<6x64xf32>
    %120 = arith.addf %117, %119 : vector<6x64xf32>
    %cst_38 = arith.constant dense<0.000000e+00> : vector<6x64xf32>
    %121 = tpu.matmul %106, %108, %cst_38 {dimension_numbers = #tpu.dot_dimension_numbers<[1], [0], [0], [1], [0, 0, 1, 1], [], []>} : vector<6x16xf32>, vector<16x64xf32>, vector<6x64xf32> -> vector<6x64xf32>
    %122 = vector.extract_strided_slice %116 {offsets = [1, 0], sizes = [1, 64], strides = [1, 1]} : vector<12x64xf32> to vector<1x64xf32>
    %123 = vector.broadcast %122 : vector<1x64xf32> to vector<6x64xf32>
    %124 = arith.addf %121, %123 : vector<6x64xf32>
    %cst_39 = arith.constant dense<0.000000e+00> : vector<6x64xf32>
    %125 = tpu.matmul %106, %109, %cst_39 {dimension_numbers = #tpu.dot_dimension_numbers<[1], [0], [0], [1], [0, 0, 1, 1], [], []>} : vector<6x16xf32>, vector<16x64xf32>, vector<6x64xf32> -> vector<6x64xf32>
    %126 = vector.extract_strided_slice %116 {offsets = [2, 0], sizes = [1, 64], strides = [1, 1]} : vector<12x64xf32> to vector<1x64xf32>
    %127 = vector.broadcast %126 : vector<1x64xf32> to vector<6x64xf32>
    %128 = arith.addf %125, %127 : vector<6x64xf32>
    %129 = vector.extract_strided_slice %120 {offsets = [0, 0], sizes = [2, 64], strides = [1, 1]} : vector<6x64xf32> to vector<2x64xf32>
    %130 = vector.extract_strided_slice %116 {offsets = [3, 0], sizes = [1, 64], strides = [1, 1]} : vector<12x64xf32> to vector<1x64xf32>
    %131 = vector.broadcast %130 : vector<1x64xf32> to vector<2x64xf32>
    %132 = arith.addf %129, %131 : vector<2x64xf32>
    %133 = arith.negf %132 : vector<2x64xf32>
    %134 = math.exp %133 : vector<2x64xf32>
    %cst_40 = arith.constant 1.000000e+00 : f32
    %135 = vector.broadcast %cst_40 : f32 to vector<2x64xf32>
    %136 = arith.addf %135, %134 : vector<2x64xf32>
    %137 = arith.divf %135, %136 : vector<2x64xf32>
    %138 = vector.extract_strided_slice %124 {offsets = [0, 0], sizes = [2, 64], strides = [1, 1]} : vector<6x64xf32> to vector<2x64xf32>
    %139 = vector.extract_strided_slice %116 {offsets = [4, 0], sizes = [1, 64], strides = [1, 1]} : vector<12x64xf32> to vector<1x64xf32>
    %140 = vector.broadcast %139 : vector<1x64xf32> to vector<2x64xf32>
    %141 = arith.addf %138, %140 : vector<2x64xf32>
    %142 = arith.negf %141 : vector<2x64xf32>
    %143 = math.exp %142 : vector<2x64xf32>
    %cst_41 = arith.constant 1.000000e+00 : f32
    %144 = vector.broadcast %cst_41 : f32 to vector<2x64xf32>
    %145 = arith.addf %144, %143 : vector<2x64xf32>
    %146 = arith.divf %144, %145 : vector<2x64xf32>
    %147 = vector.extract_strided_slice %128 {offsets = [0, 0], sizes = [2, 64], strides = [1, 1]} : vector<6x64xf32> to vector<2x64xf32>
    %148 = vector.extract_strided_slice %116 {offsets = [5, 0], sizes = [1, 64], strides = [1, 1]} : vector<12x64xf32> to vector<1x64xf32>
    %149 = vector.broadcast %148 : vector<1x64xf32> to vector<2x64xf32>
    %150 = arith.mulf %137, %149 : vector<2x64xf32>
    %151 = arith.addf %147, %150 : vector<2x64xf32>
    %152 = math.tanh %151 : vector<2x64xf32>
    %cst_42 = arith.constant 1.000000e+00 : f32
    %153 = vector.broadcast %cst_42 : f32 to vector<2x64xf32>
    %154 = arith.subf %153, %146 : vector<2x64xf32>
    %155 = arith.mulf %154, %152 : vector<2x64xf32>
    %cst_43 = arith.constant dense<0.000000e+00> : vector<2x64xf32>
    %156 = tpu.matmul %155, %110, %cst_43 {dimension_numbers = #tpu.dot_dimension_numbers<[1], [0], [0], [1], [0, 0, 1, 1], [], []>} : vector<2x64xf32>, vector<64x64xf32>, vector<2x64xf32> -> vector<2x64xf32>
    %157 = vector.extract_strided_slice %116 {offsets = [3, 0], sizes = [1, 64], strides = [1, 1]} : vector<12x64xf32> to vector<1x64xf32>
    %158 = vector.broadcast %157 : vector<1x64xf32> to vector<2x64xf32>
    %159 = arith.addf %156, %158 : vector<2x64xf32>
    %cst_44 = arith.constant dense<0.000000e+00> : vector<2x64xf32>
    %160 = tpu.matmul %155, %111, %cst_44 {dimension_numbers = #tpu.dot_dimension_numbers<[1], [0], [0], [1], [0, 0, 1, 1], [], []>} : vector<2x64xf32>, vector<64x64xf32>, vector<2x64xf32> -> vector<2x64xf32>
    %161 = vector.extract_strided_slice %116 {offsets = [4, 0], sizes = [1, 64], strides = [1, 1]} : vector<12x64xf32> to vector<1x64xf32>
    %162 = vector.broadcast %161 : vector<1x64xf32> to vector<2x64xf32>
    %163 = arith.addf %160, %162 : vector<2x64xf32>
    %cst_45 = arith.constant dense<0.000000e+00> : vector<2x64xf32>
    %164 = tpu.matmul %155, %112, %cst_45 {dimension_numbers = #tpu.dot_dimension_numbers<[1], [0], [0], [1], [0, 0, 1, 1], [], []>} : vector<2x64xf32>, vector<64x64xf32>, vector<2x64xf32> -> vector<2x64xf32>
    %165 = vector.extract_strided_slice %116 {offsets = [5, 0], sizes = [1, 64], strides = [1, 1]} : vector<12x64xf32> to vector<1x64xf32>
    %166 = vector.broadcast %165 : vector<1x64xf32> to vector<2x64xf32>
    %167 = arith.addf %164, %166 : vector<2x64xf32>
    %168 = vector.extract_strided_slice %120 {offsets = [2, 0], sizes = [2, 64], strides = [1, 1]} : vector<6x64xf32> to vector<2x64xf32>
    %169 = arith.addf %168, %159 : vector<2x64xf32>
    %170 = arith.negf %169 : vector<2x64xf32>
    %171 = math.exp %170 : vector<2x64xf32>
    %cst_46 = arith.constant 1.000000e+00 : f32
    %172 = vector.broadcast %cst_46 : f32 to vector<2x64xf32>
    %173 = arith.addf %172, %171 : vector<2x64xf32>
    %174 = arith.divf %172, %173 : vector<2x64xf32>
    %175 = vector.extract_strided_slice %124 {offsets = [2, 0], sizes = [2, 64], strides = [1, 1]} : vector<6x64xf32> to vector<2x64xf32>
    %176 = arith.addf %175, %163 : vector<2x64xf32>
    %177 = arith.negf %176 : vector<2x64xf32>
    %178 = math.exp %177 : vector<2x64xf32>
    %cst_47 = arith.constant 1.000000e+00 : f32
    %179 = vector.broadcast %cst_47 : f32 to vector<2x64xf32>
    %180 = arith.addf %179, %178 : vector<2x64xf32>
    %181 = arith.divf %179, %180 : vector<2x64xf32>
    %182 = vector.extract_strided_slice %128 {offsets = [2, 0], sizes = [2, 64], strides = [1, 1]} : vector<6x64xf32> to vector<2x64xf32>
    %183 = arith.mulf %174, %167 : vector<2x64xf32>
    %184 = arith.addf %182, %183 : vector<2x64xf32>
    %185 = math.tanh %184 : vector<2x64xf32>
    %cst_48 = arith.constant 1.000000e+00 : f32
    %186 = vector.broadcast %cst_48 : f32 to vector<2x64xf32>
    %187 = arith.subf %186, %181 : vector<2x64xf32>
    %188 = arith.mulf %187, %185 : vector<2x64xf32>
    %189 = arith.mulf %181, %155 : vector<2x64xf32>
    %190 = arith.addf %188, %189 : vector<2x64xf32>
    %cst_49 = arith.constant dense<0.000000e+00> : vector<2x64xf32>
    %191 = tpu.matmul %190, %110, %cst_49 {dimension_numbers = #tpu.dot_dimension_numbers<[1], [0], [0], [1], [0, 0, 1, 1], [], []>} : vector<2x64xf32>, vector<64x64xf32>, vector<2x64xf32> -> vector<2x64xf32>
    %192 = vector.extract_strided_slice %116 {offsets = [3, 0], sizes = [1, 64], strides = [1, 1]} : vector<12x64xf32> to vector<1x64xf32>
    %193 = vector.broadcast %192 : vector<1x64xf32> to vector<2x64xf32>
    %194 = arith.addf %191, %193 : vector<2x64xf32>
    %cst_50 = arith.constant dense<0.000000e+00> : vector<2x64xf32>
    %195 = tpu.matmul %190, %111, %cst_50 {dimension_numbers = #tpu.dot_dimension_numbers<[1], [0], [0], [1], [0, 0, 1, 1], [], []>} : vector<2x64xf32>, vector<64x64xf32>, vector<2x64xf32> -> vector<2x64xf32>
    %196 = vector.extract_strided_slice %116 {offsets = [4, 0], sizes = [1, 64], strides = [1, 1]} : vector<12x64xf32> to vector<1x64xf32>
    %197 = vector.broadcast %196 : vector<1x64xf32> to vector<2x64xf32>
    %198 = arith.addf %195, %197 : vector<2x64xf32>
    %cst_51 = arith.constant dense<0.000000e+00> : vector<2x64xf32>
    %199 = tpu.matmul %190, %112, %cst_51 {dimension_numbers = #tpu.dot_dimension_numbers<[1], [0], [0], [1], [0, 0, 1, 1], [], []>} : vector<2x64xf32>, vector<64x64xf32>, vector<2x64xf32> -> vector<2x64xf32>
    %200 = vector.extract_strided_slice %116 {offsets = [5, 0], sizes = [1, 64], strides = [1, 1]} : vector<12x64xf32> to vector<1x64xf32>
    %201 = vector.broadcast %200 : vector<1x64xf32> to vector<2x64xf32>
    %202 = arith.addf %199, %201 : vector<2x64xf32>
    %203 = vector.extract_strided_slice %120 {offsets = [4, 0], sizes = [2, 64], strides = [1, 1]} : vector<6x64xf32> to vector<2x64xf32>
    %204 = arith.addf %203, %194 : vector<2x64xf32>
    %205 = arith.negf %204 : vector<2x64xf32>
    %206 = math.exp %205 : vector<2x64xf32>
    %cst_52 = arith.constant 1.000000e+00 : f32
    %207 = vector.broadcast %cst_52 : f32 to vector<2x64xf32>
    %208 = arith.addf %207, %206 : vector<2x64xf32>
    %209 = arith.divf %207, %208 : vector<2x64xf32>
    %210 = vector.extract_strided_slice %124 {offsets = [4, 0], sizes = [2, 64], strides = [1, 1]} : vector<6x64xf32> to vector<2x64xf32>
    %211 = arith.addf %210, %198 : vector<2x64xf32>
    %212 = arith.negf %211 : vector<2x64xf32>
    %213 = math.exp %212 : vector<2x64xf32>
    %cst_53 = arith.constant 1.000000e+00 : f32
    %214 = vector.broadcast %cst_53 : f32 to vector<2x64xf32>
    %215 = arith.addf %214, %213 : vector<2x64xf32>
    %216 = arith.divf %214, %215 : vector<2x64xf32>
    %217 = vector.extract_strided_slice %128 {offsets = [4, 0], sizes = [2, 64], strides = [1, 1]} : vector<6x64xf32> to vector<2x64xf32>
    %218 = arith.mulf %209, %202 : vector<2x64xf32>
    %219 = arith.addf %217, %218 : vector<2x64xf32>
    %220 = math.tanh %219 : vector<2x64xf32>
    %cst_54 = arith.constant 1.000000e+00 : f32
    %221 = vector.broadcast %cst_54 : f32 to vector<2x64xf32>
    %222 = arith.subf %221, %216 : vector<2x64xf32>
    %223 = arith.mulf %222, %220 : vector<2x64xf32>
    %224 = arith.mulf %216, %190 : vector<2x64xf32>
    %225 = arith.addf %223, %224 : vector<2x64xf32>
    %226 = vector.extract_strided_slice %106 {offsets = [4, 0], sizes = [2, 16], strides = [1, 1]} : vector<6x16xf32> to vector<2x16xf32>
    %cst_55 = arith.constant dense<0.000000e+00> : vector<2x64xf32>
    %227 = tpu.matmul %226, %113, %cst_55 {dimension_numbers = #tpu.dot_dimension_numbers<[1], [0], [0], [1], [0, 0, 1, 1], [], []>} : vector<2x16xf32>, vector<16x64xf32>, vector<2x64xf32> -> vector<2x64xf32>
    %228 = vector.extract_strided_slice %116 {offsets = [6, 0], sizes = [1, 64], strides = [1, 1]} : vector<12x64xf32> to vector<1x64xf32>
    %229 = vector.broadcast %228 : vector<1x64xf32> to vector<2x64xf32>
    %230 = arith.addf %227, %229 : vector<2x64xf32>
    %231 = vector.extract_strided_slice %116 {offsets = [9, 0], sizes = [1, 64], strides = [1, 1]} : vector<12x64xf32> to vector<1x64xf32>
    %232 = vector.broadcast %231 : vector<1x64xf32> to vector<2x64xf32>
    %233 = arith.addf %230, %232 : vector<2x64xf32>
    %234 = arith.negf %233 : vector<2x64xf32>
    %235 = math.exp %234 : vector<2x64xf32>
    %cst_56 = arith.constant 1.000000e+00 : f32
    %236 = vector.broadcast %cst_56 : f32 to vector<2x64xf32>
    %237 = arith.addf %236, %235 : vector<2x64xf32>
    %238 = arith.divf %236, %237 : vector<2x64xf32>
    %cst_57 = arith.constant dense<0.000000e+00> : vector<2x64xf32>
    %239 = tpu.matmul %226, %114, %cst_57 {dimension_numbers = #tpu.dot_dimension_numbers<[1], [0], [0], [1], [0, 0, 1, 1], [], []>} : vector<2x16xf32>, vector<16x64xf32>, vector<2x64xf32> -> vector<2x64xf32>
    %240 = vector.extract_strided_slice %116 {offsets = [7, 0], sizes = [1, 64], strides = [1, 1]} : vector<12x64xf32> to vector<1x64xf32>
    %241 = vector.broadcast %240 : vector<1x64xf32> to vector<2x64xf32>
    %242 = arith.addf %239, %241 : vector<2x64xf32>
    %243 = vector.extract_strided_slice %116 {offsets = [10, 0], sizes = [1, 64], strides = [1, 1]} : vector<12x64xf32> to vector<1x64xf32>
    %244 = vector.broadcast %243 : vector<1x64xf32> to vector<2x64xf32>
    %245 = arith.addf %242, %244 : vector<2x64xf32>
    %246 = arith.negf %245 : vector<2x64xf32>
    %247 = math.exp %246 : vector<2x64xf32>
    %cst_58 = arith.constant 1.000000e+00 : f32
    %248 = vector.broadcast %cst_58 : f32 to vector<2x64xf32>
    %249 = arith.addf %248, %247 : vector<2x64xf32>
    %250 = arith.divf %248, %249 : vector<2x64xf32>
    %cst_59 = arith.constant dense<0.000000e+00> : vector<2x64xf32>
    %251 = tpu.matmul %226, %115, %cst_59 {dimension_numbers = #tpu.dot_dimension_numbers<[1], [0], [0], [1], [0, 0, 1, 1], [], []>} : vector<2x16xf32>, vector<16x64xf32>, vector<2x64xf32> -> vector<2x64xf32>
    %252 = vector.extract_strided_slice %116 {offsets = [8, 0], sizes = [1, 64], strides = [1, 1]} : vector<12x64xf32> to vector<1x64xf32>
    %253 = vector.broadcast %252 : vector<1x64xf32> to vector<2x64xf32>
    %254 = arith.addf %251, %253 : vector<2x64xf32>
    %255 = vector.extract_strided_slice %116 {offsets = [11, 0], sizes = [1, 64], strides = [1, 1]} : vector<12x64xf32> to vector<1x64xf32>
    %256 = vector.broadcast %255 : vector<1x64xf32> to vector<2x64xf32>
    %257 = arith.mulf %238, %256 : vector<2x64xf32>
    %258 = arith.addf %254, %257 : vector<2x64xf32>
    %259 = math.tanh %258 : vector<2x64xf32>
    %cst_60 = arith.constant 1.000000e+00 : f32
    %260 = vector.broadcast %cst_60 : f32 to vector<2x64xf32>
    %261 = arith.subf %260, %250 : vector<2x64xf32>
    %262 = arith.mulf %261, %259 : vector<2x64xf32>
    %c0_61 = arith.constant 0 : index
    %c0_62 = arith.constant 0 : index
    %263 = vector.load %arg4[%c0_61, %c0_62] : memref<261x64xf32, #tpu.memory_space<vmem>>, vector<128x64xf32>
    %c128 = arith.constant 128 : index
    %c0_63 = arith.constant 0 : index
    %264 = vector.load %arg4[%c128, %c0_63] : memref<261x64xf32, #tpu.memory_space<vmem>>, vector<64x64xf32>
    %c192 = arith.constant 192 : index
    %c0_64 = arith.constant 0 : index
    %265 = vector.load %arg4[%c192, %c0_64] : memref<261x64xf32, #tpu.memory_space<vmem>>, vector<64x64xf32>
    %c256_65 = arith.constant 256 : index
    %c0_66 = arith.constant 0 : index
    %266 = vector.load %arg4[%c256_65, %c0_66] : memref<261x64xf32, #tpu.memory_space<vmem>>, vector<5x64xf32>
    %267 = tpu.concatenate %225, %262 in 1 : vector<2x64xf32>, vector<2x64xf32> -> vector<2x128xf32>
    %cst_67 = arith.constant dense<0.000000e+00> : vector<2x64xf32>
    %268 = tpu.matmul %267, %263, %cst_67 {dimension_numbers = #tpu.dot_dimension_numbers<[1], [0], [0], [1], [0, 0, 1, 1], [], []>} : vector<2x128xf32>, vector<128x64xf32>, vector<2x64xf32> -> vector<2x64xf32>
    %269 = vector.extract_strided_slice %266 {offsets = [1, 0], sizes = [1, 64], strides = [1, 1]} : vector<5x64xf32> to vector<1x64xf32>
    %270 = vector.broadcast %269 : vector<1x64xf32> to vector<2x64xf32>
    %271 = arith.mulf %268, %270 : vector<2x64xf32>
    %272 = vector.extract_strided_slice %266 {offsets = [2, 0], sizes = [1, 64], strides = [1, 1]} : vector<5x64xf32> to vector<1x64xf32>
    %273 = vector.broadcast %272 : vector<1x64xf32> to vector<2x64xf32>
    %274 = arith.addf %271, %273 : vector<2x64xf32>
    %cst_68 = arith.constant 0.000000e+00 : f32
    %275 = vector.broadcast %cst_68 : f32 to vector<2x64xf32>
    %276 = arith.maximumf %274, %275 : vector<2x64xf32>
    %cst_69 = arith.constant dense<0.000000e+00> : vector<2x64xf32>
    %277 = tpu.matmul %276, %264, %cst_69 {dimension_numbers = #tpu.dot_dimension_numbers<[1], [0], [0], [1], [0, 0, 1, 1], [], []>} : vector<2x64xf32>, vector<64x64xf32>, vector<2x64xf32> -> vector<2x64xf32>
    %278 = vector.extract_strided_slice %266 {offsets = [3, 0], sizes = [1, 64], strides = [1, 1]} : vector<5x64xf32> to vector<1x64xf32>
    %279 = vector.broadcast %278 : vector<1x64xf32> to vector<2x64xf32>
    %280 = arith.mulf %277, %279 : vector<2x64xf32>
    %281 = vector.extract_strided_slice %266 {offsets = [4, 0], sizes = [1, 64], strides = [1, 1]} : vector<5x64xf32> to vector<1x64xf32>
    %282 = vector.broadcast %281 : vector<1x64xf32> to vector<2x64xf32>
    %283 = arith.addf %280, %282 : vector<2x64xf32>
    %cst_70 = arith.constant 0.000000e+00 : f32
    %284 = vector.broadcast %cst_70 : f32 to vector<2x64xf32>
    %285 = arith.maximumf %283, %284 : vector<2x64xf32>
    %cst_71 = arith.constant dense<0.000000e+00> : vector<2x64xf32>
    %286 = tpu.matmul %285, %265, %cst_71 {dimension_numbers = #tpu.dot_dimension_numbers<[1], [0], [0], [1], [0, 0, 1, 1], [], []>} : vector<2x64xf32>, vector<64x64xf32>, vector<2x64xf32> -> vector<2x64xf32>
    %287 = vector.extract_strided_slice %266 {offsets = [0, 0], sizes = [1, 64], strides = [1, 1]} : vector<5x64xf32> to vector<1x64xf32>
    %288 = vector.broadcast %287 : vector<1x64xf32> to vector<2x64xf32>
    %289 = arith.addf %286, %288 : vector<2x64xf32>
    %c0_72 = arith.constant 0 : index
    %c0_73 = arith.constant 0 : index
    %290 = vector.load %arg5[%c0_72, %c0_73] : memref<2x64xf32, #tpu.memory_space<vmem>>, vector<2x64xf32>
    tpu.vector_store %arg5[%c0_72, %c0_73], %289 {strides = array<i32>} : memref<2x64xf32, #tpu.memory_space<vmem>>, vector<2x64xf32>,
    return
  }
  func.func @transform_0(%arg0: i32) -> (i32, i32, i32) {
    %c0_i32 = arith.constant 0 : i32
    %c0_i32_0 = arith.constant 0 : i32
    %c0_i32_1 = arith.constant 0 : i32
    %c0_i32_2 = arith.constant 0 : i32
    return %c0_i32, %c0_i32_0, %c0_i32_1 : i32, i32, i32
  }
  func.func @transform_1(%arg0: i32) -> (i32, i32) {
    %c0_i32 = arith.constant 0 : i32
    %c0_i32_0 = arith.constant 0 : i32
    %c0_i32_1 = arith.constant 0 : i32
    return %c0_i32, %c0_i32_0 : i32, i32
  }
  func.func @transform_2(%arg0: i32) -> (i32, i32) {
    %c0_i32 = arith.constant 0 : i32
    %c0_i32_0 = arith.constant 0 : i32
    %c0_i32_1 = arith.constant 0 : i32
    return %c0_i32, %c0_i32_0 : i32, i32
  }
  func.func @transform_3(%arg0: i32) -> (i32, i32) {
    %c0_i32 = arith.constant 0 : i32
    %c0_i32_0 = arith.constant 0 : i32
    %c0_i32_1 = arith.constant 0 : i32
    return %c0_i32, %c0_i32_0 : i32, i32
  }
  func.func @transform_4(%arg0: i32) -> (i32, i32) {
    %c0_i32 = arith.constant 0 : i32
    %c0_i32_0 = arith.constant 0 : i32
    %c0_i32_1 = arith.constant 0 : i32
    return %c0_i32, %c0_i32_0 : i32, i32
  }
}

</mosaic_0001>

<llo_original>
// kernel: tpu_custom_call.1
$region0: #{tpu_custom_call.1}
  #allocation0 [shape = 'u32[]', space=smem, size = 0x4, offset = 0x4, fixed_abs, tag = 'smem constant byte address 0x4 - core index']
  #allocation1 [shape = 'u32[144,128]{1,0:T(1,128)}', space=vmem, size = 0x12000, scoped, tag = 'internal scratch']
  %s0 = inlined_call_operand.vmem [shape: f32[2,40,2], index: 0, kind: input, shape index: {}]
  %s1 = inlined_call_operand.vmem [shape: f32[110,16], index: 1, kind: input, shape index: {}]
  %s2 = inlined_call_operand.vmem [shape: f32[300,64], index: 2, kind: input, shape index: {}]
  %s3 = inlined_call_operand.vmem [shape: f32[261,64], index: 3, kind: input, shape index: {}]
  %s4 = inlined_call_operand.hbm [shape: f32[2,64], index: 4, kind: output, shape index: {}]
  %s5 = sld [smem:[#allocation0]]
  $region26: #{tpu_custom_call.1} parent=0
    _
  %s7 = ssub.s32 1, %s5
  %s8 = scalar_select 0, %s7, %s5
  $region1: #{tpu_custom_call.1} parent=0
    #allocation2 [shape = 'u8[1024]{0}', space=vmem, size = 0x400, scoped, tag = 'output window, operand 0, single buffered']
    #allocation3 [shape = 's32[1]{0}', space=sflag, size = 0x4, scoped, tag = 'scoped memory for tpu_custom_call.1']
    %9 = vsyncpa [#allocation3], 0
    // Predicated region
    $region2: #{tpu_custom_call.1} parent=1 // pred_check
      _
    $region3: #{tpu_custom_call.1} parent=1 // pred_check_branch
      %11 = sbr.rel (0) target = $region5
    $region4: #{tpu_custom_call.1} parent=1 // pred_region
      _
    $region5: #{tpu_custom_call.1} parent=1 // pred_fallthru
      _
    // Predicated region
    $region6: #{tpu_custom_call.1} parent=1 // pred_check
      _
    $region7: #{tpu_custom_call.1} parent=1 // pred_check_branch
      %13 = sbr.rel (0) target = $region9
    $region8: #{tpu_custom_call.1} parent=1 // pred_region
      _
    $region9: #{tpu_custom_call.1} parent=1 // pred_fallthru
      _
    // Predicated region
    $region10: #{tpu_custom_call.1} parent=1 // pred_check
      _
    $region11: #{tpu_custom_call.1} parent=1 // pred_check_branch
      %15 = sbr.rel (0) target = $region13
    $region12: #{tpu_custom_call.1} parent=1 // pred_region
      _
    $region13: #{tpu_custom_call.1} parent=1 // pred_fallthru
      _
    // Predicated region
    $region14: #{tpu_custom_call.1} parent=1 // pred_check
      _
    $region15: #{tpu_custom_call.1} parent=1 // pred_check_branch
      %17 = sbr.rel (0) target = $region17
    $region16: #{tpu_custom_call.1} parent=1 // pred_region
      _
    $region17: #{tpu_custom_call.1} parent=1 // pred_fallthru
      _
    %v18 = vld [vmem:[%s1] sm:$0x3f]
    %v19 = vld [vmem:[%s1 + $0x8] sm:$0xff]
    %v20 = vld [vmem:[%s1 + $0x10] sm:$0xff]
    %v21 = vld [vmem:[%s1 + $0x18] sm:$0xff]
    %v22 = vld [vmem:[%s1 + $0x20] sm:$0xff]
    %v23 = vld [vmem:[%s1 + $0x28] sm:$0xff]
    %v24 = vld [vmem:[%s1 + $0x30] sm:$0xff]
    %v25 = vld [vmem:[%s1 + $0x38] sm:$0xff]
    %v26 = vld [vmem:[%s1 + $0x40] sm:$0xff]
    %v27 = vld [vmem:[%s1 + $0x48] sm:$0xff]
    %v28 = vld [vmem:[%s1 + $0x50] sm:$0xff]
    %v29 = vld [vmem:[%s1 + $0x58] sm:$0xff]
    %v30 = vld [vmem:[%s1 + $0x60] sm:$0xff]
    %v31 = vld [vmem:[%s1 + $0x68] sm:$0x3f]
    %v32 = vld [vmem:[%s0] sm:$0xff]
    %v33 = vld [vmem:[%s0 + $0x8] sm:$0xff]
    %v34 = vld [vmem:[%s0 + $0x10] sm:$0xff]
    %v35 = vld [vmem:[%s0 + $0x18] sm:$0xff]
    %v36 = vld [vmem:[%s0 + $0x20] sm:$0xff]
    %vm42 = vcmask 1046528
    %v43 = vrot.slane %v32, 1
    %v44 = vrot.slane %v33, 1
    %v45 = vsel %vm42, %v43, %v44
    %v46 = vrot.slane %v34, 1
    %v47 = vsel %vm42, %v44, %v46
    %v48 = vrot.slane %v35, 1
    %v49 = vsel %vm42, %v46, %v48
    %v50 = vrot.slane %v36, 1
    %v51 = vsel %vm42, %v48, %v50
    %52 = vrot.lane.b32.xlu0 %v45, 2
    %v53 = vpop.permute.xlu0 %52
    %54 = vrot.lane.b32.xlu0 %v47, 2
    %v55 = vpop.permute.xlu0 %54
    %56 = vrot.lane.b32.xlu0 %v49, 2
    %v57 = vpop.permute.xlu0 %56
    %58 = vrot.lane.b32.xlu0 %v51, 2
    %v59 = vpop.permute.xlu0 %58
    %60 = vrot.lane.b32.xlu0 %v50, 2
    %v61 = vpop.permute.xlu0 %60
    %vm67 = vcmask 1045504
    %v68 = vrot.slane %v32, 2
    %v69 = vrot.slane %v33, 2
    %v70 = vsel %vm67, %v68, %v69
    %v71 = vrot.slane %v34, 2
    %v72 = vsel %vm67, %v69, %v71
    %v73 = vrot.slane %v35, 2
    %v74 = vsel %vm67, %v71, %v73
    %v75 = vrot.slane %v36, 2
    %v76 = vsel %vm67, %v73, %v75
    %77 = vrot.lane.b32.xlu0 %v70, 4
    %v78 = vpop.permute.xlu0 %77
    %79 = vrot.lane.b32.xlu0 %v72, 4
    %v80 = vpop.permute.xlu0 %79
    %81 = vrot.lane.b32.xlu0 %v74, 4
    %v82 = vpop.permute.xlu0 %81
    %83 = vrot.lane.b32.xlu0 %v76, 4
    %v84 = vpop.permute.xlu0 %83
    %85 = vrot.lane.b32.xlu0 %v75, 4
    %v86 = vpop.permute.xlu0 %85
    %vm92 = vcmask 15360
    %v93 = vsel %vm92, %v32, %v53
    %v94 = vsel %vm92, %v33, %v55
    %v95 = vsel %vm92, %v34, %v57
    %v96 = vsel %vm92, %v35, %v59
    %v97 = vsel %vm92, %v36, %v61
    %vm98 = vcmask 31744
    %v99 = vsel %vm98, %v93, %v78
    %v100 = vsel %vm98, %v94, %v80
    %v101 = vsel %vm98, %v95, %v82
    %v102 = vsel %vm98, %v96, %v84
    %v103 = vsel %vm98, %v97, %v86
    %vm104 = vcmask 48128
    %v106 = vsel %vm104, %v99, 0
    %v109 = vsel %vm104, %v100, 0
    %v112 = vsel %vm104, %v101, 0
    %v115 = vsel %vm104, %v102, 0
    %v118 = vsel %vm104, %v103, 0
    %v121 = vsel %vm67, %v18, 0
    %123 = vmatprep.subr.mxu0 0.0
    %124 = vmatpush1.msra.mxu0 0.0
    %125 = vmatprep.subr.mxu0 0.0
    %126 = vmatpush1.msra.mxu0 0.0
    %127 = vmatprep.subr.mxu0 0.0
    %128 = vmatpush1.msra.mxu0 0.0
    %129 = vmatprep.subr.mxu0 0.0
    %130 = vmatpush1.msra.mxu0 0.0
    %131 = vmatprep.subr.mxu0 0.0
    %132 = vmatpush1.msra.mxu0 0.0
    %133 = vmatprep.subr.mxu0 0.0
    %134 = vmatpush1.msra.mxu0 0.0
    %135 = vmatprep.subr.mxu0 0.0
    %136 = vmatpush1.msra.mxu0 0.0
    %137 = vmatprep.subr.mxu0 0.0
    %138 = vmatpush1.msra.mxu0 0.0
    %139 = vmatprep.subr.mxu0 0.0
    %140 = vmatpush1.msra.mxu0 0.0
    %141 = vmatprep.subr.mxu0 0.0
    %142 = vmatpush1.msra.mxu0 0.0
    %143 = vmatprep.subr.mxu0 0.0
    %144 = vmatpush1.msra.mxu0 0.0
    %145 = vmatprep.subr.mxu0 0.0
    %146 = vmatpush1.msra.mxu0 0.0
    %147 = vmatprep.subr.mxu0 0.0
    %148 = vmatpush1.msra.mxu0 0.0
    %149 = vmatprep.subr.mxu0 0.0
    %150 = vmatpush1.msra.mxu0 0.0
    %151 = vmatprep.subr.mxu0 0.0
    %152 = vmatpush1.msra.mxu0 0.0
    %153 = vmatprep.subr.mxu0 0.0
    %154 = vmatpush1.msra.mxu0 %v121
    %155 = vmatprep.subr.mxu0 0.0
    %156 = vmatpush2.msra.mxu0 0.0
    %157 = vmatprep.subr.mxu0 0.0
    %158 = vmatpush2.msra.mxu0 0.0
    %159 = vmatprep.subr.mxu0 0.0
    %160 = vmatpush2.msra.mxu0 0.0
    %161 = vmatprep.subr.mxu0 0.0
    %162 = vmatpush2.msra.mxu0 0.0
    %163 = vmatprep.subr.mxu0 0.0
    %164 = vmatpush2.msra.mxu0 0.0
    %165 = vmatprep.subr.mxu0 0.0
    %166 = vmatpush2.msra.mxu0 0.0
    %167 = vmatprep.subr.mxu0 0.0
    %168 = vmatpush2.msra.mxu0 0.0
    %169 = vmatprep.subr.mxu0 0.0
    %170 = vmatpush2.msra.mxu0 0.0
    %171 = vmatprep.subr.mxu0 0.0
    %172 = vmatpush2.msra.mxu0 0.0
    %173 = vmatprep.subr.mxu0 0.0
    %174 = vmatpush2.msra.mxu0 0.0
    %175 = vmatprep.subr.mxu0 0.0
    %176 = vmatpush2.msra.mxu0 0.0
    %177 = vmatprep.subr.mxu0 0.0
    %178 = vmatpush2.msra.mxu0 0.0
    %179 = vmatprep.subr.mxu0 0.0
    %180 = vmatpush2.msra.mxu0 0.0
    %181 = vmatprep.subr.mxu0 0.0
    %182 = vmatpush2.msra.mxu0 0.0
    %183 = vmatprep.subr.mxu0 0.0
    %184 = vmatpush2.msra.mxu0 0.0
    %185 = vmatprep.subr.mxu0 0.0
    %186 = vmatpush2.msra.mxu0 0.0
    %187 = vmatprep.mubr.f32.mxu0 0.0
    %188 = vmatmul.mubr.f32.gmra.mxu0 %v106
    %v189 = vpop.f32.mrf.mxu0
    %v190 = vadd.f32 0.0, %v189
    %v191 = vpop.f32.mrf.mxu0
    %192 = vmatprep.mubr.f32.mxu0 0.0
    %193 = vmatmul.mubr.f32.gmra.mxu0 %v109
    %v194 = vpop.f32.mrf.mxu0
    %v195 = vadd.f32 0.0, %v194
    %v196 = vpop.f32.mrf.mxu0
    %197 = vmatprep.mubr.f32.mxu0 0.0
    %198 = vmatmul.mubr.f32.gmra.mxu0 %v112
    %v199 = vpop.f32.mrf.mxu0
    %v200 = vadd.f32 0.0, %v199
    %v201 = vpop.f32.mrf.mxu0
    %202 = vmatprep.mubr.f32.mxu0 0.0
    %203 = vmatmul.mubr.f32.gmra.mxu0 %v115
    %v204 = vpop.f32.mrf.mxu0
    %v205 = vadd.f32 0.0, %v204
    %v206 = vpop.f32.mrf.mxu0
    %207 = vmatprep.mubr.f32.mxu0 0.0
    %208 = vmatmul.mubr.f32.gmra.mxu0 %v118
    %v209 = vpop.f32.mrf.mxu0
    %v210 = vadd.f32 0.0, %v209
    %v211 = vpop.f32.mrf.mxu0
    %212 = vdwg.mxu0
    %v213 = vlaneseq
    %v214 = vshrl.u32 %v213, 7
    %v215 = vsub.s32 0, %v214
    %v216 = vrot.slane %v31, %v215
    %v217 = vmul.f32 %v190, %v216
    %v218 = vmul.f32 %v195, %v216
    %v219 = vmul.f32 %v200, %v216
    %v220 = vmul.f32 %v205, %v216
    %v221 = vmul.f32 %v210, %v216
    %v222 = vlaneseq
    %v223 = vshrl.u32 %v222, 7
    %v224 = vsub.s32 1, %v223
    %v225 = vrot.slane %v31, %v224
    %v226 = vadd.f32 %v217, %v225
    %v227 = vadd.f32 %v218, %v225
    %v228 = vadd.f32 %v219, %v225
    %v229 = vadd.f32 %v220, %v225
    %v230 = vadd.f32 %v221, %v225
    %v231 = vmax.f32 %v226, 0.0
    %v232 = vmax.f32 %v227, 0.0
    %v233 = vmax.f32 %v228, 0.0
    %v234 = vmax.f32 %v229, 0.0
    %v235 = vmax.f32 %v230, 0.0
    %v241 = vcombine.high %v231, %v231
    %v243 = vunpack.c.l.s4 1983009808
    %v244 = vunpack.c.0.s8 %v243
    %v245 = vlaneseq
    %v246 = vshrl.u32 %v245, 7
    %v247 = vsub.s32 %v244, %v246
    %v248 = vrot.slane %v231, %v247
    %v250 = vunpack.c.l.s4 1983009808
    %v251 = vunpack.c.0.s8 %v250
    %v252 = vlaneseq
    %v253 = vshrl.u32 %v252, 7
    %v254 = vsub.s32 %v251, %v253
    %v255 = vrot.slane %v241, %v254
    %v256 = vcombine.high %v248, %v248
    %v257 = vcombine.high %v255, %v255
    %v258 = vcombine.high %v232, %v232
    %v260 = vunpack.c.l.s4 1983009808
    %v261 = vunpack.c.0.s8 %v260
    %v262 = vlaneseq
    %v263 = vshrl.u32 %v262, 7
    %v264 = vsub.s32 %v261, %v263
    %v265 = vrot.slane %v232, %v264
    %v267 = vunpack.c.l.s4 1983009808
    %v268 = vunpack.c.0.s8 %v267
    %v269 = vlaneseq
    %v270 = vshrl.u32 %v269, 7
    %v271 = vsub.s32 %v268, %v270
    %v272 = vrot.slane %v258, %v271
    %v273 = vcombine.high %v265, %v265
    %v274 = vcombine.high %v272, %v272
    %v275 = vcombine.high %v233, %v233
    %v277 = vunpack.c.l.s4 1983009808
    %v278 = vunpack.c.0.s8 %v277
    %v279 = vlaneseq
    %v280 = vshrl.u32 %v279, 7
    %v281 = vsub.s32 %v278, %v280
    %v282 = vrot.slane %v233, %v281
    %v284 = vunpack.c.l.s4 1983009808
    %v285 = vunpack.c.0.s8 %v284
    %v286 = vlaneseq
    %v287 = vshrl.u32 %v286, 7
    %v288 = vsub.s32 %v285, %v287
    %v289 = vrot.slane %v275, %v288
    %v290 = vcombine.high %v282, %v282
    %v291 = vcombine.high %v289, %v289
    %v292 = vcombine.high %v234, %v234
    %v294 = vunpack.c.l.s4 1983009808
    %v295 = vunpack.c.0.s8 %v294
    %v296 = vlaneseq
    %v297 = vshrl.u32 %v296, 7
    %v298 = vsub.s32 %v295, %v297
    %v299 = vrot.slane %v234, %v298
    %v301 = vunpack.c.l.s4 1983009808
    %v302 = vunpack.c.0.s8 %v301
    %v303 = vlaneseq
    %v304 = vshrl.u32 %v303, 7
    %v305 = vsub.s32 %v302, %v304
    %v306 = vrot.slane %v292, %v305
    %v307 = vcombine.high %v299, %v299
    %v308 = vcombine.high %v306, %v306
    %v309 = vcombine.high %v235, %v235
    %v311 = vunpack.c.l.s4 1983009808
    %v312 = vunpack.c.0.s8 %v311
    %v313 = vlaneseq
    %v314 = vshrl.u32 %v313, 7
    %v315 = vsub.s32 %v312, %v314
    %v316 = vrot.slane %v235, %v315
    %v318 = vunpack.c.l.s4 1983009808
    %v319 = vunpack.c.0.s8 %v318
    %v320 = vlaneseq
    %v321 = vshrl.u32 %v320, 7
    %v322 = vsub.s32 %v319, %v321
    %v323 = vrot.slane %v309, %v322
    %v324 = vcombine.high %v316, %v316
    %vm344 = vcmask 123904
    %v345 = vsel %vm344, %v248, -inf
    %v346 = vrot.slane %v345, 4
    %v347 = vmax.f32 %v345, %v346
    %v348 = vrot.slane %v347, 2
    %v349 = vmax.f32 %v347, %v348
    %v350 = vrot.slane %v349, 1
    %v351 = vmax.f32 %v349, %v350
    %v352 = vsel %vm344, %v256, -inf
    %v353 = vrot.slane %v352, 4
    %v354 = vmax.f32 %v352, %v353
    %v355 = vrot.slane %v354, 2
    %v356 = vmax.f32 %v354, %v355
    %v357 = vrot.slane %v356, 1
    %v358 = vmax.f32 %v356, %v357
    %v359 = vsel %vm344, %v255, -inf
    %v360 = vrot.slane %v359, 4
    %v361 = vmax.f32 %v359, %v360
    %v362 = vrot.slane %v361, 2
    %v363 = vmax.f32 %v361, %v362
    %v364 = vrot.slane %v363, 1
    %v365 = vmax.f32 %v363, %v364
    %v366 = vsel %vm344, %v257, -inf
    %v367 = vrot.slane %v366, 4
    %v368 = vmax.f32 %v366, %v367
    %v369 = vrot.slane %v368, 2
    %v370 = vmax.f32 %v368, %v369
    %v371 = vrot.slane %v370, 1
    %v372 = vmax.f32 %v370, %v371
    %v373 = vsel %vm344, %v265, -inf
    %v374 = vrot.slane %v373, 4
    %v375 = vmax.f32 %v373, %v374
    %v376 = vrot.slane %v375, 2
    %v377 = vmax.f32 %v375, %v376
    %v378 = vrot.slane %v377, 1
    %v379 = vmax.f32 %v377, %v378
    %v380 = vsel %vm344, %v273, -inf
    %v381 = vrot.slane %v380, 4
    %v382 = vmax.f32 %v380, %v381
    %v383 = vrot.slane %v382, 2
    %v384 = vmax.f32 %v382, %v383
    %v385 = vrot.slane %v384, 1
    %v386 = vmax.f32 %v384, %v385
    %v387 = vsel %vm344, %v272, -inf
    %v388 = vrot.slane %v387, 4
    %v389 = vmax.f32 %v387, %v388
    %v390 = vrot.slane %v389, 2
    %v391 = vmax.f32 %v389, %v390
    %v392 = vrot.slane %v391, 1
    %v393 = vmax.f32 %v391, %v392
    %v394 = vsel %vm344, %v274, -inf
    %v395 = vrot.slane %v394, 4
    %v396 = vmax.f32 %v394, %v395
    %v397 = vrot.slane %v396, 2
    %v398 = vmax.f32 %v396, %v397
    %v399 = vrot.slane %v398, 1
    %v400 = vmax.f32 %v398, %v399
    %v401 = vsel %vm344, %v282, -inf
    %v402 = vrot.slane %v401, 4
    %v403 = vmax.f32 %v401, %v402
    %v404 = vrot.slane %v403, 2
    %v405 = vmax.f32 %v403, %v404
    %v406 = vrot.slane %v405, 1
    %v407 = vmax.f32 %v405, %v406
    %v408 = vsel %vm344, %v290, -inf
    %v409 = vrot.slane %v408, 4
    %v410 = vmax.f32 %v408, %v409
    %v411 = vrot.slane %v410, 2
    %v412 = vmax.f32 %v410, %v411
    %v413 = vrot.slane %v412, 1
    %v414 = vmax.f32 %v412, %v413
    %v415 = vsel %vm344, %v289, -inf
    %v416 = vrot.slane %v415, 4
    %v417 = vmax.f32 %v415, %v416
    %v418 = vrot.slane %v417, 2
    %v419 = vmax.f32 %v417, %v418
    %v420 = vrot.slane %v419, 1
    %v421 = vmax.f32 %v419, %v420
    %v422 = vsel %vm344, %v291, -inf
    %v423 = vrot.slane %v422, 4
    %v424 = vmax.f32 %v422, %v423
    %v425 = vrot.slane %v424, 2
    %v426 = vmax.f32 %v424, %v425
    %v427 = vrot.slane %v426, 1
    %v428 = vmax.f32 %v426, %v427
    %v429 = vsel %vm344, %v299, -inf
    %v430 = vrot.slane %v429, 4
    %v431 = vmax.f32 %v429, %v430
    %v432 = vrot.slane %v431, 2
    %v433 = vmax.f32 %v431, %v432
    %v434 = vrot.slane %v433, 1
    %v435 = vmax.f32 %v433, %v434
    %v436 = vsel %vm344, %v307, -inf
    %v437 = vrot.slane %v436, 4
    %v438 = vmax.f32 %v436, %v437
    %v439 = vrot.slane %v438, 2
    %v440 = vmax.f32 %v438, %v439
    %v441 = vrot.slane %v440, 1
    %v442 = vmax.f32 %v440, %v441
    %v443 = vsel %vm344, %v306, -inf
    %v444 = vrot.slane %v443, 4
    %v445 = vmax.f32 %v443, %v444
    %v446 = vrot.slane %v445, 2
    %v447 = vmax.f32 %v445, %v446
    %v448 = vrot.slane %v447, 1
    %v449 = vmax.f32 %v447, %v448
    %v450 = vsel %vm344, %v308, -inf
    %v451 = vrot.slane %v450, 4
    %v452 = vmax.f32 %v450, %v451
    %v453 = vrot.slane %v452, 2
    %v454 = vmax.f32 %v452, %v453
    %v455 = vrot.slane %v454, 1
    %v456 = vmax.f32 %v454, %v455
    %v457 = vsel %vm344, %v316, -inf
    %v458 = vrot.slane %v457, 4
    %v459 = vmax.f32 %v457, %v458
    %v460 = vrot.slane %v459, 2
    %v461 = vmax.f32 %v459, %v460
    %v462 = vrot.slane %v461, 1
    %v463 = vmax.f32 %v461, %v462
    %v464 = vsel %vm344, %v324, -inf
    %v465 = vrot.slane %v464, 4
    %v466 = vmax.f32 %v464, %v465
    %v467 = vrot.slane %v466, 2
    %v468 = vmax.f32 %v466, %v467
    %v469 = vrot.slane %v468, 1
    %v470 = vmax.f32 %v468, %v469
    %v471 = vsel %vm344, %v323, -inf
    %v472 = vrot.slane %v471, 4
    %v473 = vmax.f32 %v471, %v472
    %v474 = vrot.slane %v473, 2
    %v475 = vmax.f32 %v473, %v474
    %v476 = vrot.slane %v475, 1
    %v477 = vmax.f32 %v475, %v476
    %vm495 = vcmask 1041409
    %v496 = vsel %vm495, %v358, %v351
    %vm497 = vcmask 1042434
    %v498 = vsel %vm497, %v365, %v496
    %vm499 = vcmask 1043459
    %v500 = vsel %vm499, %v372, %v498
    %vm501 = vcmask 1044484
    %v502 = vsel %vm501, %v379, %v500
    %vm503 = vcmask 1045509
    %v504 = vsel %vm503, %v386, %v502
    %vm505 = vcmask 1046534
    %v506 = vsel %vm505, %v393, %v504
    %vm507 = vcmask 1047559
    %v508 = vsel %vm507, %v400, %v506
    %v509 = vsel %vm495, %v414, %v407
    %v510 = vsel %vm497, %v421, %v509
    %v511 = vsel %vm499, %v428, %v510
    %v512 = vsel %vm501, %v435, %v511
    %v513 = vsel %vm503, %v442, %v512
    %v514 = vsel %vm505, %v449, %v513
    %v515 = vsel %vm507, %v456, %v514
    %v520 = vsel %vm495, %v365, %v358
    %v521 = vsel %vm497, %v372, %v520
    %v522 = vsel %vm499, %v379, %v521
    %v523 = vsel %vm501, %v386, %v522
    %v524 = vsel %vm503, %v393, %v523
    %v525 = vsel %vm505, %v400, %v524
    %v526 = vsel %vm507, %v407, %v525
    %v527 = vsel %vm495, %v421, %v414
    %v528 = vsel %vm497, %v428, %v527
    %v529 = vsel %vm499, %v435, %v528
    %v530 = vsel %vm501, %v442, %v529
    %v531 = vsel %vm503, %v449, %v530
    %v532 = vsel %vm505, %v456, %v531
    %v533 = vsel %vm507, %v463, %v532
    %534 = vrot.lane.b32.xlu0 %v526, 16
    %v535 = vpop.permute.xlu0 %534
    %536 = vrot.lane.b32.xlu0 %v533, 16
    %v537 = vpop.permute.xlu0 %536
    %538 = vrot.lane.b32.xlu0 %v470, 16
    %v539 = vpop.permute.xlu0 %538
    %v544 = vsel %vm495, %v372, %v365
    %v545 = vsel %vm497, %v379, %v544
    %v546 = vsel %vm499, %v386, %v545
    %v547 = vsel %vm501, %v393, %v546
    %v548 = vsel %vm503, %v400, %v547
    %v549 = vsel %vm505, %v407, %v548
    %v550 = vsel %vm507, %v414, %v549
    %v551 = vsel %vm495, %v428, %v421
    %v552 = vsel %vm497, %v435, %v551
    %v553 = vsel %vm499, %v442, %v552
    %v554 = vsel %vm501, %v449, %v553
    %v555 = vsel %vm503, %v456, %v554
    %v556 = vsel %vm505, %v463, %v555
    %v557 = vsel %vm507, %v470, %v556
    %558 = vrot.lane.b32.xlu0 %v550, 32
    %v559 = vpop.permute.xlu0 %558
    %560 = vrot.lane.b32.xlu0 %v557, 32
    %v561 = vpop.permute.xlu0 %560
    %562 = vrot.lane.b32.xlu0 %v477, 32
    %v563 = vpop.permute.xlu0 %562
    %vm567 = vcmask 130048
    %v568 = vsel %vm567, %v508, %v535
    %v569 = vsel %vm567, %v515, %v537
    %v570 = vsel %vm567, %v463, %v539
    %vm571 = vcmask 261120
    %v572 = vsel %vm571, %v568, %v559
    %v573 = vsel %vm571, %v569, %v561
    %v574 = vsel %vm571, %v570, %v563
    %vm575 = vcmask 392192
    %v577 = vsel %vm575, %v572, 0
    %v580 = vsel %vm575, %v573, 0
    %v583 = vsel %vm575, %v574, 0
    %585 = vmatprep.subr.mxu0 0.0
    %586 = vmatpush1.msra.mxu0 0.0
    %587 = vmatprep.subr.mxu0 0.0
    %588 = vmatpush1.msra.mxu0 0.0
    %589 = vmatprep.subr.mxu0 0.0
    %590 = vmatpush1.msra.mxu0 0.0
    %591 = vmatprep.subr.mxu0 0.0
    %592 = vmatpush1.msra.mxu0 0.0
    %593 = vmatprep.subr.mxu0 0.0
    %594 = vmatpush1.msra.mxu0 0.0
    %595 = vmatprep.subr.mxu0 0.0
    %596 = vmatpush1.msra.mxu0 0.0
    %597 = vmatprep.subr.mxu0 0.0
    %598 = vmatpush1.msra.mxu0 0.0
    %599 = vmatprep.subr.mxu0 0.0
    %600 = vmatpush1.msra.mxu0 0.0
    %601 = vmatprep.subr.mxu0 0.0
    %602 = vmatpush1.msra.mxu0 0.0
    %603 = vmatprep.subr.mxu0 0.0
    %604 = vmatpush1.msra.mxu0 0.0
    %605 = vmatprep.subr.mxu0 0.0
    %606 = vmatpush1.msra.mxu0 %v24
    %607 = vmatprep.subr.mxu0 0.0
    %608 = vmatpush1.msra.mxu0 %v23
    %609 = vmatprep.subr.mxu0 0.0
    %610 = vmatpush1.msra.mxu0 %v22
    %611 = vmatprep.subr.mxu0 0.0
    %612 = vmatpush1.msra.mxu0 %v21
    %613 = vmatprep.subr.mxu0 0.0
    %614 = vmatpush1.msra.mxu0 %v20
    %615 = vmatprep.subr.mxu0 0.0
    %616 = vmatpush1.msra.mxu0 %v19
    %617 = vmatprep.subr.mxu0 0.0
    %618 = vmatpush2.msra.mxu0 0.0
    %619 = vmatprep.subr.mxu0 0.0
    %620 = vmatpush2.msra.mxu0 0.0
    %621 = vmatprep.subr.mxu0 0.0
    %622 = vmatpush2.msra.mxu0 0.0
    %623 = vmatprep.subr.mxu0 0.0
    %624 = vmatpush2.msra.mxu0 0.0
    %625 = vmatprep.subr.mxu0 0.0
    %626 = vmatpush2.msra.mxu0 0.0
    %627 = vmatprep.subr.mxu0 0.0
    %628 = vmatpush2.msra.mxu0 0.0
    %629 = vmatprep.subr.mxu0 0.0
    %630 = vmatpush2.msra.mxu0 0.0
    %631 = vmatprep.subr.mxu0 0.0
    %632 = vmatpush2.msra.mxu0 0.0
    %633 = vmatprep.subr.mxu0 0.0
    %634 = vmatpush2.msra.mxu0 0.0
    %635 = vmatprep.subr.mxu0 0.0
    %636 = vmatpush2.msra.mxu0 0.0
    %637 = vmatprep.subr.mxu0 0.0
    %638 = vmatpush2.msra.mxu0 0.0
    %639 = vmatprep.subr.mxu0 0.0
    %640 = vmatpush2.msra.mxu0 0.0
    %641 = vmatprep.subr.mxu0 0.0
    %642 = vmatpush2.msra.mxu0 0.0
    %643 = vmatprep.subr.mxu0 0.0
    %644 = vmatpush2.msra.mxu0 0.0
    %645 = vmatprep.subr.mxu0 0.0
    %646 = vmatpush2.msra.mxu0 0.0
    %647 = vmatprep.subr.mxu0 0.0
    %648 = vmatpush2.msra.mxu0 0.0
    %649 = vmatprep.mubr.f32.mxu0 0.0
    %650 = vmatmul.mubr.f32.gmra.mxu0 %v577
    %v651 = vpop.f32.mrf.mxu0
    %v652 = vadd.f32 0.0, %v651
    %v653 = vpop.f32.mrf.mxu0
    %654 = vmatprep.mubr.f32.mxu0 0.0
    %655 = vmatmul.mubr.f32.gmra.mxu0 %v580
    %v656 = vpop.f32.mrf.mxu0
    %v657 = vadd.f32 0.0, %v656
    %v658 = vpop.f32.mrf.mxu0
    %659 = vmatprep.mubr.f32.mxu0 0.0
    %660 = vmatmul.mubr.f32.gmra.mxu0 %v583
    %v661 = vpop.f32.mrf.mxu0
    %v662 = vpop.f32.mrf.mxu0
    %663 = vdwg.mxu0
    %v664 = vlaneseq
    %v665 = vshrl.u32 %v664, 7
    %v666 = vsub.s32 2, %v665
    %v667 = vrot.slane %v31, %v666
    %v668 = vmul.f32 %v652, %v667
    %v669 = vmul.f32 %v657, %v667
    %v670 = vlaneseq
    %v671 = vshrl.u32 %v670, 7
    %v672 = vsub.s32 3, %v671
    %v673 = vrot.slane %v31, %v672
    %v674 = vadd.f32 %v668, %v673
    %v675 = vadd.f32 %v669, %v673
    %v676 = vmax.f32 %v674, 0.0
    %v677 = vmax.f32 %v675, 0.0
    %v680 = vcombine.high %v676, %v676
    %v682 = vunpack.c.l.s4 1983009808
    %v683 = vunpack.c.0.s8 %v682
    %v684 = vlaneseq
    %v685 = vshrl.u32 %v684, 7
    %v686 = vsub.s32 %v683, %v685
    %v687 = vrot.slane %v676, %v686
    %v689 = vunpack.c.l.s4 1983009808
    %v690 = vunpack.c.0.s8 %v689
    %v691 = vlaneseq
    %v692 = vshrl.u32 %v691, 7
    %v693 = vsub.s32 %v690, %v692
    %v694 = vrot.slane %v680, %v693
    %v695 = vcombine.high %v687, %v687
    %v696 = vcombine.high %v694, %v694
    %v697 = vcombine.high %v677, %v677
    %v699 = vunpack.c.l.s4 1983009808
    %v700 = vunpack.c.0.s8 %v699
    %v701 = vlaneseq
    %v702 = vshrl.u32 %v701, 7
    %v703 = vsub.s32 %v700, %v702
    %v704 = vrot.slane %v677, %v703
    %v706 = vunpack.c.l.s4 1983009808
    %v707 = vunpack.c.0.s8 %v706
    %v708 = vlaneseq
    %v709 = vshrl.u32 %v708, 7
    %v710 = vsub.s32 %v707, %v709
    %v711 = vrot.slane %v697, %v710
    %v712 = vcombine.high %v704, %v704
    %v713 = vcombine.high %v711, %v711
    %v722 = vsel %vm344, %v687, -inf
    %v723 = vrot.slane %v722, 4
    %v724 = vmax.f32 %v722, %v723
    %v725 = vrot.slane %v724, 2
    %v726 = vmax.f32 %v724, %v725
    %v727 = vrot.slane %v726, 1
    %v728 = vmax.f32 %v726, %v727
    %v729 = vsel %vm344, %v695, -inf
    %v730 = vrot.slane %v729, 4
    %v731 = vmax.f32 %v729, %v730
    %v732 = vrot.slane %v731, 2
    %v733 = vmax.f32 %v731, %v732
    %v734 = vrot.slane %v733, 1
    %v735 = vmax.f32 %v733, %v734
    %v736 = vsel %vm344, %v694, -inf
    %v737 = vrot.slane %v736, 4
    %v738 = vmax.f32 %v736, %v737
    %v739 = vrot.slane %v738, 2
    %v740 = vmax.f32 %v738, %v739
    %v741 = vrot.slane %v740, 1
    %v742 = vmax.f32 %v740, %v741
    %v743 = vsel %vm344, %v696, -inf
    %v744 = vrot.slane %v743, 4
    %v745 = vmax.f32 %v743, %v744
    %v746 = vrot.slane %v745, 2
    %v747 = vmax.f32 %v745, %v746
    %v748 = vrot.slane %v747, 1
    %v749 = vmax.f32 %v747, %v748
    %v750 = vsel %vm344, %v704, -inf
    %v751 = vrot.slane %v750, 4
    %v752 = vmax.f32 %v750, %v751
    %v753 = vrot.slane %v752, 2
    %v754 = vmax.f32 %v752, %v753
    %v755 = vrot.slane %v754, 1
    %v756 = vmax.f32 %v754, %v755
    %v757 = vsel %vm344, %v712, -inf
    %v758 = vrot.slane %v757, 4
    %v759 = vmax.f32 %v757, %v758
    %v760 = vrot.slane %v759, 2
    %v761 = vmax.f32 %v759, %v760
    %v762 = vrot.slane %v761, 1
    %v763 = vmax.f32 %v761, %v762
    %v764 = vsel %vm344, %v711, -inf
    %v765 = vrot.slane %v764, 4
    %v766 = vmax.f32 %v764, %v765
    %v767 = vrot.slane %v766, 2
    %v768 = vmax.f32 %v766, %v767
    %v769 = vrot.slane %v768, 1
    %v770 = vmax.f32 %v768, %v769
    %v771 = vsel %vm344, %v713, -inf
    %v772 = vrot.slane %v771, 4
    %v773 = vmax.f32 %v771, %v772
    %v774 = vrot.slane %v773, 2
    %v775 = vmax.f32 %v773, %v774
    %v776 = vrot.slane %v775, 1
    %v777 = vmax.f32 %v775, %v776
    %v784 = vsel %vm495, %v735, %v728
    %v785 = vsel %vm497, %v742, %v784
    %v786 = vsel %vm499, %v749, %v785
    %v787 = vsel %vm501, %v756, %v786
    %v788 = vsel %vm503, %v763, %v787
    %v791 = vsel %vm495, %v742, %v735
    %v792 = vsel %vm497, %v749, %v791
    %v793 = vsel %vm499, %v756, %v792
    %v794 = vsel %vm501, %v763, %v793
    %v795 = vsel %vm503, %v770, %v794
    %796 = vrot.lane.b32.xlu0 %v795, 16
    %v797 = vpop.permute.xlu0 %796
    %v800 = vsel %vm495, %v749, %v742
    %v801 = vsel %vm497, %v756, %v800
    %v802 = vsel %vm499, %v763, %v801
    %v803 = vsel %vm501, %v770, %v802
    %v804 = vsel %vm503, %v777, %v803
    %805 = vrot.lane.b32.xlu0 %v804, 32
    %v806 = vpop.permute.xlu0 %805
    %v808 = vsel %vm567, %v788, %v797
    %v809 = vsel %vm571, %v808, %v806
    %v811 = vsel %vm575, %v809, 0
    %813 = vmatprep.subr.mxu0 0.0
    %814 = vmatpush1.msra.mxu0 0.0
    %815 = vmatprep.subr.mxu0 0.0
    %816 = vmatpush1.msra.mxu0 0.0
    %817 = vmatprep.subr.mxu0 0.0
    %818 = vmatpush1.msra.mxu0 0.0
    %819 = vmatprep.subr.mxu0 0.0
    %820 = vmatpush1.msra.mxu0 0.0
    %821 = vmatprep.subr.mxu0 0.0
    %822 = vmatpush1.msra.mxu0 0.0
    %823 = vmatprep.subr.mxu0 0.0
    %824 = vmatpush1.msra.mxu0 0.0
    %825 = vmatprep.subr.mxu0 0.0
    %826 = vmatpush1.msra.mxu0 0.0
    %827 = vmatprep.subr.mxu0 0.0
    %828 = vmatpush1.msra.mxu0 0.0
    %829 = vmatprep.subr.mxu0 0.0
    %830 = vmatpush1.msra.mxu0 0.0
    %831 = vmatprep.subr.mxu0 0.0
    %832 = vmatpush1.msra.mxu0 0.0
    %833 = vmatprep.subr.mxu0 0.0
    %834 = vmatpush1.msra.mxu0 %v30
    %835 = vmatprep.subr.mxu0 0.0
    %836 = vmatpush1.msra.mxu0 %v29
    %837 = vmatprep.subr.mxu0 0.0
    %838 = vmatpush1.msra.mxu0 %v28
    %839 = vmatprep.subr.mxu0 0.0
    %840 = vmatpush1.msra.mxu0 %v27
    %841 = vmatprep.subr.mxu0 0.0
    %842 = vmatpush1.msra.mxu0 %v26
    %843 = vmatprep.subr.mxu0 0.0
    %844 = vmatpush1.msra.mxu0 %v25
    %845 = vmatprep.subr.mxu0 0.0
    %846 = vmatpush2.msra.mxu0 0.0
    %847 = vmatprep.subr.mxu0 0.0
    %848 = vmatpush2.msra.mxu0 0.0
    %849 = vmatprep.subr.mxu0 0.0
    %850 = vmatpush2.msra.mxu0 0.0
    %851 = vmatprep.subr.mxu0 0.0
    %852 = vmatpush2.msra.mxu0 0.0
    %853 = vmatprep.subr.mxu0 0.0
    %854 = vmatpush2.msra.mxu0 0.0
    %855 = vmatprep.subr.mxu0 0.0
    %856 = vmatpush2.msra.mxu0 0.0
    %857 = vmatprep.subr.mxu0 0.0
    %858 = vmatpush2.msra.mxu0 0.0
    %859 = vmatprep.subr.mxu0 0.0
    %860 = vmatpush2.msra.mxu0 0.0
    %861 = vmatprep.subr.mxu0 0.0
    %862 = vmatpush2.msra.mxu0 0.0
    %863 = vmatprep.subr.mxu0 0.0
    %864 = vmatpush2.msra.mxu0 0.0
    %865 = vmatprep.subr.mxu0 0.0
    %866 = vmatpush2.msra.mxu0 0.0
    %867 = vmatprep.subr.mxu0 0.0
    %868 = vmatpush2.msra.mxu0 0.0
    %869 = vmatprep.subr.mxu0 0.0
    %870 = vmatpush2.msra.mxu0 0.0
    %871 = vmatprep.subr.mxu0 0.0
    %872 = vmatpush2.msra.mxu0 0.0
    %873 = vmatprep.subr.mxu0 0.0
    %874 = vmatpush2.msra.mxu0 0.0
    %875 = vmatprep.subr.mxu0 0.0
    %876 = vmatpush2.msra.mxu0 0.0
    %877 = vmatprep.mubr.f32.mxu0 0.0
    %878 = vmatmul.mubr.f32.gmra.mxu0 %v811
    %v879 = vpop.f32.mrf.mxu0
    %v880 = vadd.f32 0.0, %v879
    %v881 = vpop.f32.mrf.mxu0
    %882 = vdwg.mxu0
    %v883 = vlaneseq
    %v884 = vshrl.u32 %v883, 7
    %v885 = vsub.s32 4, %v884
    %v886 = vrot.slane %v31, %v885
    %v887 = vmul.f32 %v880, %v886
    %v888 = vlaneseq
    %v889 = vshrl.u32 %v888, 7
    %v890 = vsub.s32 5, %v889
    %v891 = vrot.slane %v31, %v890
    %v892 = vadd.f32 %v887, %v891
    %v893 = vmax.f32 %v892, 0.0
    %v895 = vcombine.high %v893, %v893
    %v897 = vunpack.c.l.s4 1983009808
    %v898 = vunpack.c.0.s8 %v897
    %v899 = vlaneseq
    %v900 = vshrl.u32 %v899, 7
    %v901 = vsub.s32 %v898, %v900
    %v902 = vrot.slane %v893, %v901
    %v904 = vunpack.c.l.s4 1983009808
    %v905 = vunpack.c.0.s8 %v904
    %v906 = vlaneseq
    %v907 = vshrl.u32 %v906, 7
    %v908 = vsub.s32 %v905, %v907
    %v909 = vrot.slane %v895, %v908
    %v910 = vcombine.high %v902, %v902
    %v914 = vsel %vm344, %v902, -inf
    %v915 = vrot.slane %v914, 4
    %v916 = vmax.f32 %v914, %v915
    %v917 = vrot.slane %v916, 2
    %v918 = vmax.f32 %v916, %v917
    %v919 = vrot.slane %v918, 1
    %v920 = vmax.f32 %v918, %v919
    %v921 = vsel %vm344, %v910, -inf
    %v922 = vrot.slane %v921, 4
    %v923 = vmax.f32 %v921, %v922
    %v924 = vrot.slane %v923, 2
    %v925 = vmax.f32 %v923, %v924
    %v926 = vrot.slane %v925, 1
    %v927 = vmax.f32 %v925, %v926
    %v928 = vsel %vm344, %v909, -inf
    %v929 = vrot.slane %v928, 4
    %v930 = vmax.f32 %v928, %v929
    %v931 = vrot.slane %v930, 2
    %v932 = vmax.f32 %v930, %v931
    %v933 = vrot.slane %v932, 1
    %v934 = vmax.f32 %v932, %v933
    %s935 = scalar_lea.vmem %s0, 40
    %v936 = vld [vmem:[%s935] sm:$0xff]
    %v937 = vld [vmem:[%s935 + $0x8] sm:$0xff]
    %v938 = vld [vmem:[%s935 + $0x10] sm:$0xff]
    %v939 = vld [vmem:[%s935 + $0x18] sm:$0xff]
    %v940 = vld [vmem:[%s935 + $0x20] sm:$0xff]
    %v946 = vrot.slane %v936, 1
    %v947 = vrot.slane %v937, 1
    %v948 = vsel %vm42, %v946, %v947
    %v949 = vrot.slane %v938, 1
    %v950 = vsel %vm42, %v947, %v949
    %v951 = vrot.slane %v939, 1
    %v952 = vsel %vm42, %v949, %v951
    %v953 = vrot.slane %v940, 1
    %v954 = vsel %vm42, %v951, %v953
    %955 = vrot.lane.b32.xlu0 %v948, 2
    %v956 = vpop.permute.xlu0 %955
    %957 = vrot.lane.b32.xlu0 %v950, 2
    %v958 = vpop.permute.xlu0 %957
    %959 = vrot.lane.b32.xlu0 %v952, 2
    %v960 = vpop.permute.xlu0 %959
    %961 = vrot.lane.b32.xlu0 %v954, 2
    %v962 = vpop.permute.xlu0 %961
    %963 = vrot.lane.b32.xlu0 %v953, 2
    %v964 = vpop.permute.xlu0 %963
    %v970 = vrot.slane %v936, 2
    %v971 = vrot.slane %v937, 2
    %v972 = vsel %vm67, %v970, %v971
    %v973 = vrot.slane %v938, 2
    %v974 = vsel %vm67, %v971, %v973
    %v975 = vrot.slane %v939, 2
    %v976 = vsel %vm67, %v973, %v975
    %v977 = vrot.slane %v940, 2
    %v978 = vsel %vm67, %v975, %v977
    %979 = vrot.lane.b32.xlu0 %v972, 4
    %v980 = vpop.permute.xlu0 %979
    %981 = vrot.lane.b32.xlu0 %v974, 4
    %v982 = vpop.permute.xlu0 %981
    %983 = vrot.lane.b32.xlu0 %v976, 4
    %v984 = vpop.permute.xlu0 %983
    %985 = vrot.lane.b32.xlu0 %v978, 4
    %v986 = vpop.permute.xlu0 %985
    %987 = vrot.lane.b32.xlu0 %v977, 4
    %v988 = vpop.permute.xlu0 %987
    %v994 = vsel %vm92, %v936, %v956
    %v995 = vsel %vm92, %v937, %v958
    %v996 = vsel %vm92, %v938, %v960
    %v997 = vsel %vm92, %v939, %v962
    %v998 = vsel %vm92, %v940, %v964
    %v999 = vsel %vm98, %v994, %v980
    %v1000 = vsel %vm98, %v995, %v982
    %v1001 = vsel %vm98, %v996, %v984
    %v1002 = vsel %vm98, %v997, %v986
    %v1003 = vsel %vm98, %v998, %v988
    %v1005 = vsel %vm104, %v999, 0
    %v1008 = vsel %vm104, %v1000, 0
    %v1011 = vsel %vm104, %v1001, 0
    %v1014 = vsel %vm104, %v1002, 0
    %v1017 = vsel %vm104, %v1003, 0
    %1019 = vmatprep.subr.mxu0 0.0
    %1020 = vmatpush1.msra.mxu0 0.0
    %1021 = vmatprep.subr.mxu0 0.0
    %1022 = vmatpush1.msra.mxu0 0.0
    %1023 = vmatprep.subr.mxu0 0.0
    %1024 = vmatpush1.msra.mxu0 0.0
    %1025 = vmatprep.subr.mxu0 0.0
    %1026 = vmatpush1.msra.mxu0 0.0
    %1027 = vmatprep.subr.mxu0 0.0
    %1028 = vmatpush1.msra.mxu0 0.0
    %1029 = vmatprep.subr.mxu0 0.0
    %1030 = vmatpush1.msra.mxu0 0.0
    %1031 = vmatprep.subr.mxu0 0.0
    %1032 = vmatpush1.msra.mxu0 0.0
    %1033 = vmatprep.subr.mxu0 0.0
    %1034 = vmatpush1.msra.mxu0 0.0
    %1035 = vmatprep.subr.mxu0 0.0
    %1036 = vmatpush1.msra.mxu0 0.0
    %1037 = vmatprep.subr.mxu0 0.0
    %1038 = vmatpush1.msra.mxu0 0.0
    %1039 = vmatprep.subr.mxu0 0.0
    %1040 = vmatpush1.msra.mxu0 0.0
    %1041 = vmatprep.subr.mxu0 0.0
    %1042 = vmatpush1.msra.mxu0 0.0
    %1043 = vmatprep.subr.mxu0 0.0
    %1044 = vmatpush1.msra.mxu0 0.0
    %1045 = vmatprep.subr.mxu0 0.0
    %1046 = vmatpush1.msra.mxu0 0.0
    %1047 = vmatprep.subr.mxu0 0.0
    %1048 = vmatpush1.msra.mxu0 0.0
    %1049 = vmatprep.subr.mxu0 0.0
    %1050 = vmatpush1.msra.mxu0 %v121
    %1051 = vmatprep.subr.mxu0 0.0
    %1052 = vmatpush2.msra.mxu0 0.0
    %1053 = vmatprep.subr.mxu0 0.0
    %1054 = vmatpush2.msra.mxu0 0.0
    %1055 = vmatprep.subr.mxu0 0.0
    %1056 = vmatpush2.msra.mxu0 0.0
    %1057 = vmatprep.subr.mxu0 0.0
    %1058 = vmatpush2.msra.mxu0 0.0
    %1059 = vmatprep.subr.mxu0 0.0
    %1060 = vmatpush2.msra.mxu0 0.0
    %1061 = vmatprep.subr.mxu0 0.0
    %1062 = vmatpush2.msra.mxu0 0.0
    %1063 = vmatprep.subr.mxu0 0.0
    %1064 = vmatpush2.msra.mxu0 0.0
    %1065 = vmatprep.subr.mxu0 0.0
    %1066 = vmatpush2.msra.mxu0 0.0
    %1067 = vmatprep.subr.mxu0 0.0
    %1068 = vmatpush2.msra.mxu0 0.0
    %1069 = vmatprep.subr.mxu0 0.0
    %1070 = vmatpush2.msra.mxu0 0.0
    %1071 = vmatprep.subr.mxu0 0.0
    %1072 = vmatpush2.msra.mxu0 0.0
    %1073 = vmatprep.subr.mxu0 0.0
    %1074 = vmatpush2.msra.mxu0 0.0
    %1075 = vmatprep.subr.mxu0 0.0
    %1076 = vmatpush2.msra.mxu0 0.0
    %1077 = vmatprep.subr.mxu0 0.0
    %1078 = vmatpush2.msra.mxu0 0.0
    %1079 = vmatprep.subr.mxu0 0.0
    %1080 = vmatpush2.msra.mxu0 0.0
    %1081 = vmatprep.subr.mxu0 0.0
    %1082 = vmatpush2.msra.mxu0 0.0
    %1083 = vmatprep.mubr.f32.mxu0 0.0
    %1084 = vmatmul.mubr.f32.gmra.mxu0 %v1005
    %v1085 = vpop.f32.mrf.mxu0
    %v1086 = vadd.f32 0.0, %v1085
    %v1087 = vpop.f32.mrf.mxu0
    %1088 = vmatprep.mubr.f32.mxu0 0.0
    %1089 = vmatmul.mubr.f32.gmra.mxu0 %v1008
    %v1090 = vpop.f32.mrf.mxu0
    %v1091 = vadd.f32 0.0, %v1090
    %v1092 = vpop.f32.mrf.mxu0
    %1093 = vmatprep.mubr.f32.mxu0 0.0
    %1094 = vmatmul.mubr.f32.gmra.mxu0 %v1011
    %v1095 = vpop.f32.mrf.mxu0
    %v1096 = vadd.f32 0.0, %v1095
    %v1097 = vpop.f32.mrf.mxu0
    %1098 = vmatprep.mubr.f32.mxu0 0.0
    %1099 = vmatmul.mubr.f32.gmra.mxu0 %v1014
    %v1100 = vpop.f32.mrf.mxu0
    %v1101 = vadd.f32 0.0, %v1100
    %v1102 = vpop.f32.mrf.mxu0
    %1103 = vmatprep.mubr.f32.mxu0 0.0
    %1104 = vmatmul.mubr.f32.gmra.mxu0 %v1017
    %v1105 = vpop.f32.mrf.mxu0
    %v1106 = vadd.f32 0.0, %v1105
    %v1107 = vpop.f32.mrf.mxu0
    %1108 = vdwg.mxu0
    %v1109 = vmul.f32 %v1086, %v216
    %v1110 = vmul.f32 %v1091, %v216
    %v1111 = vmul.f32 %v1096, %v216
    %v1112 = vmul.f32 %v1101, %v216
    %v1113 = vmul.f32 %v1106, %v216
    %v1114 = vadd.f32 %v1109, %v225
    %v1115 = vadd.f32 %v1110, %v225
    %v1116 = vadd.f32 %v1111, %v225
    %v1117 = vadd.f32 %v1112, %v225
    %v1118 = vadd.f32 %v1113, %v225
    %v1119 = vmax.f32 %v1114, 0.0
    %v1120 = vmax.f32 %v1115, 0.0
    %v1121 = vmax.f32 %v1116, 0.0
    %v1122 = vmax.f32 %v1117, 0.0
    %v1123 = vmax.f32 %v1118, 0.0
    %v1129 = vcombine.high %v1119, %v1119
    %v1131 = vunpack.c.l.s4 1983009808
    %v1132 = vunpack.c.0.s8 %v1131
    %v1133 = vlaneseq
    %v1134 = vshrl.u32 %v1133, 7
    %v1135 = vsub.s32 %v1132, %v1134
    %v1136 = vrot.slane %v1119, %v1135
    %v1138 = vunpack.c.l.s4 1983009808
    %v1139 = vunpack.c.0.s8 %v1138
    %v1140 = vlaneseq
    %v1141 = vshrl.u32 %v1140, 7
    %v1142 = vsub.s32 %v1139, %v1141
    %v1143 = vrot.slane %v1129, %v1142
    %v1144 = vcombine.high %v1136, %v1136
    %v1145 = vcombine.high %v1143, %v1143
    %v1146 = vcombine.high %v1120, %v1120
    %v1148 = vunpack.c.l.s4 1983009808
    %v1149 = vunpack.c.0.s8 %v1148
    %v1150 = vlaneseq
    %v1151 = vshrl.u32 %v1150, 7
    %v1152 = vsub.s32 %v1149, %v1151
    %v1153 = vrot.slane %v1120, %v1152
    %v1155 = vunpack.c.l.s4 1983009808
    %v1156 = vunpack.c.0.s8 %v1155
    %v1157 = vlaneseq
    %v1158 = vshrl.u32 %v1157, 7
    %v1159 = vsub.s32 %v1156, %v1158
    %v1160 = vrot.slane %v1146, %v1159
    %v1161 = vcombine.high %v1153, %v1153
    %v1162 = vcombine.high %v1160, %v1160
    %v1163 = vcombine.high %v1121, %v1121
    %v1165 = vunpack.c.l.s4 1983009808
    %v1166 = vunpack.c.0.s8 %v1165
    %v1167 = vlaneseq
    %v1168 = vshrl.u32 %v1167, 7
    %v1169 = vsub.s32 %v1166, %v1168
    %v1170 = vrot.slane %v1121, %v1169
    %v1172 = vunpack.c.l.s4 1983009808
    %v1173 = vunpack.c.0.s8 %v1172
    %v1174 = vlaneseq
    %v1175 = vshrl.u32 %v1174, 7
    %v1176 = vsub.s32 %v1173, %v1175
    %v1177 = vrot.slane %v1163, %v1176
    %v1178 = vcombine.high %v1170, %v1170
    %v1179 = vcombine.high %v1177, %v1177
    %v1180 = vcombine.high %v1122, %v1122
    %v1182 = vunpack.c.l.s4 1983009808
    %v1183 = vunpack.c.0.s8 %v1182
    %v1184 = vlaneseq
    %v1185 = vshrl.u32 %v1184, 7
    %v1186 = vsub.s32 %v1183, %v1185
    %v1187 = vrot.slane %v1122, %v1186
    %v1189 = vunpack.c.l.s4 1983009808
    %v1190 = vunpack.c.0.s8 %v1189
    %v1191 = vlaneseq
    %v1192 = vshrl.u32 %v1191, 7
    %v1193 = vsub.s32 %v1190, %v1192
    %v1194 = vrot.slane %v1180, %v1193
    %v1195 = vcombine.high %v1187, %v1187
    %v1196 = vcombine.high %v1194, %v1194
    %v1197 = vcombine.high %v1123, %v1123
    %v1199 = vunpack.c.l.s4 1983009808
    %v1200 = vunpack.c.0.s8 %v1199
    %v1201 = vlaneseq
    %v1202 = vshrl.u32 %v1201, 7
    %v1203 = vsub.s32 %v1200, %v1202
    %v1204 = vrot.slane %v1123, %v1203
    %v1206 = vunpack.c.l.s4 1983009808
    %v1207 = vunpack.c.0.s8 %v1206
    %v1208 = vlaneseq
    %v1209 = vshrl.u32 %v1208, 7
    %v1210 = vsub.s32 %v1207, %v1209
    %v1211 = vrot.slane %v1197, %v1210
    %v1212 = vcombine.high %v1204, %v1204
    %v1232 = vsel %vm344, %v1136, -inf
    %v1233 = vrot.slane %v1232, 4
    %v1234 = vmax.f32 %v1232, %v1233
    %v1235 = vrot.slane %v1234, 2
    %v1236 = vmax.f32 %v1234, %v1235
    %v1237 = vrot.slane %v1236, 1
    %v1238 = vmax.f32 %v1236, %v1237
    %v1239 = vsel %vm344, %v1144, -inf
    %v1240 = vrot.slane %v1239, 4
    %v1241 = vmax.f32 %v1239, %v1240
    %v1242 = vrot.slane %v1241, 2
    %v1243 = vmax.f32 %v1241, %v1242
    %v1244 = vrot.slane %v1243, 1
    %v1245 = vmax.f32 %v1243, %v1244
    %v1246 = vsel %vm344, %v1143, -inf
    %v1247 = vrot.slane %v1246, 4
    %v1248 = vmax.f32 %v1246, %v1247
    %v1249 = vrot.slane %v1248, 2
    %v1250 = vmax.f32 %v1248, %v1249
    %v1251 = vrot.slane %v1250, 1
    %v1252 = vmax.f32 %v1250, %v1251
    %v1253 = vsel %vm344, %v1145, -inf
    %v1254 = vrot.slane %v1253, 4
    %v1255 = vmax.f32 %v1253, %v1254
    %v1256 = vrot.slane %v1255, 2
    %v1257 = vmax.f32 %v1255, %v1256
    %v1258 = vrot.slane %v1257, 1
    %v1259 = vmax.f32 %v1257, %v1258
    %v1260 = vsel %vm344, %v1153, -inf
    %v1261 = vrot.slane %v1260, 4
    %v1262 = vmax.f32 %v1260, %v1261
    %v1263 = vrot.slane %v1262, 2
    %v1264 = vmax.f32 %v1262, %v1263
    %v1265 = vrot.slane %v1264, 1
    %v1266 = vmax.f32 %v1264, %v1265
    %v1267 = vsel %vm344, %v1161, -inf
    %v1268 = vrot.slane %v1267, 4
    %v1269 = vmax.f32 %v1267, %v1268
    %v1270 = vrot.slane %v1269, 2
    %v1271 = vmax.f32 %v1269, %v1270
    %v1272 = vrot.slane %v1271, 1
    %v1273 = vmax.f32 %v1271, %v1272
    %v1274 = vsel %vm344, %v1160, -inf
    %v1275 = vrot.slane %v1274, 4
    %v1276 = vmax.f32 %v1274, %v1275
    %v1277 = vrot.slane %v1276, 2
    %v1278 = vmax.f32 %v1276, %v1277
    %v1279 = vrot.slane %v1278, 1
    %v1280 = vmax.f32 %v1278, %v1279
    %v1281 = vsel %vm344, %v1162, -inf
    %v1282 = vrot.slane %v1281, 4
    %v1283 = vmax.f32 %v1281, %v1282
    %v1284 = vrot.slane %v1283, 2
    %v1285 = vmax.f32 %v1283, %v1284
    %v1286 = vrot.slane %v1285, 1
    %v1287 = vmax.f32 %v1285, %v1286
    %v1288 = vsel %vm344, %v1170, -inf
    %v1289 = vrot.slane %v1288, 4
    %v1290 = vmax.f32 %v1288, %v1289
    %v1291 = vrot.slane %v1290, 2
    %v1292 = vmax.f32 %v1290, %v1291
    %v1293 = vrot.slane %v1292, 1
    %v1294 = vmax.f32 %v1292, %v1293
    %v1295 = vsel %vm344, %v1178, -inf
    %v1296 = vrot.slane %v1295, 4
    %v1297 = vmax.f32 %v1295, %v1296
    %v1298 = vrot.slane %v1297, 2
    %v1299 = vmax.f32 %v1297, %v1298
    %v1300 = vrot.slane %v1299, 1
    %v1301 = vmax.f32 %v1299, %v1300
    %v1302 = vsel %vm344, %v1177, -inf
    %v1303 = vrot.slane %v1302, 4
    %v1304 = vmax.f32 %v1302, %v1303
    %v1305 = vrot.slane %v1304, 2
    %v1306 = vmax.f32 %v1304, %v1305
    %v1307 = vrot.slane %v1306, 1
    %v1308 = vmax.f32 %v1306, %v1307
    %v1309 = vsel %vm344, %v1179, -inf
    %v1310 = vrot.slane %v1309, 4
    %v1311 = vmax.f32 %v1309, %v1310
    %v1312 = vrot.slane %v1311, 2
    %v1313 = vmax.f32 %v1311, %v1312
    %v1314 = vrot.slane %v1313, 1
    %v1315 = vmax.f32 %v1313, %v1314
    %v1316 = vsel %vm344, %v1187, -inf
    %v1317 = vrot.slane %v1316, 4
    %v1318 = vmax.f32 %v1316, %v1317
    %v1319 = vrot.slane %v1318, 2
    %v1320 = vmax.f32 %v1318, %v1319
    %v1321 = vrot.slane %v1320, 1
    %v1322 = vmax.f32 %v1320, %v1321
    %v1323 = vsel %vm344, %v1195, -inf
    %v1324 = vrot.slane %v1323, 4
    %v1325 = vmax.f32 %v1323, %v1324
    %v1326 = vrot.slane %v1325, 2
    %v1327 = vmax.f32 %v1325, %v1326
    %v1328 = vrot.slane %v1327, 1
    %v1329 = vmax.f32 %v1327, %v1328
    %v1330 = vsel %vm344, %v1194, -inf
    %v1331 = vrot.slane %v1330, 4
    %v1332 = vmax.f32 %v1330, %v1331
    %v1333 = vrot.slane %v1332, 2
    %v1334 = vmax.f32 %v1332, %v1333
    %v1335 = vrot.slane %v1334, 1
    %v1336 = vmax.f32 %v1334, %v1335
    %v1337 = vsel %vm344, %v1196, -inf
    %v1338 = vrot.slane %v1337, 4
    %v1339 = vmax.f32 %v1337, %v1338
    %v1340 = vrot.slane %v1339, 2
    %v1341 = vmax.f32 %v1339, %v1340
    %v1342 = vrot.slane %v1341, 1
    %v1343 = vmax.f32 %v1341, %v1342
    %v1344 = vsel %vm344, %v1204, -inf
    %v1345 = vrot.slane %v1344, 4
    %v1346 = vmax.f32 %v1344, %v1345
    %v1347 = vrot.slane %v1346, 2
    %v1348 = vmax.f32 %v1346, %v1347
    %v1349 = vrot.slane %v1348, 1
    %v1350 = vmax.f32 %v1348, %v1349
    %v1351 = vsel %vm344, %v1212, -inf
    %v1352 = vrot.slane %v1351, 4
    %v1353 = vmax.f32 %v1351, %v1352
    %v1354 = vrot.slane %v1353, 2
    %v1355 = vmax.f32 %v1353, %v1354
    %v1356 = vrot.slane %v1355, 1
    %v1357 = vmax.f32 %v1355, %v1356
    %v1358 = vsel %vm344, %v1211, -inf
    %v1359 = vrot.slane %v1358, 4
    %v1360 = vmax.f32 %v1358, %v1359
    %v1361 = vrot.slane %v1360, 2
    %v1362 = vmax.f32 %v1360, %v1361
    %v1363 = vrot.slane %v1362, 1
    %v1364 = vmax.f32 %v1362, %v1363
    %v1382 = vsel %vm495, %v1245, %v1238
    %v1383 = vsel %vm497, %v1252, %v1382
    %v1384 = vsel %vm499, %v1259, %v1383
    %v1385 = vsel %vm501, %v1266, %v1384
    %v1386 = vsel %vm503, %v1273, %v1385
    %v1387 = vsel %vm505, %v1280, %v1386
    %v1388 = vsel %vm507, %v1287, %v1387
    %v1389 = vsel %vm495, %v1301, %v1294
    %v1390 = vsel %vm497, %v1308, %v1389
    %v1391 = vsel %vm499, %v1315, %v1390
    %v1392 = vsel %vm501, %v1322, %v1391
    %v1393 = vsel %vm503, %v1329, %v1392
    %v1394 = vsel %vm505, %v1336, %v1393
    %v1395 = vsel %vm507, %v1343, %v1394
    %v1400 = vsel %vm495, %v1252, %v1245
    %v1401 = vsel %vm497, %v1259, %v1400
    %v1402 = vsel %vm499, %v1266, %v1401
    %v1403 = vsel %vm501, %v1273, %v1402
    %v1404 = vsel %vm503, %v1280, %v1403
    %v1405 = vsel %vm505, %v1287, %v1404
    %v1406 = vsel %vm507, %v1294, %v1405
    %v1407 = vsel %vm495, %v1308, %v1301
    %v1408 = vsel %vm497, %v1315, %v1407
    %v1409 = vsel %vm499, %v1322, %v1408
    %v1410 = vsel %vm501, %v1329, %v1409
    %v1411 = vsel %vm503, %v1336, %v1410
    %v1412 = vsel %vm505, %v1343, %v1411
    %v1413 = vsel %vm507, %v1350, %v1412
    %1414 = vrot.lane.b32.xlu0 %v1406, 16
    %v1415 = vpop.permute.xlu0 %1414
    %1416 = vrot.lane.b32.xlu0 %v1413, 16
    %v1417 = vpop.permute.xlu0 %1416
    %1418 = vrot.lane.b32.xlu0 %v1357, 16
    %v1419 = vpop.permute.xlu0 %1418
    %v1424 = vsel %vm495, %v1259, %v1252
    %v1425 = vsel %vm497, %v1266, %v1424
    %v1426 = vsel %vm499, %v1273, %v1425
    %v1427 = vsel %vm501, %v1280, %v1426
    %v1428 = vsel %vm503, %v1287, %v1427
    %v1429 = vsel %vm505, %v1294, %v1428
    %v1430 = vsel %vm507, %v1301, %v1429
    %v1431 = vsel %vm495, %v1315, %v1308
    %v1432 = vsel %vm497, %v1322, %v1431
    %v1433 = vsel %vm499, %v1329, %v1432
    %v1434 = vsel %vm501, %v1336, %v1433
    %v1435 = vsel %vm503, %v1343, %v1434
    %v1436 = vsel %vm505, %v1350, %v1435
    %v1437 = vsel %vm507, %v1357, %v1436
    %1438 = vrot.lane.b32.xlu0 %v1430, 32
    %v1439 = vpop.permute.xlu0 %1438
    %1440 = vrot.lane.b32.xlu0 %v1437, 32
    %v1441 = vpop.permute.xlu0 %1440
    %1442 = vrot.lane.b32.xlu0 %v1364, 32
    %v1443 = vpop.permute.xlu0 %1442
    %v1447 = vsel %vm567, %v1388, %v1415
    %v1448 = vsel %vm567, %v1395, %v1417
    %v1449 = vsel %vm567, %v1350, %v1419
    %v1450 = vsel %vm571, %v1447, %v1439
    %v1451 = vsel %vm571, %v1448, %v1441
    %v1452 = vsel %vm571, %v1449, %v1443
    %v1454 = vsel %vm575, %v1450, 0
    %v1457 = vsel %vm575, %v1451, 0
    %v1460 = vsel %vm575, %v1452, 0
    %1462 = vmatprep.subr.mxu0 0.0
    %1463 = vmatpush1.msra.mxu0 0.0
    %1464 = vmatprep.subr.mxu0 0.0
    %1465 = vmatpush1.msra.mxu0 0.0
    %1466 = vmatprep.subr.mxu0 0.0
    %1467 = vmatpush1.msra.mxu0 0.0
    %1468 = vmatprep.subr.mxu0 0.0
    %1469 = vmatpush1.msra.mxu0 0.0
    %1470 = vmatprep.subr.mxu0 0.0
    %1471 = vmatpush1.msra.mxu0 0.0
    %1472 = vmatprep.subr.mxu0 0.0
    %1473 = vmatpush1.msra.mxu0 0.0
    %1474 = vmatprep.subr.mxu0 0.0
    %1475 = vmatpush1.msra.mxu0 0.0
    %1476 = vmatprep.subr.mxu0 0.0
    %1477 = vmatpush1.msra.mxu0 0.0
    %1478 = vmatprep.subr.mxu0 0.0
    %1479 = vmatpush1.msra.mxu0 0.0
    %1480 = vmatprep.subr.mxu0 0.0
    %1481 = vmatpush1.msra.mxu0 0.0
    %1482 = vmatprep.subr.mxu0 0.0
    %1483 = vmatpush1.msra.mxu0 %v24
    %1484 = vmatprep.subr.mxu0 0.0
    %1485 = vmatpush1.msra.mxu0 %v23
    %1486 = vmatprep.subr.mxu0 0.0
    %1487 = vmatpush1.msra.mxu0 %v22
    %1488 = vmatprep.subr.mxu0 0.0
    %1489 = vmatpush1.msra.mxu0 %v21
    %1490 = vmatprep.subr.mxu0 0.0
    %1491 = vmatpush1.msra.mxu0 %v20
    %1492 = vmatprep.subr.mxu0 0.0
    %1493 = vmatpush1.msra.mxu0 %v19
    %1494 = vmatprep.subr.mxu0 0.0
    %1495 = vmatpush2.msra.mxu0 0.0
    %1496 = vmatprep.subr.mxu0 0.0
    %1497 = vmatpush2.msra.mxu0 0.0
    %1498 = vmatprep.subr.mxu0 0.0
    %1499 = vmatpush2.msra.mxu0 0.0
    %1500 = vmatprep.subr.mxu0 0.0
    %1501 = vmatpush2.msra.mxu0 0.0
    %1502 = vmatprep.subr.mxu0 0.0
    %1503 = vmatpush2.msra.mxu0 0.0
    %1504 = vmatprep.subr.mxu0 0.0
    %1505 = vmatpush2.msra.mxu0 0.0
    %1506 = vmatprep.subr.mxu0 0.0
    %1507 = vmatpush2.msra.mxu0 0.0
    %1508 = vmatprep.subr.mxu0 0.0
    %1509 = vmatpush2.msra.mxu0 0.0
    %1510 = vmatprep.subr.mxu0 0.0
    %1511 = vmatpush2.msra.mxu0 0.0
    %1512 = vmatprep.subr.mxu0 0.0
    %1513 = vmatpush2.msra.mxu0 0.0
    %1514 = vmatprep.subr.mxu0 0.0
    %1515 = vmatpush2.msra.mxu0 0.0
    %1516 = vmatprep.subr.mxu0 0.0
    %1517 = vmatpush2.msra.mxu0 0.0
    %1518 = vmatprep.subr.mxu0 0.0
    %1519 = vmatpush2.msra.mxu0 0.0
    %1520 = vmatprep.subr.mxu0 0.0
    %1521 = vmatpush2.msra.mxu0 0.0
    %1522 = vmatprep.subr.mxu0 0.0
    %1523 = vmatpush2.msra.mxu0 0.0
    %1524 = vmatprep.subr.mxu0 0.0
    %1525 = vmatpush2.msra.mxu0 0.0
    %1526 = vmatprep.mubr.f32.mxu0 0.0
    %1527 = vmatmul.mubr.f32.gmra.mxu0 %v1454
    %v1528 = vpop.f32.mrf.mxu0
    %v1529 = vadd.f32 0.0, %v1528
    %v1530 = vpop.f32.mrf.mxu0
    %1531 = vmatprep.mubr.f32.mxu0 0.0
    %1532 = vmatmul.mubr.f32.gmra.mxu0 %v1457
    %v1533 = vpop.f32.mrf.mxu0
    %v1534 = vadd.f32 0.0, %v1533
    %v1535 = vpop.f32.mrf.mxu0
    %1536 = vmatprep.mubr.f32.mxu0 0.0
    %1537 = vmatmul.mubr.f32.gmra.mxu0 %v1460
    %v1538 = vpop.f32.mrf.mxu0
    %v1539 = vpop.f32.mrf.mxu0
    %1540 = vdwg.mxu0
    %v1541 = vmul.f32 %v1529, %v667
    %v1542 = vmul.f32 %v1534, %v667
    %v1543 = vadd.f32 %v1541, %v673
    %v1544 = vadd.f32 %v1542, %v673
    %v1545 = vmax.f32 %v1543, 0.0
    %v1546 = vmax.f32 %v1544, 0.0
    %v1549 = vcombine.high %v1545, %v1545
    %v1551 = vunpack.c.l.s4 1983009808
    %v1552 = vunpack.c.0.s8 %v1551
    %v1553 = vlaneseq
    %v1554 = vshrl.u32 %v1553, 7
    %v1555 = vsub.s32 %v1552, %v1554
    %v1556 = vrot.slane %v1545, %v1555
    %v1558 = vunpack.c.l.s4 1983009808
    %v1559 = vunpack.c.0.s8 %v1558
    %v1560 = vlaneseq
    %v1561 = vshrl.u32 %v1560, 7
    %v1562 = vsub.s32 %v1559, %v1561
    %v1563 = vrot.slane %v1549, %v1562
    %v1564 = vcombine.high %v1556, %v1556
    %v1565 = vcombine.high %v1563, %v1563
    %v1566 = vcombine.high %v1546, %v1546
    %v1568 = vunpack.c.l.s4 1983009808
    %v1569 = vunpack.c.0.s8 %v1568
    %v1570 = vlaneseq
    %v1571 = vshrl.u32 %v1570, 7
    %v1572 = vsub.s32 %v1569, %v1571
    %v1573 = vrot.slane %v1546, %v1572
    %v1575 = vunpack.c.l.s4 1983009808
    %v1576 = vunpack.c.0.s8 %v1575
    %v1577 = vlaneseq
    %v1578 = vshrl.u32 %v1577, 7
    %v1579 = vsub.s32 %v1576, %v1578
    %v1580 = vrot.slane %v1566, %v1579
    %v1581 = vcombine.high %v1573, %v1573
    %v1582 = vcombine.high %v1580, %v1580
    %v1591 = vsel %vm344, %v1556, -inf
    %v1592 = vrot.slane %v1591, 4
    %v1593 = vmax.f32 %v1591, %v1592
    %v1594 = vrot.slane %v1593, 2
    %v1595 = vmax.f32 %v1593, %v1594
    %v1596 = vrot.slane %v1595, 1
    %v1597 = vmax.f32 %v1595, %v1596
    %v1598 = vsel %vm344, %v1564, -inf
    %v1599 = vrot.slane %v1598, 4
    %v1600 = vmax.f32 %v1598, %v1599
    %v1601 = vrot.slane %v1600, 2
    %v1602 = vmax.f32 %v1600, %v1601
    %v1603 = vrot.slane %v1602, 1
    %v1604 = vmax.f32 %v1602, %v1603
    %v1605 = vsel %vm344, %v1563, -inf
    %v1606 = vrot.slane %v1605, 4
    %v1607 = vmax.f32 %v1605, %v1606
    %v1608 = vrot.slane %v1607, 2
    %v1609 = vmax.f32 %v1607, %v1608
    %v1610 = vrot.slane %v1609, 1
    %v1611 = vmax.f32 %v1609, %v1610
    %v1612 = vsel %vm344, %v1565, -inf
    %v1613 = vrot.slane %v1612, 4
    %v1614 = vmax.f32 %v1612, %v1613
    %v1615 = vrot.slane %v1614, 2
    %v1616 = vmax.f32 %v1614, %v1615
    %v1617 = vrot.slane %v1616, 1
    %v1618 = vmax.f32 %v1616, %v1617
    %v1619 = vsel %vm344, %v1573, -inf
    %v1620 = vrot.slane %v1619, 4
    %v1621 = vmax.f32 %v1619, %v1620
    %v1622 = vrot.slane %v1621, 2
    %v1623 = vmax.f32 %v1621, %v1622
    %v1624 = vrot.slane %v1623, 1
    %v1625 = vmax.f32 %v1623, %v1624
    %v1626 = vsel %vm344, %v1581, -inf
    %v1627 = vrot.slane %v1626, 4
    %v1628 = vmax.f32 %v1626, %v1627
    %v1629 = vrot.slane %v1628, 2
    %v1630 = vmax.f32 %v1628, %v1629
    %v1631 = vrot.slane %v1630, 1
    %v1632 = vmax.f32 %v1630, %v1631
    %v1633 = vsel %vm344, %v1580, -inf
    %v1634 = vrot.slane %v1633, 4
    %v1635 = vmax.f32 %v1633, %v1634
    %v1636 = vrot.slane %v1635, 2
    %v1637 = vmax.f32 %v1635, %v1636
    %v1638 = vrot.slane %v1637, 1
    %v1639 = vmax.f32 %v1637, %v1638
    %v1640 = vsel %vm344, %v1582, -inf
    %v1641 = vrot.slane %v1640, 4
    %v1642 = vmax.f32 %v1640, %v1641
    %v1643 = vrot.slane %v1642, 2
    %v1644 = vmax.f32 %v1642, %v1643
    %v1645 = vrot.slane %v1644, 1
    %v1646 = vmax.f32 %v1644, %v1645
    %v1653 = vsel %vm495, %v1604, %v1597
    %v1654 = vsel %vm497, %v1611, %v1653
    %v1655 = vsel %vm499, %v1618, %v1654
    %v1656 = vsel %vm501, %v1625, %v1655
    %v1657 = vsel %vm503, %v1632, %v1656
    %v1660 = vsel %vm495, %v1611, %v1604
    %v1661 = vsel %vm497, %v1618, %v1660
    %v1662 = vsel %vm499, %v1625, %v1661
    %v1663 = vsel %vm501, %v1632, %v1662
    %v1664 = vsel %vm503, %v1639, %v1663
    %1665 = vrot.lane.b32.xlu0 %v1664, 16
    %v1666 = vpop.permute.xlu0 %1665
    %v1669 = vsel %vm495, %v1618, %v1611
    %v1670 = vsel %vm497, %v1625, %v1669
    %v1671 = vsel %vm499, %v1632, %v1670
    %v1672 = vsel %vm501, %v1639, %v1671
    %v1673 = vsel %vm503, %v1646, %v1672
    %1674 = vrot.lane.b32.xlu0 %v1673, 32
    %v1675 = vpop.permute.xlu0 %1674
    %v1677 = vsel %vm567, %v1657, %v1666
    %v1678 = vsel %vm571, %v1677, %v1675
    %v1680 = vsel %vm575, %v1678, 0
    %1682 = vmatprep.subr.mxu0 0.0
    %1683 = vmatpush1.msra.mxu0 0.0
    %1684 = vmatprep.subr.mxu0 0.0
    %1685 = vmatpush1.msra.mxu0 0.0
    %1686 = vmatprep.subr.mxu0 0.0
    %1687 = vmatpush1.msra.mxu0 0.0
    %1688 = vmatprep.subr.mxu0 0.0
    %1689 = vmatpush1.msra.mxu0 0.0
    %1690 = vmatprep.subr.mxu0 0.0
    %1691 = vmatpush1.msra.mxu0 0.0
    %1692 = vmatprep.subr.mxu0 0.0
    %1693 = vmatpush1.msra.mxu0 0.0
    %1694 = vmatprep.subr.mxu0 0.0
    %1695 = vmatpush1.msra.mxu0 0.0
    %1696 = vmatprep.subr.mxu0 0.0
    %1697 = vmatpush1.msra.mxu0 0.0
    %1698 = vmatprep.subr.mxu0 0.0
    %1699 = vmatpush1.msra.mxu0 0.0
    %1700 = vmatprep.subr.mxu0 0.0
    %1701 = vmatpush1.msra.mxu0 0.0
    %1702 = vmatprep.subr.mxu0 0.0
    %1703 = vmatpush1.msra.mxu0 %v30
    %1704 = vmatprep.subr.mxu0 0.0
    %1705 = vmatpush1.msra.mxu0 %v29
    %1706 = vmatprep.subr.mxu0 0.0
    %1707 = vmatpush1.msra.mxu0 %v28
    %1708 = vmatprep.subr.mxu0 0.0
    %1709 = vmatpush1.msra.mxu0 %v27
    %1710 = vmatprep.subr.mxu0 0.0
    %1711 = vmatpush1.msra.mxu0 %v26
    %1712 = vmatprep.subr.mxu0 0.0
    %1713 = vmatpush1.msra.mxu0 %v25
    %1714 = vmatprep.subr.mxu0 0.0
    %1715 = vmatpush2.msra.mxu0 0.0
    %1716 = vmatprep.subr.mxu0 0.0
    %1717 = vmatpush2.msra.mxu0 0.0
    %1718 = vmatprep.subr.mxu0 0.0
    %1719 = vmatpush2.msra.mxu0 0.0
    %1720 = vmatprep.subr.mxu0 0.0
    %1721 = vmatpush2.msra.mxu0 0.0
    %1722 = vmatprep.subr.mxu0 0.0
    %1723 = vmatpush2.msra.mxu0 0.0
    %1724 = vmatprep.subr.mxu0 0.0
    %1725 = vmatpush2.msra.mxu0 0.0
    %1726 = vmatprep.subr.mxu0 0.0
    %1727 = vmatpush2.msra.mxu0 0.0
    %1728 = vmatprep.subr.mxu0 0.0
    %1729 = vmatpush2.msra.mxu0 0.0
    %1730 = vmatprep.subr.mxu0 0.0
    %1731 = vmatpush2.msra.mxu0 0.0
    %1732 = vmatprep.subr.mxu0 0.0
    %1733 = vmatpush2.msra.mxu0 0.0
    %1734 = vmatprep.subr.mxu0 0.0
    %1735 = vmatpush2.msra.mxu0 0.0
    %1736 = vmatprep.subr.mxu0 0.0
    %1737 = vmatpush2.msra.mxu0 0.0
    %1738 = vmatprep.subr.mxu0 0.0
    %1739 = vmatpush2.msra.mxu0 0.0
    %1740 = vmatprep.subr.mxu0 0.0
    %1741 = vmatpush2.msra.mxu0 0.0
    %1742 = vmatprep.subr.mxu0 0.0
    %1743 = vmatpush2.msra.mxu0 0.0
    %1744 = vmatprep.subr.mxu0 0.0
    %1745 = vmatpush2.msra.mxu0 0.0
    %1746 = vmatprep.mubr.f32.mxu0 0.0
    %1747 = vmatmul.mubr.f32.gmra.mxu0 %v1680
    %v1748 = vpop.f32.mrf.mxu0
    %v1749 = vadd.f32 0.0, %v1748
    %v1750 = vpop.f32.mrf.mxu0
    %1751 = vdwg.mxu0
    %v1752 = vmul.f32 %v1749, %v886
    %v1753 = vadd.f32 %v1752, %v891
    %v1754 = vmax.f32 %v1753, 0.0
    %v1756 = vcombine.high %v1754, %v1754
    %v1758 = vunpack.c.l.s4 1983009808
    %v1759 = vunpack.c.0.s8 %v1758
    %v1760 = vlaneseq
    %v1761 = vshrl.u32 %v1760, 7
    %v1762 = vsub.s32 %v1759, %v1761
    %v1763 = vrot.slane %v1754, %v1762
    %v1765 = vunpack.c.l.s4 1983009808
    %v1766 = vunpack.c.0.s8 %v1765
    %v1767 = vlaneseq
    %v1768 = vshrl.u32 %v1767, 7
    %v1769 = vsub.s32 %v1766, %v1768
    %v1770 = vrot.slane %v1756, %v1769
    %v1771 = vcombine.high %v1763, %v1763
    %v1775 = vsel %vm344, %v1763, -inf
    %v1776 = vrot.slane %v1775, 4
    %v1777 = vmax.f32 %v1775, %v1776
    %v1778 = vrot.slane %v1777, 2
    %v1779 = vmax.f32 %v1777, %v1778
    %v1780 = vrot.slane %v1779, 1
    %v1781 = vmax.f32 %v1779, %v1780
    %v1782 = vsel %vm344, %v1771, -inf
    %v1783 = vrot.slane %v1782, 4
    %v1784 = vmax.f32 %v1782, %v1783
    %v1785 = vrot.slane %v1784, 2
    %v1786 = vmax.f32 %v1784, %v1785
    %v1787 = vrot.slane %v1786, 1
    %v1788 = vmax.f32 %v1786, %v1787
    %v1789 = vsel %vm344, %v1770, -inf
    %v1790 = vrot.slane %v1789, 4
    %v1791 = vmax.f32 %v1789, %v1790
    %v1792 = vrot.slane %v1791, 2
    %v1793 = vmax.f32 %v1791, %v1792
    %v1794 = vrot.slane %v1793, 1
    %v1795 = vmax.f32 %v1793, %v1794
    %vm1796 = vcmask 1040384
    %v1797 = vsel %vm1796, %v920, %v1781
    %vm1798 = vcmask 1041408
    %v1799 = vsel %vm1798, %v1797, %v927
    %vm1800 = vcmask 1042432
    %v1801 = vsel %vm1800, %v1799, %v1788
    %vm1802 = vcmask 1043456
    %v1803 = vsel %vm1802, %v1801, %v934
    %vm1804 = vcmask 1044480
    %v1805 = vsel %vm1804, %v1803, %v1795
    %v1806 = vld [vmem:[%s2] sm:$0xff]
    %v1807 = vld [vmem:[%s2 + $0x8] sm:$0xff]
    %v1808 = vld [vmem:[%s2 + $0x10] sm:$0xff]
    %v1809 = vld [vmem:[%s2 + $0x18] sm:$0xff]
    %v1810 = vld [vmem:[%s2 + $0x20] sm:$0xff]
    %v1811 = vld [vmem:[%s2 + $0x28] sm:$0xff]
    %v1812 = vld [vmem:[%s2 + $0x30] sm:$0xff]
    %v1813 = vld [vmem:[%s2 + $0x38] sm:$0xff]
    %v1814 = vld [vmem:[%s2 + $0x40] sm:$0xff]
    %v1815 = vld [vmem:[%s2 + $0x48] sm:$0xff]
    %v1816 = vld [vmem:[%s2 + $0x50] sm:$0xff]
    %v1817 = vld [vmem:[%s2 + $0x58] sm:$0xff]
    %v1818 = vld [vmem:[%s2 + $0x60] sm:$0xff]
    %v1819 = vld [vmem:[%s2 + $0x68] sm:$0xff]
    %v1820 = vld [vmem:[%s2 + $0x70] sm:$0xff]
    %v1821 = vld [vmem:[%s2 + $0x78] sm:$0xff]
    %v1822 = vld [vmem:[%s2 + $0x80] sm:$0xff]
    %v1823 = vld [vmem:[%s2 + $0x88] sm:$0xff]
    %v1824 = vld [vmem:[%s2 + $0x90] sm:$0xff]
    %v1825 = vld [vmem:[%s2 + $0x98] sm:$0xff]
    %v1826 = vld [vmem:[%s2 + $0xa0] sm:$0xff]
    %v1827 = vld [vmem:[%s2 + $0xa8] sm:$0xff]
    %v1828 = vld [vmem:[%s2 + $0xb0] sm:$0xff]
    %v1829 = vld [vmem:[%s2 + $0xb8] sm:$0xff]
    %v1830 = vld [vmem:[%s2 + $0xc0] sm:$0xff]
    %v1831 = vld [vmem:[%s2 + $0xc8] sm:$0xff]
    %v1832 = vld [vmem:[%s2 + $0xd0] sm:$0xff]
    %v1833 = vld [vmem:[%s2 + $0xd8] sm:$0xff]
    %v1834 = vld [vmem:[%s2 + $0xe0] sm:$0xff]
    %v1835 = vld [vmem:[%s2 + $0xe8] sm:$0xff]
    %v1836 = vld [vmem:[%s2 + $0xf0] sm:$0xff]
    %v1837 = vld [vmem:[%s2 + $0xf8] sm:$0xff]
    %v1838 = vld [vmem:[%s2 + $0x100] sm:$0xff]
    %v1839 = vld [vmem:[%s2 + $0x108] sm:$0xff]
    %v1840 = vld [vmem:[%s2 + $0x110] sm:$0xff]
    %v1841 = vld [vmem:[%s2 + $0x118] sm:$0xff]
    %v1842 = vld [vmem:[%s2 + $0x120] sm:$0xff]
    %v1843 = vld [vmem:[%s2 + $0x128] sm:$0xf]
    %v1844 = vlaneseq
    %v1845 = vshrl.u32 %v1844, 7
    %v1846 = vsub.s32 0, %v1845
    %v1847 = vrot.slane %v1842, %v1846
    %v1849 = vsel %vm567, %v1805, 0
    %1851 = vmatprep.subr.mxu0 0.0
    %1852 = vmatpush1.msra.mxu0 0.0
    %1853 = vmatprep.subr.mxu0 0.0
    %1854 = vmatpush1.msra.mxu0 0.0
    %1855 = vmatprep.subr.mxu0 0.0
    %1856 = vmatpush1.msra.mxu0 0.0
    %1857 = vmatprep.subr.mxu0 0.0
    %1858 = vmatpush1.msra.mxu0 0.0
    %1859 = vmatprep.subr.mxu0 0.0
    %1860 = vmatpush1.msra.mxu0 0.0
    %1861 = vmatprep.subr.mxu0 0.0
    %1862 = vmatpush1.msra.mxu0 0.0
    %1863 = vmatprep.subr.mxu0 0.0
    %1864 = vmatpush1.msra.mxu0 0.0
    %1865 = vmatprep.subr.mxu0 0.0
    %1866 = vmatpush1.msra.mxu0 0.0
    %1867 = vmatprep.subr.mxu0 0.0
    %1868 = vmatpush1.msra.mxu0 0.0
    %1869 = vmatprep.subr.mxu0 0.0
    %1870 = vmatpush1.msra.mxu0 0.0
    %1871 = vmatprep.subr.mxu0 0.0
    %1872 = vmatpush1.msra.mxu0 0.0
    %1873 = vmatprep.subr.mxu0 0.0
    %1874 = vmatpush1.msra.mxu0 0.0
    %1875 = vmatprep.subr.mxu0 0.0
    %1876 = vmatpush1.msra.mxu0 0.0
    %1877 = vmatprep.subr.mxu0 0.0
    %1878 = vmatpush1.msra.mxu0 0.0
    %1879 = vmatprep.subr.mxu0 0.0
    %1880 = vmatpush1.msra.mxu0 %v1807
    %1881 = vmatprep.subr.mxu0 0.0
    %1882 = vmatpush1.msra.mxu0 %v1806
    %1883 = vmatprep.subr.mxu0 0.0
    %1884 = vmatpush2.msra.mxu0 0.0
    %1885 = vmatprep.subr.mxu0 0.0
    %1886 = vmatpush2.msra.mxu0 0.0
    %1887 = vmatprep.subr.mxu0 0.0
    %1888 = vmatpush2.msra.mxu0 0.0
    %1889 = vmatprep.subr.mxu0 0.0
    %1890 = vmatpush2.msra.mxu0 0.0
    %1891 = vmatprep.subr.mxu0 0.0
    %1892 = vmatpush2.msra.mxu0 0.0
    %1893 = vmatprep.subr.mxu0 0.0
    %1894 = vmatpush2.msra.mxu0 0.0
    %1895 = vmatprep.subr.mxu0 0.0
    %1896 = vmatpush2.msra.mxu0 0.0
    %1897 = vmatprep.subr.mxu0 0.0
    %1898 = vmatpush2.msra.mxu0 0.0
    %1899 = vmatprep.subr.mxu0 0.0
    %1900 = vmatpush2.msra.mxu0 0.0
    %1901 = vmatprep.subr.mxu0 0.0
    %1902 = vmatpush2.msra.mxu0 0.0
    %1903 = vmatprep.subr.mxu0 0.0
    %1904 = vmatpush2.msra.mxu0 0.0
    %1905 = vmatprep.subr.mxu0 0.0
    %1906 = vmatpush2.msra.mxu0 0.0
    %1907 = vmatprep.subr.mxu0 0.0
    %1908 = vmatpush2.msra.mxu0 0.0
    %1909 = vmatprep.subr.mxu0 0.0
    %1910 = vmatpush2.msra.mxu0 0.0
    %1911 = vmatprep.subr.mxu0 0.0
    %1912 = vmatpush2.msra.mxu0 0.0
    %1913 = vmatprep.subr.mxu0 0.0
    %1914 = vmatpush2.msra.mxu0 0.0
    %1915 = vmatprep.mubr.f32.mxu0 0.0
    %1916 = vmatmul.mubr.f32.gmra.mxu0 %v1849
    %v1917 = vpop.f32.mrf.mxu0
    %v1918 = vadd.f32 %v1847, %v1917
    %v1919 = vpop.f32.mrf.mxu0
    %1920 = vdwg.mxu0
    %v1921 = vlaneseq
    %v1922 = vshrl.u32 %v1921, 7
    %v1923 = vsub.s32 1, %v1922
    %v1924 = vrot.slane %v1842, %v1923
    %1925 = vmatprep.subr.mxu0 0.0
    %1926 = vmatpush1.msra.mxu0 0.0
    %1927 = vmatprep.subr.mxu0 0.0
    %1928 = vmatpush1.msra.mxu0 0.0
    %1929 = vmatprep.subr.mxu0 0.0
    %1930 = vmatpush1.msra.mxu0 0.0
    %1931 = vmatprep.subr.mxu0 0.0
    %1932 = vmatpush1.msra.mxu0 0.0
    %1933 = vmatprep.subr.mxu0 0.0
    %1934 = vmatpush1.msra.mxu0 0.0
    %1935 = vmatprep.subr.mxu0 0.0
    %1936 = vmatpush1.msra.mxu0 0.0
    %1937 = vmatprep.subr.mxu0 0.0
    %1938 = vmatpush1.msra.mxu0 0.0
    %1939 = vmatprep.subr.mxu0 0.0
    %1940 = vmatpush1.msra.mxu0 0.0
    %1941 = vmatprep.subr.mxu0 0.0
    %1942 = vmatpush1.msra.mxu0 0.0
    %1943 = vmatprep.subr.mxu0 0.0
    %1944 = vmatpush1.msra.mxu0 0.0
    %1945 = vmatprep.subr.mxu0 0.0
    %1946 = vmatpush1.msra.mxu0 0.0
    %1947 = vmatprep.subr.mxu0 0.0
    %1948 = vmatpush1.msra.mxu0 0.0
    %1949 = vmatprep.subr.mxu0 0.0
    %1950 = vmatpush1.msra.mxu0 0.0
    %1951 = vmatprep.subr.mxu0 0.0
    %1952 = vmatpush1.msra.mxu0 0.0
    %1953 = vmatprep.subr.mxu0 0.0
    %1954 = vmatpush1.msra.mxu0 %v1809
    %1955 = vmatprep.subr.mxu0 0.0
    %1956 = vmatpush1.msra.mxu0 %v1808
    %1957 = vmatprep.subr.mxu0 0.0
    %1958 = vmatpush2.msra.mxu0 0.0
    %1959 = vmatprep.subr.mxu0 0.0
    %1960 = vmatpush2.msra.mxu0 0.0
    %1961 = vmatprep.subr.mxu0 0.0
    %1962 = vmatpush2.msra.mxu0 0.0
    %1963 = vmatprep.subr.mxu0 0.0
    %1964 = vmatpush2.msra.mxu0 0.0
    %1965 = vmatprep.subr.mxu0 0.0
    %1966 = vmatpush2.msra.mxu0 0.0
    %1967 = vmatprep.subr.mxu0 0.0
    %1968 = vmatpush2.msra.mxu0 0.0
    %1969 = vmatprep.subr.mxu0 0.0
    %1970 = vmatpush2.msra.mxu0 0.0
    %1971 = vmatprep.subr.mxu0 0.0
    %1972 = vmatpush2.msra.mxu0 0.0
    %1973 = vmatprep.subr.mxu0 0.0
    %1974 = vmatpush2.msra.mxu0 0.0
    %1975 = vmatprep.subr.mxu0 0.0
    %1976 = vmatpush2.msra.mxu0 0.0
    %1977 = vmatprep.subr.mxu0 0.0
    %1978 = vmatpush2.msra.mxu0 0.0
    %1979 = vmatprep.subr.mxu0 0.0
    %1980 = vmatpush2.msra.mxu0 0.0
    %1981 = vmatprep.subr.mxu0 0.0
    %1982 = vmatpush2.msra.mxu0 0.0
    %1983 = vmatprep.subr.mxu0 0.0
    %1984 = vmatpush2.msra.mxu0 0.0
    %1985 = vmatprep.subr.mxu0 0.0
    %1986 = vmatpush2.msra.mxu0 0.0
    %1987 = vmatprep.subr.mxu0 0.0
    %1988 = vmatpush2.msra.mxu0 0.0
    %1989 = vmatprep.mubr.f32.mxu0 0.0
    %1990 = vmatmul.mubr.f32.gmra.mxu0 %v1849
    %v1991 = vpop.f32.mrf.mxu0
    %v1992 = vadd.f32 %v1924, %v1991
    %v1993 = vpop.f32.mrf.mxu0
    %1994 = vdwg.mxu0
    %v1995 = vlaneseq
    %v1996 = vshrl.u32 %v1995, 7
    %v1997 = vsub.s32 2, %v1996
    %v1998 = vrot.slane %v1842, %v1997
    %1999 = vmatprep.subr.mxu0 0.0
    %2000 = vmatpush1.msra.mxu0 0.0
    %2001 = vmatprep.subr.mxu0 0.0
    %2002 = vmatpush1.msra.mxu0 0.0
    %2003 = vmatprep.subr.mxu0 0.0
    %2004 = vmatpush1.msra.mxu0 0.0
    %2005 = vmatprep.subr.mxu0 0.0
    %2006 = vmatpush1.msra.mxu0 0.0
    %2007 = vmatprep.subr.mxu0 0.0
    %2008 = vmatpush1.msra.mxu0 0.0
    %2009 = vmatprep.subr.mxu0 0.0
    %2010 = vmatpush1.msra.mxu0 0.0
    %2011 = vmatprep.subr.mxu0 0.0
    %2012 = vmatpush1.msra.mxu0 0.0
    %2013 = vmatprep.subr.mxu0 0.0
    %2014 = vmatpush1.msra.mxu0 0.0
    %2015 = vmatprep.subr.mxu0 0.0
    %2016 = vmatpush1.msra.mxu0 0.0
    %2017 = vmatprep.subr.mxu0 0.0
    %2018 = vmatpush1.msra.mxu0 0.0
    %2019 = vmatprep.subr.mxu0 0.0
    %2020 = vmatpush1.msra.mxu0 0.0
    %2021 = vmatprep.subr.mxu0 0.0
    %2022 = vmatpush1.msra.mxu0 0.0
    %2023 = vmatprep.subr.mxu0 0.0
    %2024 = vmatpush1.msra.mxu0 0.0
    %2025 = vmatprep.subr.mxu0 0.0
    %2026 = vmatpush1.msra.mxu0 0.0
    %2027 = vmatprep.subr.mxu0 0.0
    %2028 = vmatpush1.msra.mxu0 %v1811
    %2029 = vmatprep.subr.mxu0 0.0
    %2030 = vmatpush1.msra.mxu0 %v1810
    %2031 = vmatprep.subr.mxu0 0.0
    %2032 = vmatpush2.msra.mxu0 0.0
    %2033 = vmatprep.subr.mxu0 0.0
    %2034 = vmatpush2.msra.mxu0 0.0
    %2035 = vmatprep.subr.mxu0 0.0
    %2036 = vmatpush2.msra.mxu0 0.0
    %2037 = vmatprep.subr.mxu0 0.0
    %2038 = vmatpush2.msra.mxu0 0.0
    %2039 = vmatprep.subr.mxu0 0.0
    %2040 = vmatpush2.msra.mxu0 0.0
    %2041 = vmatprep.subr.mxu0 0.0
    %2042 = vmatpush2.msra.mxu0 0.0
    %2043 = vmatprep.subr.mxu0 0.0
    %2044 = vmatpush2.msra.mxu0 0.0
    %2045 = vmatprep.subr.mxu0 0.0
    %2046 = vmatpush2.msra.mxu0 0.0
    %2047 = vmatprep.subr.mxu0 0.0
    %2048 = vmatpush2.msra.mxu0 0.0
    %2049 = vmatprep.subr.mxu0 0.0
    %2050 = vmatpush2.msra.mxu0 0.0
    %2051 = vmatprep.subr.mxu0 0.0
    %2052 = vmatpush2.msra.mxu0 0.0
    %2053 = vmatprep.subr.mxu0 0.0
    %2054 = vmatpush2.msra.mxu0 0.0
    %2055 = vmatprep.subr.mxu0 0.0
    %2056 = vmatpush2.msra.mxu0 0.0
    %2057 = vmatprep.subr.mxu0 0.0
    %2058 = vmatpush2.msra.mxu0 0.0
    %2059 = vmatprep.subr.mxu0 0.0
    %2060 = vmatpush2.msra.mxu0 0.0
    %2061 = vmatprep.subr.mxu0 0.0
    %2062 = vmatpush2.msra.mxu0 0.0
    %2063 = vmatprep.mubr.f32.mxu0 0.0
    %2064 = vmatmul.mubr.f32.gmra.mxu0 %v1849
    %v2065 = vpop.f32.mrf.mxu0
    %v2066 = vadd.f32 %v1998, %v2065
    %v2067 = vpop.f32.mrf.mxu0
    %2068 = vdwg.mxu0
    %v2069 = vlaneseq
    %v2070 = vshrl.u32 %v2069, 7
    %v2071 = vsub.s32 3, %v2070
    %v2072 = vrot.slane %v1842, %v2071
    %v2073 = vadd.f32 %v1918, %v2072
    %v2074 = vxor.u32 %v2073, 2147483648
    %v2075 = vmul.f32 %v2074, 1.442695
    %v2076 = vpow.pop %v2075
    %v2077 = vadd.f32 %v2076, 1.0
    %v2078 = vrcp.pop %v2077
    %v2079 = vmul.f32 1.0, %v2078
    %v2080 = vlaneseq
    %v2081 = vshrl.u32 %v2080, 7
    %v2082 = vsub.s32 4, %v2081
    %v2083 = vrot.slane %v1842, %v2082
    %v2084 = vadd.f32 %v1992, %v2083
    %v2085 = vxor.u32 %v2084, 2147483648
    %v2086 = vmul.f32 %v2085, 1.442695
    %v2087 = vpow.pop %v2086
    %v2088 = vadd.f32 %v2087, 1.0
    %v2089 = vrcp.pop %v2088
    %v2090 = vmul.f32 1.0, %v2089
    %v2091 = vlaneseq
    %v2092 = vshrl.u32 %v2091, 7
    %v2093 = vsub.s32 5, %v2092
    %v2094 = vrot.slane %v1842, %v2093
    %v2095 = vmul.f32 %v2079, %v2094
    %v2096 = vadd.f32 %v2066, %v2095
    %v2097 = vtanh.pop %v2096
    %v2098 = vsub.f32 1.0, %v2090
    %v2099 = vmul.f32 %v2098, %v2097
    %vm2100 = vcmask 523264
    %v2102 = vsel %vm2100, %v2099, 0
    %2104 = vmatprep.subr.mxu0 0.0
    %2105 = vmatpush1.msra.mxu0 0.0
    %2106 = vmatprep.subr.mxu0 0.0
    %2107 = vmatpush1.msra.mxu0 0.0
    %2108 = vmatprep.subr.mxu0 0.0
    %2109 = vmatpush1.msra.mxu0 0.0
    %2110 = vmatprep.subr.mxu0 0.0
    %2111 = vmatpush1.msra.mxu0 0.0
    %2112 = vmatprep.subr.mxu0 0.0
    %2113 = vmatpush1.msra.mxu0 0.0
    %2114 = vmatprep.subr.mxu0 0.0
    %2115 = vmatpush1.msra.mxu0 0.0
    %2116 = vmatprep.subr.mxu0 0.0
    %2117 = vmatpush1.msra.mxu0 0.0
    %2118 = vmatprep.subr.mxu0 0.0
    %2119 = vmatpush1.msra.mxu0 0.0
    %2120 = vmatprep.subr.mxu0 0.0
    %2121 = vmatpush1.msra.mxu0 %v1819
    %2122 = vmatprep.subr.mxu0 0.0
    %2123 = vmatpush1.msra.mxu0 %v1818
    %2124 = vmatprep.subr.mxu0 0.0
    %2125 = vmatpush1.msra.mxu0 %v1817
    %2126 = vmatprep.subr.mxu0 0.0
    %2127 = vmatpush1.msra.mxu0 %v1816
    %2128 = vmatprep.subr.mxu0 0.0
    %2129 = vmatpush1.msra.mxu0 %v1815
    %2130 = vmatprep.subr.mxu0 0.0
    %2131 = vmatpush1.msra.mxu0 %v1814
    %2132 = vmatprep.subr.mxu0 0.0
    %2133 = vmatpush1.msra.mxu0 %v1813
    %2134 = vmatprep.subr.mxu0 0.0
    %2135 = vmatpush1.msra.mxu0 %v1812
    %2136 = vmatprep.subr.mxu0 0.0
    %2137 = vmatpush2.msra.mxu0 0.0
    %2138 = vmatprep.subr.mxu0 0.0
    %2139 = vmatpush2.msra.mxu0 0.0
    %2140 = vmatprep.subr.mxu0 0.0
    %2141 = vmatpush2.msra.mxu0 0.0
    %2142 = vmatprep.subr.mxu0 0.0
    %2143 = vmatpush2.msra.mxu0 0.0
    %2144 = vmatprep.subr.mxu0 0.0
    %2145 = vmatpush2.msra.mxu0 0.0
    %2146 = vmatprep.subr.mxu0 0.0
    %2147 = vmatpush2.msra.mxu0 0.0
    %2148 = vmatprep.subr.mxu0 0.0
    %2149 = vmatpush2.msra.mxu0 0.0
    %2150 = vmatprep.subr.mxu0 0.0
    %2151 = vmatpush2.msra.mxu0 0.0
    %2152 = vmatprep.subr.mxu0 0.0
    %2153 = vmatpush2.msra.mxu0 0.0
    %2154 = vmatprep.subr.mxu0 0.0
    %2155 = vmatpush2.msra.mxu0 0.0
    %2156 = vmatprep.subr.mxu0 0.0
    %2157 = vmatpush2.msra.mxu0 0.0
    %2158 = vmatprep.subr.mxu0 0.0
    %2159 = vmatpush2.msra.mxu0 0.0
    %2160 = vmatprep.subr.mxu0 0.0
    %2161 = vmatpush2.msra.mxu0 0.0
    %2162 = vmatprep.subr.mxu0 0.0
    %2163 = vmatpush2.msra.mxu0 0.0
    %2164 = vmatprep.subr.mxu0 0.0
    %2165 = vmatpush2.msra.mxu0 0.0
    %2166 = vmatprep.subr.mxu0 0.0
    %2167 = vmatpush2.msra.mxu0 0.0
    %2168 = vmatprep.mubr.f32.mxu0 0.0
    %2169 = vmatmul.mubr.f32.gmra.mxu0 %v2102
    %v2170 = vpop.f32.mrf.mxu0
    %v2171 = vadd.f32 %v2072, %v2170
    %v2172 = vpop.f32.mrf.mxu0
    %2173 = vdwg.mxu0
    %2174 = vmatprep.subr.mxu0 0.0
    %2175 = vmatpush1.msra.mxu0 0.0
    %2176 = vmatprep.subr.mxu0 0.0
    %2177 = vmatpush1.msra.mxu0 0.0
    %2178 = vmatprep.subr.mxu0 0.0
    %2179 = vmatpush1.msra.mxu0 0.0
    %2180 = vmatprep.subr.mxu0 0.0
    %2181 = vmatpush1.msra.mxu0 0.0
    %2182 = vmatprep.subr.mxu0 0.0
    %2183 = vmatpush1.msra.mxu0 0.0
    %2184 = vmatprep.subr.mxu0 0.0
    %2185 = vmatpush1.msra.mxu0 0.0
    %2186 = vmatprep.subr.mxu0 0.0
    %2187 = vmatpush1.msra.mxu0 0.0
    %2188 = vmatprep.subr.mxu0 0.0
    %2189 = vmatpush1.msra.mxu0 0.0
    %2190 = vmatprep.subr.mxu0 0.0
    %2191 = vmatpush1.msra.mxu0 %v1827
    %2192 = vmatprep.subr.mxu0 0.0
    %2193 = vmatpush1.msra.mxu0 %v1826
    %2194 = vmatprep.subr.mxu0 0.0
    %2195 = vmatpush1.msra.mxu0 %v1825
    %2196 = vmatprep.subr.mxu0 0.0
    %2197 = vmatpush1.msra.mxu0 %v1824
    %2198 = vmatprep.subr.mxu0 0.0
    %2199 = vmatpush1.msra.mxu0 %v1823
    %2200 = vmatprep.subr.mxu0 0.0
    %2201 = vmatpush1.msra.mxu0 %v1822
    %2202 = vmatprep.subr.mxu0 0.0
    %2203 = vmatpush1.msra.mxu0 %v1821
    %2204 = vmatprep.subr.mxu0 0.0
    %2205 = vmatpush1.msra.mxu0 %v1820
    %2206 = vmatprep.subr.mxu0 0.0
    %2207 = vmatpush2.msra.mxu0 0.0
    %2208 = vmatprep.subr.mxu0 0.0
    %2209 = vmatpush2.msra.mxu0 0.0
    %2210 = vmatprep.subr.mxu0 0.0
    %2211 = vmatpush2.msra.mxu0 0.0
    %2212 = vmatprep.subr.mxu0 0.0
    %2213 = vmatpush2.msra.mxu0 0.0
    %2214 = vmatprep.subr.mxu0 0.0
    %2215 = vmatpush2.msra.mxu0 0.0
    %2216 = vmatprep.subr.mxu0 0.0
    %2217 = vmatpush2.msra.mxu0 0.0
    %2218 = vmatprep.subr.mxu0 0.0
    %2219 = vmatpush2.msra.mxu0 0.0
    %2220 = vmatprep.subr.mxu0 0.0
    %2221 = vmatpush2.msra.mxu0 0.0
    %2222 = vmatprep.subr.mxu0 0.0
    %2223 = vmatpush2.msra.mxu0 0.0
    %2224 = vmatprep.subr.mxu0 0.0
    %2225 = vmatpush2.msra.mxu0 0.0
    %2226 = vmatprep.subr.mxu0 0.0
    %2227 = vmatpush2.msra.mxu0 0.0
    %2228 = vmatprep.subr.mxu0 0.0
    %2229 = vmatpush2.msra.mxu0 0.0
    %2230 = vmatprep.subr.mxu0 0.0
    %2231 = vmatpush2.msra.mxu0 0.0
    %2232 = vmatprep.subr.mxu0 0.0
    %2233 = vmatpush2.msra.mxu0 0.0
    %2234 = vmatprep.subr.mxu0 0.0
    %2235 = vmatpush2.msra.mxu0 0.0
    %2236 = vmatprep.subr.mxu0 0.0
    %2237 = vmatpush2.msra.mxu0 0.0
    %2238 = vmatprep.mubr.f32.mxu0 0.0
    %2239 = vmatmul.mubr.f32.gmra.mxu0 %v2102
    %v2240 = vpop.f32.mrf.mxu0
    %v2241 = vadd.f32 %v2083, %v2240
    %v2242 = vpop.f32.mrf.mxu0
    %2243 = vdwg.mxu0
    %2244 = vmatprep.subr.mxu0 0.0
    %2245 = vmatpush1.msra.mxu0 0.0
    %2246 = vmatprep.subr.mxu0 0.0
    %2247 = vmatpush1.msra.mxu0 0.0
    %2248 = vmatprep.subr.mxu0 0.0
    %2249 = vmatpush1.msra.mxu0 0.0
    %2250 = vmatprep.subr.mxu0 0.0
    %2251 = vmatpush1.msra.mxu0 0.0
    %2252 = vmatprep.subr.mxu0 0.0
    %2253 = vmatpush1.msra.mxu0 0.0
    %2254 = vmatprep.subr.mxu0 0.0
    %2255 = vmatpush1.msra.mxu0 0.0
    %2256 = vmatprep.subr.mxu0 0.0
    %2257 = vmatpush1.msra.mxu0 0.0
    %2258 = vmatprep.subr.mxu0 0.0
    %2259 = vmatpush1.msra.mxu0 0.0
    %2260 = vmatprep.subr.mxu0 0.0
    %2261 = vmatpush1.msra.mxu0 %v1835
    %2262 = vmatprep.subr.mxu0 0.0
    %2263 = vmatpush1.msra.mxu0 %v1834
    %2264 = vmatprep.subr.mxu0 0.0
    %2265 = vmatpush1.msra.mxu0 %v1833
    %2266 = vmatprep.subr.mxu0 0.0
    %2267 = vmatpush1.msra.mxu0 %v1832
    %2268 = vmatprep.subr.mxu0 0.0
    %2269 = vmatpush1.msra.mxu0 %v1831
    %2270 = vmatprep.subr.mxu0 0.0
    %2271 = vmatpush1.msra.mxu0 %v1830
    %2272 = vmatprep.subr.mxu0 0.0
    %2273 = vmatpush1.msra.mxu0 %v1829
    %2274 = vmatprep.subr.mxu0 0.0
    %2275 = vmatpush1.msra.mxu0 %v1828
    %2276 = vmatprep.subr.mxu0 0.0
    %2277 = vmatpush2.msra.mxu0 0.0
    %2278 = vmatprep.subr.mxu0 0.0
    %2279 = vmatpush2.msra.mxu0 0.0
    %2280 = vmatprep.subr.mxu0 0.0
    %2281 = vmatpush2.msra.mxu0 0.0
    %2282 = vmatprep.subr.mxu0 0.0
    %2283 = vmatpush2.msra.mxu0 0.0
    %2284 = vmatprep.subr.mxu0 0.0
    %2285 = vmatpush2.msra.mxu0 0.0
    %2286 = vmatprep.subr.mxu0 0.0
    %2287 = vmatpush2.msra.mxu0 0.0
    %2288 = vmatprep.subr.mxu0 0.0
    %2289 = vmatpush2.msra.mxu0 0.0
    %2290 = vmatprep.subr.mxu0 0.0
    %2291 = vmatpush2.msra.mxu0 0.0
    %2292 = vmatprep.subr.mxu0 0.0
    %2293 = vmatpush2.msra.mxu0 0.0
    %2294 = vmatprep.subr.mxu0 0.0
    %2295 = vmatpush2.msra.mxu0 0.0
    %2296 = vmatprep.subr.mxu0 0.0
    %2297 = vmatpush2.msra.mxu0 0.0
    %2298 = vmatprep.subr.mxu0 0.0
    %2299 = vmatpush2.msra.mxu0 0.0
    %2300 = vmatprep.subr.mxu0 0.0
    %2301 = vmatpush2.msra.mxu0 0.0
    %2302 = vmatprep.subr.mxu0 0.0
    %2303 = vmatpush2.msra.mxu0 0.0
    %2304 = vmatprep.subr.mxu0 0.0
    %2305 = vmatpush2.msra.mxu0 0.0
    %2306 = vmatprep.subr.mxu0 0.0
    %2307 = vmatpush2.msra.mxu0 0.0
    %2308 = vmatprep.mubr.f32.mxu0 0.0
    %2309 = vmatmul.mubr.f32.gmra.mxu0 %v2102
    %v2310 = vpop.f32.mrf.mxu0
    %v2311 = vadd.f32 %v2094, %v2310
    %v2312 = vpop.f32.mrf.mxu0
    %2313 = vdwg.mxu0
    %v2315 = vrot.slane %v2171, 6
    %v2317 = vadd.f32 %v1918, %v2315
    %v2318 = vxor.u32 %v2317, 2147483648
    %v2319 = vmul.f32 %v2318, 1.442695
    %v2320 = vpow.pop %v2319
    %v2321 = vadd.f32 %v2320, 1.0
    %v2322 = vrcp.pop %v2321
    %v2323 = vmul.f32 1.0, %v2322
    %v2325 = vrot.slane %v2241, 6
    %v2327 = vadd.f32 %v1992, %v2325
    %v2328 = vxor.u32 %v2327, 2147483648
    %v2329 = vmul.f32 %v2328, 1.442695
    %v2330 = vpow.pop %v2329
    %v2331 = vadd.f32 %v2330, 1.0
    %v2332 = vrcp.pop %v2331
    %v2333 = vmul.f32 1.0, %v2332
    %v2335 = vrot.slane %v2311, 6
    %v2337 = vmul.f32 %v2323, %v2335
    %v2338 = vadd.f32 %v2066, %v2337
    %v2339 = vtanh.pop %v2338
    %v2340 = vsub.f32 1.0, %v2333
    %v2341 = vmul.f32 %v2340, %v2339
    %v2342 = vrot.slane %v2099, 6
    %v2344 = vmul.f32 %v2333, %v2342
    %v2345 = vadd.f32 %v2341, %v2344
    %v2347 = vrot.slane %v2345, 2
    %v2348 = vsel %vm2100, %v2347, 0
    %2350 = vmatprep.subr.mxu0 0.0
    %2351 = vmatpush1.msra.mxu0 0.0
    %2352 = vmatprep.subr.mxu0 0.0
    %2353 = vmatpush1.msra.mxu0 0.0
    %2354 = vmatprep.subr.mxu0 0.0
    %2355 = vmatpush1.msra.mxu0 0.0
    %2356 = vmatprep.subr.mxu0 0.0
    %2357 = vmatpush1.msra.mxu0 0.0
    %2358 = vmatprep.subr.mxu0 0.0
    %2359 = vmatpush1.msra.mxu0 0.0
    %2360 = vmatprep.subr.mxu0 0.0
    %2361 = vmatpush1.msra.mxu0 0.0
    %2362 = vmatprep.subr.mxu0 0.0
    %2363 = vmatpush1.msra.mxu0 0.0
    %2364 = vmatprep.subr.mxu0 0.0
    %2365 = vmatpush1.msra.mxu0 0.0
    %2366 = vmatprep.subr.mxu0 0.0
    %2367 = vmatpush1.msra.mxu0 %v1819
    %2368 = vmatprep.subr.mxu0 0.0
    %2369 = vmatpush1.msra.mxu0 %v1818
    %2370 = vmatprep.subr.mxu0 0.0
    %2371 = vmatpush1.msra.mxu0 %v1817
    %2372 = vmatprep.subr.mxu0 0.0
    %2373 = vmatpush1.msra.mxu0 %v1816
    %2374 = vmatprep.subr.mxu0 0.0
    %2375 = vmatpush1.msra.mxu0 %v1815
    %2376 = vmatprep.subr.mxu0 0.0
    %2377 = vmatpush1.msra.mxu0 %v1814
    %2378 = vmatprep.subr.mxu0 0.0
    %2379 = vmatpush1.msra.mxu0 %v1813
    %2380 = vmatprep.subr.mxu0 0.0
    %2381 = vmatpush1.msra.mxu0 %v1812
    %2382 = vmatprep.subr.mxu0 0.0
    %2383 = vmatpush2.msra.mxu0 0.0
    %2384 = vmatprep.subr.mxu0 0.0
    %2385 = vmatpush2.msra.mxu0 0.0
    %2386 = vmatprep.subr.mxu0 0.0
    %2387 = vmatpush2.msra.mxu0 0.0
    %2388 = vmatprep.subr.mxu0 0.0
    %2389 = vmatpush2.msra.mxu0 0.0
    %2390 = vmatprep.subr.mxu0 0.0
    %2391 = vmatpush2.msra.mxu0 0.0
    %2392 = vmatprep.subr.mxu0 0.0
    %2393 = vmatpush2.msra.mxu0 0.0
    %2394 = vmatprep.subr.mxu0 0.0
    %2395 = vmatpush2.msra.mxu0 0.0
    %2396 = vmatprep.subr.mxu0 0.0
    %2397 = vmatpush2.msra.mxu0 0.0
    %2398 = vmatprep.subr.mxu0 0.0
    %2399 = vmatpush2.msra.mxu0 0.0
    %2400 = vmatprep.subr.mxu0 0.0
    %2401 = vmatpush2.msra.mxu0 0.0
    %2402 = vmatprep.subr.mxu0 0.0
    %2403 = vmatpush2.msra.mxu0 0.0
    %2404 = vmatprep.subr.mxu0 0.0
    %2405 = vmatpush2.msra.mxu0 0.0
    %2406 = vmatprep.subr.mxu0 0.0
    %2407 = vmatpush2.msra.mxu0 0.0
    %2408 = vmatprep.subr.mxu0 0.0
    %2409 = vmatpush2.msra.mxu0 0.0
    %2410 = vmatprep.subr.mxu0 0.0
    %2411 = vmatpush2.msra.mxu0 0.0
    %2412 = vmatprep.subr.mxu0 0.0
    %2413 = vmatpush2.msra.mxu0 0.0
    %2414 = vmatprep.mubr.f32.mxu0 0.0
    %2415 = vmatmul.mubr.f32.gmra.mxu0 %v2348
    %v2416 = vpop.f32.mrf.mxu0
    %v2417 = vadd.f32 %v2072, %v2416
    %v2418 = vpop.f32.mrf.mxu0
    %2419 = vdwg.mxu0
    %2420 = vmatprep.subr.mxu0 0.0
    %2421 = vmatpush1.msra.mxu0 0.0
    %2422 = vmatprep.subr.mxu0 0.0
    %2423 = vmatpush1.msra.mxu0 0.0
    %2424 = vmatprep.subr.mxu0 0.0
    %2425 = vmatpush1.msra.mxu0 0.0
    %2426 = vmatprep.subr.mxu0 0.0
    %2427 = vmatpush1.msra.mxu0 0.0
    %2428 = vmatprep.subr.mxu0 0.0
    %2429 = vmatpush1.msra.mxu0 0.0
    %2430 = vmatprep.subr.mxu0 0.0
    %2431 = vmatpush1.msra.mxu0 0.0
    %2432 = vmatprep.subr.mxu0 0.0
    %2433 = vmatpush1.msra.mxu0 0.0
    %2434 = vmatprep.subr.mxu0 0.0
    %2435 = vmatpush1.msra.mxu0 0.0
    %2436 = vmatprep.subr.mxu0 0.0
    %2437 = vmatpush1.msra.mxu0 %v1827
    %2438 = vmatprep.subr.mxu0 0.0
    %2439 = vmatpush1.msra.mxu0 %v1826
    %2440 = vmatprep.subr.mxu0 0.0
    %2441 = vmatpush1.msra.mxu0 %v1825
    %2442 = vmatprep.subr.mxu0 0.0
    %2443 = vmatpush1.msra.mxu0 %v1824
    %2444 = vmatprep.subr.mxu0 0.0
    %2445 = vmatpush1.msra.mxu0 %v1823
    %2446 = vmatprep.subr.mxu0 0.0
    %2447 = vmatpush1.msra.mxu0 %v1822
    %2448 = vmatprep.subr.mxu0 0.0
    %2449 = vmatpush1.msra.mxu0 %v1821
    %2450 = vmatprep.subr.mxu0 0.0
    %2451 = vmatpush1.msra.mxu0 %v1820
    %2452 = vmatprep.subr.mxu0 0.0
    %2453 = vmatpush2.msra.mxu0 0.0
    %2454 = vmatprep.subr.mxu0 0.0
    %2455 = vmatpush2.msra.mxu0 0.0
    %2456 = vmatprep.subr.mxu0 0.0
    %2457 = vmatpush2.msra.mxu0 0.0
    %2458 = vmatprep.subr.mxu0 0.0
    %2459 = vmatpush2.msra.mxu0 0.0
    %2460 = vmatprep.subr.mxu0 0.0
    %2461 = vmatpush2.msra.mxu0 0.0
    %2462 = vmatprep.subr.mxu0 0.0
    %2463 = vmatpush2.msra.mxu0 0.0
    %2464 = vmatprep.subr.mxu0 0.0
    %2465 = vmatpush2.msra.mxu0 0.0
    %2466 = vmatprep.subr.mxu0 0.0
    %2467 = vmatpush2.msra.mxu0 0.0
    %2468 = vmatprep.subr.mxu0 0.0
    %2469 = vmatpush2.msra.mxu0 0.0
    %2470 = vmatprep.subr.mxu0 0.0
    %2471 = vmatpush2.msra.mxu0 0.0
    %2472 = vmatprep.subr.mxu0 0.0
    %2473 = vmatpush2.msra.mxu0 0.0
    %2474 = vmatprep.subr.mxu0 0.0
    %2475 = vmatpush2.msra.mxu0 0.0
    %2476 = vmatprep.subr.mxu0 0.0
    %2477 = vmatpush2.msra.mxu0 0.0
    %2478 = vmatprep.subr.mxu0 0.0
    %2479 = vmatpush2.msra.mxu0 0.0
    %2480 = vmatprep.subr.mxu0 0.0
    %2481 = vmatpush2.msra.mxu0 0.0
    %2482 = vmatprep.subr.mxu0 0.0
    %2483 = vmatpush2.msra.mxu0 0.0
    %2484 = vmatprep.mubr.f32.mxu0 0.0
    %2485 = vmatmul.mubr.f32.gmra.mxu0 %v2348
    %v2486 = vpop.f32.mrf.mxu0
    %v2487 = vadd.f32 %v2083, %v2486
    %v2488 = vpop.f32.mrf.mxu0
    %2489 = vdwg.mxu0
    %2490 = vmatprep.subr.mxu0 0.0
    %2491 = vmatpush1.msra.mxu0 0.0
    %2492 = vmatprep.subr.mxu0 0.0
    %2493 = vmatpush1.msra.mxu0 0.0
    %2494 = vmatprep.subr.mxu0 0.0
    %2495 = vmatpush1.msra.mxu0 0.0
    %2496 = vmatprep.subr.mxu0 0.0
    %2497 = vmatpush1.msra.mxu0 0.0
    %2498 = vmatprep.subr.mxu0 0.0
    %2499 = vmatpush1.msra.mxu0 0.0
    %2500 = vmatprep.subr.mxu0 0.0
    %2501 = vmatpush1.msra.mxu0 0.0
    %2502 = vmatprep.subr.mxu0 0.0
    %2503 = vmatpush1.msra.mxu0 0.0
    %2504 = vmatprep.subr.mxu0 0.0
    %2505 = vmatpush1.msra.mxu0 0.0
    %2506 = vmatprep.subr.mxu0 0.0
    %2507 = vmatpush1.msra.mxu0 %v1835
    %2508 = vmatprep.subr.mxu0 0.0
    %2509 = vmatpush1.msra.mxu0 %v1834
    %2510 = vmatprep.subr.mxu0 0.0
    %2511 = vmatpush1.msra.mxu0 %v1833
    %2512 = vmatprep.subr.mxu0 0.0
    %2513 = vmatpush1.msra.mxu0 %v1832
    %2514 = vmatprep.subr.mxu0 0.0
    %2515 = vmatpush1.msra.mxu0 %v1831
    %2516 = vmatprep.subr.mxu0 0.0
    %2517 = vmatpush1.msra.mxu0 %v1830
    %2518 = vmatprep.subr.mxu0 0.0
    %2519 = vmatpush1.msra.mxu0 %v1829
    %2520 = vmatprep.subr.mxu0 0.0
    %2521 = vmatpush1.msra.mxu0 %v1828
    %2522 = vmatprep.subr.mxu0 0.0
    %2523 = vmatpush2.msra.mxu0 0.0
    %2524 = vmatprep.subr.mxu0 0.0
    %2525 = vmatpush2.msra.mxu0 0.0
    %2526 = vmatprep.subr.mxu0 0.0
    %2527 = vmatpush2.msra.mxu0 0.0
    %2528 = vmatprep.subr.mxu0 0.0
    %2529 = vmatpush2.msra.mxu0 0.0
    %2530 = vmatprep.subr.mxu0 0.0
    %2531 = vmatpush2.msra.mxu0 0.0
    %2532 = vmatprep.subr.mxu0 0.0
    %2533 = vmatpush2.msra.mxu0 0.0
    %2534 = vmatprep.subr.mxu0 0.0
    %2535 = vmatpush2.msra.mxu0 0.0
    %2536 = vmatprep.subr.mxu0 0.0
    %2537 = vmatpush2.msra.mxu0 0.0
    %2538 = vmatprep.subr.mxu0 0.0
    %2539 = vmatpush2.msra.mxu0 0.0
    %2540 = vmatprep.subr.mxu0 0.0
    %2541 = vmatpush2.msra.mxu0 0.0
    %2542 = vmatprep.subr.mxu0 0.0
    %2543 = vmatpush2.msra.mxu0 0.0
    %2544 = vmatprep.subr.mxu0 0.0
    %2545 = vmatpush2.msra.mxu0 0.0
    %2546 = vmatprep.subr.mxu0 0.0
    %2547 = vmatpush2.msra.mxu0 0.0
    %2548 = vmatprep.subr.mxu0 0.0
    %2549 = vmatpush2.msra.mxu0 0.0
    %2550 = vmatprep.subr.mxu0 0.0
    %2551 = vmatpush2.msra.mxu0 0.0
    %2552 = vmatprep.subr.mxu0 0.0
    %2553 = vmatpush2.msra.mxu0 0.0
    %2554 = vmatprep.mubr.f32.mxu0 0.0
    %2555 = vmatmul.mubr.f32.gmra.mxu0 %v2348
    %v2556 = vpop.f32.mrf.mxu0
    %v2557 = vadd.f32 %v2094, %v2556
    %v2558 = vpop.f32.mrf.mxu0
    %2559 = vdwg.mxu0
    %v2561 = vrot.slane %v2417, 4
    %v2563 = vadd.f32 %v1918, %v2561
    %v2564 = vxor.u32 %v2563, 2147483648
    %v2565 = vmul.f32 %v2564, 1.442695
    %v2566 = vpow.pop %v2565
    %v2567 = vadd.f32 %v2566, 1.0
    %v2568 = vrcp.pop %v2567
    %v2569 = vmul.f32 1.0, %v2568
    %v2571 = vrot.slane %v2487, 4
    %v2573 = vadd.f32 %v1992, %v2571
    %v2574 = vxor.u32 %v2573, 2147483648
    %v2575 = vmul.f32 %v2574, 1.442695
    %v2576 = vpow.pop %v2575
    %v2577 = vadd.f32 %v2576, 1.0
    %v2578 = vrcp.pop %v2577
    %v2579 = vmul.f32 1.0, %v2578
    %v2581 = vrot.slane %v2557, 4
    %v2583 = vmul.f32 %v2569, %v2581
    %v2584 = vadd.f32 %v2066, %v2583
    %v2585 = vtanh.pop %v2584
    %v2586 = vsub.f32 1.0, %v2579
    %v2587 = vmul.f32 %v2586, %v2585
    %v2588 = vrot.slane %v2345, 6
    %v2590 = vmul.f32 %v2579, %v2588
    %v2591 = vadd.f32 %v2587, %v2590
    %v2592 = vlaneseq
    %v2593 = vshrl.u32 %v2592, 7
    %v2594 = vsub.s32 6, %v2593
    %v2595 = vrot.slane %v1842, %v2594
    %v2596 = vrot.slane %v1805, 4
    %v2597 = vsel %vm567, %v2596, 0
    %2599 = vmatprep.subr.mxu0 0.0
    %2600 = vmatpush1.msra.mxu0 0.0
    %2601 = vmatprep.subr.mxu0 0.0
    %2602 = vmatpush1.msra.mxu0 0.0
    %2603 = vmatprep.subr.mxu0 0.0
    %2604 = vmatpush1.msra.mxu0 0.0
    %2605 = vmatprep.subr.mxu0 0.0
    %2606 = vmatpush1.msra.mxu0 0.0
    %2607 = vmatprep.subr.mxu0 0.0
    %2608 = vmatpush1.msra.mxu0 0.0
    %2609 = vmatprep.subr.mxu0 0.0
    %2610 = vmatpush1.msra.mxu0 0.0
    %2611 = vmatprep.subr.mxu0 0.0
    %2612 = vmatpush1.msra.mxu0 0.0
    %2613 = vmatprep.subr.mxu0 0.0
    %2614 = vmatpush1.msra.mxu0 0.0
    %2615 = vmatprep.subr.mxu0 0.0
    %2616 = vmatpush1.msra.mxu0 0.0
    %2617 = vmatprep.subr.mxu0 0.0
    %2618 = vmatpush1.msra.mxu0 0.0
    %2619 = vmatprep.subr.mxu0 0.0
    %2620 = vmatpush1.msra.mxu0 0.0
    %2621 = vmatprep.subr.mxu0 0.0
    %2622 = vmatpush1.msra.mxu0 0.0
    %2623 = vmatprep.subr.mxu0 0.0
    %2624 = vmatpush1.msra.mxu0 0.0
    %2625 = vmatprep.subr.mxu0 0.0
    %2626 = vmatpush1.msra.mxu0 0.0
    %2627 = vmatprep.subr.mxu0 0.0
    %2628 = vmatpush1.msra.mxu0 %v1837
    %2629 = vmatprep.subr.mxu0 0.0
    %2630 = vmatpush1.msra.mxu0 %v1836
    %2631 = vmatprep.subr.mxu0 0.0
    %2632 = vmatpush2.msra.mxu0 0.0
    %2633 = vmatprep.subr.mxu0 0.0
    %2634 = vmatpush2.msra.mxu0 0.0
    %2635 = vmatprep.subr.mxu0 0.0
    %2636 = vmatpush2.msra.mxu0 0.0
    %2637 = vmatprep.subr.mxu0 0.0
    %2638 = vmatpush2.msra.mxu0 0.0
    %2639 = vmatprep.subr.mxu0 0.0
    %2640 = vmatpush2.msra.mxu0 0.0
    %2641 = vmatprep.subr.mxu0 0.0
    %2642 = vmatpush2.msra.mxu0 0.0
    %2643 = vmatprep.subr.mxu0 0.0
    %2644 = vmatpush2.msra.mxu0 0.0
    %2645 = vmatprep.subr.mxu0 0.0
    %2646 = vmatpush2.msra.mxu0 0.0
    %2647 = vmatprep.subr.mxu0 0.0
    %2648 = vmatpush2.msra.mxu0 0.0
    %2649 = vmatprep.subr.mxu0 0.0
    %2650 = vmatpush2.msra.mxu0 0.0
    %2651 = vmatprep.subr.mxu0 0.0
    %2652 = vmatpush2.msra.mxu0 0.0
    %2653 = vmatprep.subr.mxu0 0.0
    %2654 = vmatpush2.msra.mxu0 0.0
    %2655 = vmatprep.subr.mxu0 0.0
    %2656 = vmatpush2.msra.mxu0 0.0
    %2657 = vmatprep.subr.mxu0 0.0
    %2658 = vmatpush2.msra.mxu0 0.0
    %2659 = vmatprep.subr.mxu0 0.0
    %2660 = vmatpush2.msra.mxu0 0.0
    %2661 = vmatprep.subr.mxu0 0.0
    %2662 = vmatpush2.msra.mxu0 0.0
    %2663 = vmatprep.mubr.f32.mxu0 0.0
    %2664 = vmatmul.mubr.f32.gmra.mxu0 %v2597
    %v2665 = vpop.f32.mrf.mxu0
    %v2666 = vadd.f32 %v2595, %v2665
    %v2667 = vpop.f32.mrf.mxu0
    %2668 = vdwg.mxu0
    %v2669 = vlaneseq
    %v2670 = vshrl.u32 %v2669, 7
    %v2671 = vsub.s32 1, %v2670
    %v2672 = vrot.slane %v1843, %v2671
    %v2673 = vadd.f32 %v2666, %v2672
    %v2674 = vxor.u32 %v2673, 2147483648
    %v2675 = vmul.f32 %v2674, 1.442695
    %v2676 = vpow.pop %v2675
    %v2677 = vadd.f32 %v2676, 1.0
    %v2678 = vrcp.pop %v2677
    %v2679 = vmul.f32 1.0, %v2678
    %v2680 = vlaneseq
    %v2681 = vshrl.u32 %v2680, 7
    %v2682 = vsub.s32 7, %v2681
    %v2683 = vrot.slane %v1842, %v2682
    %2684 = vmatprep.subr.mxu0 0.0
    %2685 = vmatpush1.msra.mxu0 0.0
    %2686 = vmatprep.subr.mxu0 0.0
    %2687 = vmatpush1.msra.mxu0 0.0
    %2688 = vmatprep.subr.mxu0 0.0
    %2689 = vmatpush1.msra.mxu0 0.0
    %2690 = vmatprep.subr.mxu0 0.0
    %2691 = vmatpush1.msra.mxu0 0.0
    %2692 = vmatprep.subr.mxu0 0.0
    %2693 = vmatpush1.msra.mxu0 0.0
    %2694 = vmatprep.subr.mxu0 0.0
    %2695 = vmatpush1.msra.mxu0 0.0
    %2696 = vmatprep.subr.mxu0 0.0
    %2697 = vmatpush1.msra.mxu0 0.0
    %2698 = vmatprep.subr.mxu0 0.0
    %2699 = vmatpush1.msra.mxu0 0.0
    %2700 = vmatprep.subr.mxu0 0.0
    %2701 = vmatpush1.msra.mxu0 0.0
    %2702 = vmatprep.subr.mxu0 0.0
    %2703 = vmatpush1.msra.mxu0 0.0
    %2704 = vmatprep.subr.mxu0 0.0
    %2705 = vmatpush1.msra.mxu0 0.0
    %2706 = vmatprep.subr.mxu0 0.0
    %2707 = vmatpush1.msra.mxu0 0.0
    %2708 = vmatprep.subr.mxu0 0.0
    %2709 = vmatpush1.msra.mxu0 0.0
    %2710 = vmatprep.subr.mxu0 0.0
    %2711 = vmatpush1.msra.mxu0 0.0
    %2712 = vmatprep.subr.mxu0 0.0
    %2713 = vmatpush1.msra.mxu0 %v1839
    %2714 = vmatprep.subr.mxu0 0.0
    %2715 = vmatpush1.msra.mxu0 %v1838
    %2716 = vmatprep.subr.mxu0 0.0
    %2717 = vmatpush2.msra.mxu0 0.0
    %2718 = vmatprep.subr.mxu0 0.0
    %2719 = vmatpush2.msra.mxu0 0.0
    %2720 = vmatprep.subr.mxu0 0.0
    %2721 = vmatpush2.msra.mxu0 0.0
    %2722 = vmatprep.subr.mxu0 0.0
    %2723 = vmatpush2.msra.mxu0 0.0
    %2724 = vmatprep.subr.mxu0 0.0
    %2725 = vmatpush2.msra.mxu0 0.0
    %2726 = vmatprep.subr.mxu0 0.0
    %2727 = vmatpush2.msra.mxu0 0.0
    %2728 = vmatprep.subr.mxu0 0.0
    %2729 = vmatpush2.msra.mxu0 0.0
    %2730 = vmatprep.subr.mxu0 0.0
    %2731 = vmatpush2.msra.mxu0 0.0
    %2732 = vmatprep.subr.mxu0 0.0
    %2733 = vmatpush2.msra.mxu0 0.0
    %2734 = vmatprep.subr.mxu0 0.0
    %2735 = vmatpush2.msra.mxu0 0.0
    %2736 = vmatprep.subr.mxu0 0.0
    %2737 = vmatpush2.msra.mxu0 0.0
    %2738 = vmatprep.subr.mxu0 0.0
    %2739 = vmatpush2.msra.mxu0 0.0
    %2740 = vmatprep.subr.mxu0 0.0
    %2741 = vmatpush2.msra.mxu0 0.0
    %2742 = vmatprep.subr.mxu0 0.0
    %2743 = vmatpush2.msra.mxu0 0.0
    %2744 = vmatprep.subr.mxu0 0.0
    %2745 = vmatpush2.msra.mxu0 0.0
    %2746 = vmatprep.subr.mxu0 0.0
    %2747 = vmatpush2.msra.mxu0 0.0
    %2748 = vmatprep.mubr.f32.mxu0 0.0
    %2749 = vmatmul.mubr.f32.gmra.mxu0 %v2597
    %v2750 = vpop.f32.mrf.mxu0
    %v2751 = vadd.f32 %v2683, %v2750
    %v2752 = vpop.f32.mrf.mxu0
    %2753 = vdwg.mxu0
    %v2754 = vlaneseq
    %v2755 = vshrl.u32 %v2754, 7
    %v2756 = vsub.s32 2, %v2755
    %v2757 = vrot.slane %v1843, %v2756
    %v2758 = vadd.f32 %v2751, %v2757
    %v2759 = vxor.u32 %v2758, 2147483648
    %v2760 = vmul.f32 %v2759, 1.442695
    %v2761 = vpow.pop %v2760
    %v2762 = vadd.f32 %v2761, 1.0
    %v2763 = vrcp.pop %v2762
    %v2764 = vmul.f32 1.0, %v2763
    %v2765 = vlaneseq
    %v2766 = vshrl.u32 %v2765, 7
    %v2767 = vsub.s32 0, %v2766
    %v2768 = vrot.slane %v1843, %v2767
    %2769 = vmatprep.subr.mxu0 0.0
    %2770 = vmatpush1.msra.mxu0 0.0
    %2771 = vmatprep.subr.mxu0 0.0
    %2772 = vmatpush1.msra.mxu0 0.0
    %2773 = vmatprep.subr.mxu0 0.0
    %2774 = vmatpush1.msra.mxu0 0.0
    %2775 = vmatprep.subr.mxu0 0.0
    %2776 = vmatpush1.msra.mxu0 0.0
    %2777 = vmatprep.subr.mxu0 0.0
    %2778 = vmatpush1.msra.mxu0 0.0
    %2779 = vmatprep.subr.mxu0 0.0
    %2780 = vmatpush1.msra.mxu0 0.0
    %2781 = vmatprep.subr.mxu0 0.0
    %2782 = vmatpush1.msra.mxu0 0.0
    %2783 = vmatprep.subr.mxu0 0.0
    %2784 = vmatpush1.msra.mxu0 0.0
    %2785 = vmatprep.subr.mxu0 0.0
    %2786 = vmatpush1.msra.mxu0 0.0
    %2787 = vmatprep.subr.mxu0 0.0
    %2788 = vmatpush1.msra.mxu0 0.0
    %2789 = vmatprep.subr.mxu0 0.0
    %2790 = vmatpush1.msra.mxu0 0.0
    %2791 = vmatprep.subr.mxu0 0.0
    %2792 = vmatpush1.msra.mxu0 0.0
    %2793 = vmatprep.subr.mxu0 0.0
    %2794 = vmatpush1.msra.mxu0 0.0
    %2795 = vmatprep.subr.mxu0 0.0
    %2796 = vmatpush1.msra.mxu0 0.0
    %2797 = vmatprep.subr.mxu0 0.0
    %2798 = vmatpush1.msra.mxu0 %v1841
    %2799 = vmatprep.subr.mxu0 0.0
    %2800 = vmatpush1.msra.mxu0 %v1840
    %2801 = vmatprep.subr.mxu0 0.0
    %2802 = vmatpush2.msra.mxu0 0.0
    %2803 = vmatprep.subr.mxu0 0.0
    %2804 = vmatpush2.msra.mxu0 0.0
    %2805 = vmatprep.subr.mxu0 0.0
    %2806 = vmatpush2.msra.mxu0 0.0
    %2807 = vmatprep.subr.mxu0 0.0
    %2808 = vmatpush2.msra.mxu0 0.0
    %2809 = vmatprep.subr.mxu0 0.0
    %2810 = vmatpush2.msra.mxu0 0.0
    %2811 = vmatprep.subr.mxu0 0.0
    %2812 = vmatpush2.msra.mxu0 0.0
    %2813 = vmatprep.subr.mxu0 0.0
    %2814 = vmatpush2.msra.mxu0 0.0
    %2815 = vmatprep.subr.mxu0 0.0
    %2816 = vmatpush2.msra.mxu0 0.0
    %2817 = vmatprep.subr.mxu0 0.0
    %2818 = vmatpush2.msra.mxu0 0.0
    %2819 = vmatprep.subr.mxu0 0.0
    %2820 = vmatpush2.msra.mxu0 0.0
    %2821 = vmatprep.subr.mxu0 0.0
    %2822 = vmatpush2.msra.mxu0 0.0
    %2823 = vmatprep.subr.mxu0 0.0
    %2824 = vmatpush2.msra.mxu0 0.0
    %2825 = vmatprep.subr.mxu0 0.0
    %2826 = vmatpush2.msra.mxu0 0.0
    %2827 = vmatprep.subr.mxu0 0.0
    %2828 = vmatpush2.msra.mxu0 0.0
    %2829 = vmatprep.subr.mxu0 0.0
    %2830 = vmatpush2.msra.mxu0 0.0
    %2831 = vmatprep.subr.mxu0 0.0
    %2832 = vmatpush2.msra.mxu0 0.0
    %2833 = vmatprep.mubr.f32.mxu0 0.0
    %2834 = vmatmul.mubr.f32.gmra.mxu0 %v2597
    %v2835 = vpop.f32.mrf.mxu0
    %v2836 = vadd.f32 %v2768, %v2835
    %v2837 = vpop.f32.mrf.mxu0
    %2838 = vdwg.mxu0
    %v2839 = vlaneseq
    %v2840 = vshrl.u32 %v2839, 7
    %v2841 = vsub.s32 3, %v2840
    %v2842 = vrot.slane %v1843, %v2841
    %v2843 = vmul.f32 %v2679, %v2842
    %v2844 = vadd.f32 %v2836, %v2843
    %v2845 = vtanh.pop %v2844
    %v2846 = vsub.f32 1.0, %v2764
    %v2847 = vmul.f32 %v2846, %v2845
    %v2848 = vld [vmem:[%s3] sm:$0xff]
    %v2849 = vld [vmem:[%s3 + $0x8] sm:$0xff]
    %v2850 = vld [vmem:[%s3 + $0x10] sm:$0xff]
    %v2851 = vld [vmem:[%s3 + $0x18] sm:$0xff]
    %v2852 = vld [vmem:[%s3 + $0x20] sm:$0xff]
    %v2853 = vld [vmem:[%s3 + $0x28] sm:$0xff]
    %v2854 = vld [vmem:[%s3 + $0x30] sm:$0xff]
    %v2855 = vld [vmem:[%s3 + $0x38] sm:$0xff]
    %v2856 = vld [vmem:[%s3 + $0x40] sm:$0xff]
    %v2857 = vld [vmem:[%s3 + $0x48] sm:$0xff]
    %v2858 = vld [vmem:[%s3 + $0x50] sm:$0xff]
    %v2859 = vld [vmem:[%s3 + $0x58] sm:$0xff]
    %v2860 = vld [vmem:[%s3 + $0x60] sm:$0xff]
    %v2861 = vld [vmem:[%s3 + $0x68] sm:$0xff]
    %v2862 = vld [vmem:[%s3 + $0x70] sm:$0xff]
    %v2863 = vld [vmem:[%s3 + $0x78] sm:$0xff]
    %v2864 = vld [vmem:[%s3 + $0x80] sm:$0xff]
    %v2865 = vld [vmem:[%s3 + $0x88] sm:$0xff]
    %v2866 = vld [vmem:[%s3 + $0x90] sm:$0xff]
    %v2867 = vld [vmem:[%s3 + $0x98] sm:$0xff]
    %v2868 = vld [vmem:[%s3 + $0xa0] sm:$0xff]
    %v2869 = vld [vmem:[%s3 + $0xa8] sm:$0xff]
    %v2870 = vld [vmem:[%s3 + $0xb0] sm:$0xff]
    %v2871 = vld [vmem:[%s3 + $0xb8] sm:$0xff]
    %v2872 = vld [vmem:[%s3 + $0xc0] sm:$0xff]
    %v2873 = vld [vmem:[%s3 + $0xc8] sm:$0xff]
    %v2874 = vld [vmem:[%s3 + $0xd0] sm:$0xff]
    %v2875 = vld [vmem:[%s3 + $0xd8] sm:$0xff]
    %v2876 = vld [vmem:[%s3 + $0xe0] sm:$0xff]
    %v2877 = vld [vmem:[%s3 + $0xe8] sm:$0xff]
    %v2878 = vld [vmem:[%s3 + $0xf0] sm:$0xff]
    %v2879 = vld [vmem:[%s3 + $0xf8] sm:$0xff]
    %v2880 = vld [vmem:[%s3 + $0x100] sm:$0x1f]
    %v2882 = vrot.slane %v2847, 4
    %2883 = vrot.lane.b32.xlu0 %v2882, 64
    %v2884 = vpop.permute.xlu0 %2883
    %v2886 = vsel %vm2100, %v2591, %v2884
    %v2888 = vrot.slane %v2886, 4
    %2890 = vmatprep.subr.mxu0 0.0
    %2891 = vmatpush1.msra.mxu0 %v2863
    %2892 = vmatprep.subr.mxu0 0.0
    %2893 = vmatpush1.msra.mxu0 %v2862
    %2894 = vmatprep.subr.mxu0 0.0
    %2895 = vmatpush1.msra.mxu0 %v2861
    %2896 = vmatprep.subr.mxu0 0.0
    %2897 = vmatpush1.msra.mxu0 %v2860
    %2898 = vmatprep.subr.mxu0 0.0
    %2899 = vmatpush1.msra.mxu0 %v2859
    %2900 = vmatprep.subr.mxu0 0.0
    %2901 = vmatpush1.msra.mxu0 %v2858
    %2902 = vmatprep.subr.mxu0 0.0
    %2903 = vmatpush1.msra.mxu0 %v2857
    %2904 = vmatprep.subr.mxu0 0.0
    %2905 = vmatpush1.msra.mxu0 %v2856
    %2906 = vmatprep.subr.mxu0 0.0
    %2907 = vmatpush1.msra.mxu0 %v2855
    %2908 = vmatprep.subr.mxu0 0.0
    %2909 = vmatpush1.msra.mxu0 %v2854
    %2910 = vmatprep.subr.mxu0 0.0
    %2911 = vmatpush1.msra.mxu0 %v2853
    %2912 = vmatprep.subr.mxu0 0.0
    %2913 = vmatpush1.msra.mxu0 %v2852
    %2914 = vmatprep.subr.mxu0 0.0
    %2915 = vmatpush1.msra.mxu0 %v2851
    %2916 = vmatprep.subr.mxu0 0.0
    %2917 = vmatpush1.msra.mxu0 %v2850
    %2918 = vmatprep.subr.mxu0 0.0
    %2919 = vmatpush1.msra.mxu0 %v2849
    %2920 = vmatprep.subr.mxu0 0.0
    %2921 = vmatpush1.msra.mxu0 %v2848
    %2922 = vmatprep.subr.mxu0 0.0
    %2923 = vmatpush2.msra.mxu0 0.0
    %2924 = vmatprep.subr.mxu0 0.0
    %2925 = vmatpush2.msra.mxu0 0.0
    %2926 = vmatprep.subr.mxu0 0.0
    %2927 = vmatpush2.msra.mxu0 0.0
    %2928 = vmatprep.subr.mxu0 0.0
    %2929 = vmatpush2.msra.mxu0 0.0
    %2930 = vmatprep.subr.mxu0 0.0
    %2931 = vmatpush2.msra.mxu0 0.0
    %2932 = vmatprep.subr.mxu0 0.0
    %2933 = vmatpush2.msra.mxu0 0.0
    %2934 = vmatprep.subr.mxu0 0.0
    %2935 = vmatpush2.msra.mxu0 0.0
    %2936 = vmatprep.subr.mxu0 0.0
    %2937 = vmatpush2.msra.mxu0 0.0
    %2938 = vmatprep.subr.mxu0 0.0
    %2939 = vmatpush2.msra.mxu0 0.0
    %2940 = vmatprep.subr.mxu0 0.0
    %2941 = vmatpush2.msra.mxu0 0.0
    %2942 = vmatprep.subr.mxu0 0.0
    %2943 = vmatpush2.msra.mxu0 0.0
    %2944 = vmatprep.subr.mxu0 0.0
    %2945 = vmatpush2.msra.mxu0 0.0
    %2946 = vmatprep.subr.mxu0 0.0
    %2947 = vmatpush2.msra.mxu0 0.0
    %2948 = vmatprep.subr.mxu0 0.0
    %2949 = vmatpush2.msra.mxu0 0.0
    %2950 = vmatprep.subr.mxu0 0.0
    %2951 = vmatpush2.msra.mxu0 0.0
    %2952 = vmatprep.subr.mxu0 0.0
    %2953 = vmatpush2.msra.mxu0 0.0
    %2954 = vmatprep.mubr.f32.mxu0 0.0
    %2955 = vmatmul.mubr.f32.gmra.mxu0 %v2888
    %v2956 = vpop.f32.mrf.mxu0
    %v2957 = vadd.f32 0.0, %v2956
    %v2958 = vpop.f32.mrf.mxu0
    %2959 = vdwg.mxu0
    %v2960 = vlaneseq
    %v2961 = vshrl.u32 %v2960, 7
    %v2962 = vsub.s32 1, %v2961
    %v2963 = vrot.slane %v2880, %v2962
    %v2964 = vmul.f32 %v2957, %v2963
    %v2965 = vlaneseq
    %v2966 = vshrl.u32 %v2965, 7
    %v2967 = vsub.s32 2, %v2966
    %v2968 = vrot.slane %v2880, %v2967
    %v2969 = vadd.f32 %v2964, %v2968
    %v2970 = vmax.f32 %v2969, 0.0
    %v2972 = vsel %vm2100, %v2970, 0
    %2974 = vmatprep.subr.mxu0 0.0
    %2975 = vmatpush1.msra.mxu0 0.0
    %2976 = vmatprep.subr.mxu0 0.0
    %2977 = vmatpush1.msra.mxu0 0.0
    %2978 = vmatprep.subr.mxu0 0.0
    %2979 = vmatpush1.msra.mxu0 0.0
    %2980 = vmatprep.subr.mxu0 0.0
    %2981 = vmatpush1.msra.mxu0 0.0
    %2982 = vmatprep.subr.mxu0 0.0
    %2983 = vmatpush1.msra.mxu0 0.0
    %2984 = vmatprep.subr.mxu0 0.0
    %2985 = vmatpush1.msra.mxu0 0.0
    %2986 = vmatprep.subr.mxu0 0.0
    %2987 = vmatpush1.msra.mxu0 0.0
    %2988 = vmatprep.subr.mxu0 0.0
    %2989 = vmatpush1.msra.mxu0 0.0
    %2990 = vmatprep.subr.mxu0 0.0
    %2991 = vmatpush1.msra.mxu0 %v2871
    %2992 = vmatprep.subr.mxu0 0.0
    %2993 = vmatpush1.msra.mxu0 %v2870
    %2994 = vmatprep.subr.mxu0 0.0
    %2995 = vmatpush1.msra.mxu0 %v2869
    %2996 = vmatprep.subr.mxu0 0.0
    %2997 = vmatpush1.msra.mxu0 %v2868
    %2998 = vmatprep.subr.mxu0 0.0
    %2999 = vmatpush1.msra.mxu0 %v2867
    %3000 = vmatprep.subr.mxu0 0.0
    %3001 = vmatpush1.msra.mxu0 %v2866
    %3002 = vmatprep.subr.mxu0 0.0
    %3003 = vmatpush1.msra.mxu0 %v2865
    %3004 = vmatprep.subr.mxu0 0.0
    %3005 = vmatpush1.msra.mxu0 %v2864
    %3006 = vmatprep.subr.mxu0 0.0
    %3007 = vmatpush2.msra.mxu0 0.0
    %3008 = vmatprep.subr.mxu0 0.0
    %3009 = vmatpush2.msra.mxu0 0.0
    %3010 = vmatprep.subr.mxu0 0.0
    %3011 = vmatpush2.msra.mxu0 0.0
    %3012 = vmatprep.subr.mxu0 0.0
    %3013 = vmatpush2.msra.mxu0 0.0
    %3014 = vmatprep.subr.mxu0 0.0
    %3015 = vmatpush2.msra.mxu0 0.0
    %3016 = vmatprep.subr.mxu0 0.0
    %3017 = vmatpush2.msra.mxu0 0.0
    %3018 = vmatprep.subr.mxu0 0.0
    %3019 = vmatpush2.msra.mxu0 0.0
    %3020 = vmatprep.subr.mxu0 0.0
    %3021 = vmatpush2.msra.mxu0 0.0
    %3022 = vmatprep.subr.mxu0 0.0
    %3023 = vmatpush2.msra.mxu0 0.0
    %3024 = vmatprep.subr.mxu0 0.0
    %3025 = vmatpush2.msra.mxu0 0.0
    %3026 = vmatprep.subr.mxu0 0.0
    %3027 = vmatpush2.msra.mxu0 0.0
    %3028 = vmatprep.subr.mxu0 0.0
    %3029 = vmatpush2.msra.mxu0 0.0
    %3030 = vmatprep.subr.mxu0 0.0
    %3031 = vmatpush2.msra.mxu0 0.0
    %3032 = vmatprep.subr.mxu0 0.0
    %3033 = vmatpush2.msra.mxu0 0.0
    %3034 = vmatprep.subr.mxu0 0.0
    %3035 = vmatpush2.msra.mxu0 0.0
    %3036 = vmatprep.subr.mxu0 0.0
    %3037 = vmatpush2.msra.mxu0 0.0
    %3038 = vmatprep.mubr.f32.mxu0 0.0
    %3039 = vmatmul.mubr.f32.gmra.mxu0 %v2972
    %v3040 = vpop.f32.mrf.mxu0
    %v3041 = vadd.f32 0.0, %v3040
    %v3042 = vpop.f32.mrf.mxu0
    %3043 = vdwg.mxu0
    %v3044 = vlaneseq
    %v3045 = vshrl.u32 %v3044, 7
    %v3046 = vsub.s32 3, %v3045
    %v3047 = vrot.slane %v2880, %v3046
    %v3048 = vmul.f32 %v3041, %v3047
    %v3049 = vlaneseq
    %v3050 = vshrl.u32 %v3049, 7
    %v3051 = vsub.s32 4, %v3050
    %v3052 = vrot.slane %v2880, %v3051
    %v3053 = vadd.f32 %v3048, %v3052
    %v3054 = vmax.f32 %v3053, 0.0
    %v3055 = vlaneseq
    %v3056 = vshrl.u32 %v3055, 7
    %v3057 = vsub.s32 0, %v3056
    %v3058 = vrot.slane %v2880, %v3057
    %v3060 = vsel %vm2100, %v3054, 0
    %3062 = vmatprep.subr.mxu0 0.0
    %3063 = vmatpush1.msra.mxu0 0.0
    %3064 = vmatprep.subr.mxu0 0.0
    %3065 = vmatpush1.msra.mxu0 0.0
    %3066 = vmatprep.subr.mxu0 0.0
    %3067 = vmatpush1.msra.mxu0 0.0
    %3068 = vmatprep.subr.mxu0 0.0
    %3069 = vmatpush1.msra.mxu0 0.0
    %3070 = vmatprep.subr.mxu0 0.0
    %3071 = vmatpush1.msra.mxu0 0.0
    %3072 = vmatprep.subr.mxu0 0.0
    %3073 = vmatpush1.msra.mxu0 0.0
    %3074 = vmatprep.subr.mxu0 0.0
    %3075 = vmatpush1.msra.mxu0 0.0
    %3076 = vmatprep.subr.mxu0 0.0
    %3077 = vmatpush1.msra.mxu0 0.0
    %3078 = vmatprep.subr.mxu0 0.0
    %3079 = vmatpush1.msra.mxu0 %v2879
    %3080 = vmatprep.subr.mxu0 0.0
    %3081 = vmatpush1.msra.mxu0 %v2878
    %3082 = vmatprep.subr.mxu0 0.0
    %3083 = vmatpush1.msra.mxu0 %v2877
    %3084 = vmatprep.subr.mxu0 0.0
    %3085 = vmatpush1.msra.mxu0 %v2876
    %3086 = vmatprep.subr.mxu0 0.0
    %3087 = vmatpush1.msra.mxu0 %v2875
    %3088 = vmatprep.subr.mxu0 0.0
    %3089 = vmatpush1.msra.mxu0 %v2874
    %3090 = vmatprep.subr.mxu0 0.0
    %3091 = vmatpush1.msra.mxu0 %v2873
    %3092 = vmatprep.subr.mxu0 0.0
    %3093 = vmatpush1.msra.mxu0 %v2872
    %3094 = vmatprep.subr.mxu0 0.0
    %3095 = vmatpush2.msra.mxu0 0.0
    %3096 = vmatprep.subr.mxu0 0.0
    %3097 = vmatpush2.msra.mxu0 0.0
    %3098 = vmatprep.subr.mxu0 0.0
    %3099 = vmatpush2.msra.mxu0 0.0
    %3100 = vmatprep.subr.mxu0 0.0
    %3101 = vmatpush2.msra.mxu0 0.0
    %3102 = vmatprep.subr.mxu0 0.0
    %3103 = vmatpush2.msra.mxu0 0.0
    %3104 = vmatprep.subr.mxu0 0.0
    %3105 = vmatpush2.msra.mxu0 0.0
    %3106 = vmatprep.subr.mxu0 0.0
    %3107 = vmatpush2.msra.mxu0 0.0
    %3108 = vmatprep.subr.mxu0 0.0
    %3109 = vmatpush2.msra.mxu0 0.0
    %3110 = vmatprep.subr.mxu0 0.0
    %3111 = vmatpush2.msra.mxu0 0.0
    %3112 = vmatprep.subr.mxu0 0.0
    %3113 = vmatpush2.msra.mxu0 0.0
    %3114 = vmatprep.subr.mxu0 0.0
    %3115 = vmatpush2.msra.mxu0 0.0
    %3116 = vmatprep.subr.mxu0 0.0
    %3117 = vmatpush2.msra.mxu0 0.0
    %3118 = vmatprep.subr.mxu0 0.0
    %3119 = vmatpush2.msra.mxu0 0.0
    %3120 = vmatprep.subr.mxu0 0.0
    %3121 = vmatpush2.msra.mxu0 0.0
    %3122 = vmatprep.subr.mxu0 0.0
    %3123 = vmatpush2.msra.mxu0 0.0
    %3124 = vmatprep.subr.mxu0 0.0
    %3125 = vmatpush2.msra.mxu0 0.0
    %3126 = vmatprep.mubr.f32.mxu0 0.0
    %3127 = vmatmul.mubr.f32.gmra.mxu0 %v3060
    %v3128 = vpop.f32.mrf.mxu0
    %v3129 = vadd.f32 %v3058, %v3128
    %v3130 = vpop.f32.mrf.mxu0
    %3131 = vdwg.mxu0
    %vm3132 = vcmask 517120
    %3133 = vst.msk [vmem:[#allocation2] sm:$0x3] %vm3132, %v3129
    // Predicated region
    $region18: #{tpu_custom_call.1} parent=1 // pred_check
      _
    $region19: #{tpu_custom_call.1} parent=1 // pred_check_branch
      %3135 = sbr.rel (0) target = $region21
    $region20: #{tpu_custom_call.1} parent=1 // pred_region
      %s3137 = ssub.s32 32, 32
      %3138 = vsyncadd [#allocation3], %s3137
      %s3140 = sshll.u32 [#allocation2], 4
      %s3141 = int_to_ptr.vmem [resolvable:$true] %s3140
      %3143 = dma.vmem_to_hbm [thread:$0]  %s3141, 32, %s4, [#allocation3]
    $region21: #{tpu_custom_call.1} parent=1 // pred_fallthru
      _
    // Predicated region
    $region22: #{tpu_custom_call.1} parent=1 // pred_check
      _
    $region23: #{tpu_custom_call.1} parent=1 // pred_check_branch
      %3145 = sbr.rel (0) target = $region25
    $region24: #{tpu_custom_call.1} parent=1 // pred_region
      %3146 = dma.done [#allocation3], 32
    $region25: #{tpu_custom_call.1} parent=1 // pred_fallthru
      _
    %3147 = vsyncpa [#allocation3], 1

</llo_original>
